<compile_context>
chip_gen: v5e
topology: v5e:2x2
jax: 0.10.0
libtpu: 0.0.40
codegen_flags: <defaults>
</compile_context>

<pallas_src>
import jax
import jax.numpy as jnp
from jax import lax
from jax.experimental import pallas as pl
from jax.experimental.pallas import tpu as pltpu


def _round_up(n, m):
    return ((n + m - 1) // m) * m


def _pad_gate_cols(w, h, hp):
    """(..., 4h) -> (..., 4hp), placing each PyTorch gate block [i, f, g, o] at k*hp."""
    lead = w.shape[:-1]
    w4 = w.reshape(lead + (4, h))
    w4 = jnp.pad(w4, [(0, 0)] * len(lead) + [(0, 0), (0, hp - h)])
    return w4.reshape(lead + (4 * hp,))


def _pad_rows(w, h, hp):
    return jnp.pad(w, [(0, hp - h)] + [(0, 0)] * (w.ndim - 1))


def hierarchical_lstm_kernel(x_ref,      # (KT*tb, D)  time-major input block
                             wih1_ref,   # (D, 4Hp)    resident weights
                             whh1_ref,   # (Hp, 4Hp)
                             wih2_ref,   # (Hp, 4Hp)
                             whh2_ref,   # (Hp, 4Hp)
                             b1_ref,     # (1, 4Hp)
                             b2_ref,     # (1, 4Hp)
                             wfc_ref,    # (Hp, Cp)
                             bfc_ref,    # (1, Cp)
                             out_ref,    # (tb, Cp)
                             h1_ref, c1_ref, h2_ref, c2_ref,   # (tb, Hp) carried state
                             xg_ref):    # (KT*tb, 4Hp) block gate-input scratch
    t = pl.program_id(1)
    tb, hp = h1_ref.shape
    kt = x_ref.shape[0] // tb

    @pl.when(t == 0)
    def _init():
        h1_ref[...] = jnp.zeros_like(h1_ref)
        c1_ref[...] = jnp.zeros_like(c1_ref)
        h2_ref[...] = jnp.zeros_like(h2_ref)
        c2_ref[...] = jnp.zeros_like(c2_ref)

    # Layer-1 input projection for the whole KT-step block: one big MXU matmul with no
    # recurrent dependence (the streamed x block for step t+1 is DMA'd underneath it).
    xg_ref[...] = (jnp.dot(x_ref[...], wih1_ref[...],
                           preferred_element_type=jnp.float32) + b1_ref[...])

    b2 = b2_ref[...]   # hoisted: JAX does not CSE loads/broadcasts across loop iterations

    def cell(gates, c_prev):
        # hp is a multiple of 128 -> each gate slice is whole 128-lane vregs.
        i = jax.nn.sigmoid(gates[:, 0 * hp:1 * hp])
        f = jax.nn.sigmoid(gates[:, 1 * hp:2 * hp])
        g = jnp.tanh(gates[:, 2 * hp:3 * hp])
        o = jax.nn.sigmoid(gates[:, 3 * hp:4 * hp])
        c_new = f * c_prev + i * g
        return o * jnp.tanh(c_new), c_new

    def step(k, carry):
        h1, c1, h2, c2 = carry
        row = pl.multiple_of(k * tb, 8)
        xg_k = xg_ref[pl.ds(row, tb), :]
        # Layer-1 recurrent matmul; layer-2's recurrent matmul only depends on the previous
        # step's h2, so it is issued here too and overlaps layer-1's gate nonlinearities.
        g1 = xg_k + jnp.dot(h1, whh1_ref[...], preferred_element_type=jnp.float32)
        r2 = jnp.dot(h2, whh2_ref[...], preferred_element_type=jnp.float32) + b2
        h1, c1 = cell(g1, c1)
        g2 = r2 + jnp.dot(h1, wih2_ref[...], preferred_element_type=jnp.float32)
        h2, c2 = cell(g2, c2)
        return h1, c1, h2, c2

    h1, c1, h2, c2 = lax.fori_loop(
        0, kt, step,
        (h1_ref[...], c1_ref[...], h2_ref[...], c2_ref[...]),
        unroll=True)

    h1_ref[...] = h1
    c1_ref[...] = c1
    h2_ref[...] = h2
    c2_ref[...] = c2

    @pl.when(t == pl.num_programs(1) - 1)
    def _final():
        # TODO(synk): for Cp >> 128, DMA wfc in only for the last time block (or do the FC
        # outside the kernel) instead of keeping it resident for the whole sequence.
        out_ref[...] = (jnp.dot(h2, wfc_ref[...], preferred_element_type=jnp.float32)
                        + bfc_ref[...])


def _pick_time_block(T, tb, gate_width, max_kt=32, scratch_budget=8 << 20):
    """Largest divisor of T (<= max_kt) whose (KT*tb, 4Hp) f32 gate scratch stays modest."""
    cap = max(1, min(max_kt, scratch_budget // max(1, 4 * tb * gate_width)))
    kt = 1
    for cand in range(1, min(T, cap) + 1):
        if T % cand == 0:
            kt = cand
    return kt


def _vmem_capacity_bytes():
    try:
        cap = getattr(pltpu.get_tpu_info(), "vmem_capacity_bytes", None)
        if cap:
            return int(cap)
    except Exception:
        pass
    return 64 * 1024 * 1024   # conservative fallback (v7x per-TC VMEM)


def hierarchical_model_forward(x, params, *, block_b=None):
    """x: (B, T, input_dim) float32. Returns logits (B, num_classes)."""
    x = x.astype(jnp.float32)
    B, T, D = x.shape
    H = params["whh1"].shape[0]
    C = params["wfc"].shape[1]

    Hp = _round_up(H, 128)          # lane-aligned hidden dim
    Cp = _round_up(C, 128)          # lane-dense output store
    G = 4 * Hp

    # ---- parameter padding (exact: padded hidden units stay at h = c = 0 forever) ----
    # TODO(synk): for large Hp, cast the resident weights (and the streamed x) to bf16 to
    # halve VMEM/HBM traffic; kept f32 here for exact parity with the f32 reference.
    wih1 = _pad_gate_cols(params["wih1"], H, Hp)                        # (D, 4Hp)
    whh1 = _pad_gate_cols(_pad_rows(params["whh1"], H, Hp), H, Hp)      # (Hp, 4Hp)
    b1 = _pad_gate_cols(params["b1"], H, Hp)                            # (1, 4Hp)
    wih2 = _pad_gate_cols(_pad_rows(params["wih2"], H, Hp), H, Hp)      # (Hp, 4Hp)
    whh2 = _pad_gate_cols(_pad_rows(params["whh2"], H, Hp), H, Hp)      # (Hp, 4Hp)
    b2 = _pad_gate_cols(params["b2"], H, Hp)                            # (1, 4Hp)
    wfc = jnp.pad(params["wfc"], ((0, Hp - H), (0, Cp - C)))            # (Hp, Cp)
    bfc = jnp.pad(params["bfc"], ((0, 0), (0, Cp - C)))                 # (1, Cp)

    # ---- batch padding to whole sublanes + batch-block choice ----
    Bp = _round_up(B, 8)            # sublane-dense rows; padded rows are discarded at the end
    if block_b is None:
        if Bp >= 16 and Bp % 16 == 0:
            block_b = Bp // 2       # nb >= 2: "parallel" batch axis can use both v7x TCs
            while block_b > 256 and block_b % 16 == 0:
                block_b //= 2       # keep MXU-filling but VMEM-friendly batch tiles
        else:
            block_b = Bp
    assert block_b % 8 == 0 and Bp % block_b == 0, \
        "block_b must be a multiple of 8 that divides the padded batch"
    tb = block_b
    nb = Bp // tb

    KT = _pick_time_block(T, tb, G)
    nt = T // KT

    # ---- x laid out time-major within each batch block: (nb, T*tb, D) ----
    x_p = jnp.pad(x, ((0, Bp - B), (0, 0), (0, 0)))                     # (Bp, T, D)
    x_r = (x_p.reshape(nb, tb, T, D)
              .transpose(0, 2, 1, 3)                                    # (nb, T, tb, D)
              .reshape(nb, T * tb, D))

    grid_spec = pltpu.PrefetchScalarGridSpec(
        num_scalar_prefetch=0,
        grid=(nb, nt),
        in_specs=[
            pl.BlockSpec((None, KT * tb, D), lambda b, t: (b, t, 0)),   # streamed input block
            # TODO(synk): with very large Hp on v7x, add pipeline_mode=pl.Buffered(1) to the
            # constant-index weight specs below to drop their second (double) VMEM buffer.
            pl.BlockSpec((D, G), lambda b, t: (0, 0)),                  # Wih1 (resident)
            pl.BlockSpec((Hp, G), lambda b, t: (0, 0)),                 # Whh1
            pl.BlockSpec((Hp, G), lambda b, t: (0, 0)),                 # Wih2
            pl.BlockSpec((Hp, G), lambda b, t: (0, 0)),                 # Whh2
            pl.BlockSpec((1, G), lambda b, t: (0, 0)),                  # b1
            pl.BlockSpec((1, G), lambda b, t: (0, 0)),                  # b2
            pl.BlockSpec((Hp, Cp), lambda b, t: (0, 0)),                # Wfc
            pl.BlockSpec((1, Cp), lambda b, t: (0, 0)),                 # bfc
        ],
        out_specs=pl.BlockSpec((tb, Cp), lambda b, t: (b, 0)),
        scratch_shapes=[pltpu.VMEM((tb, Hp), jnp.float32)] * 4          # h1, c1, h2, c2
                       + [pltpu.VMEM((KT * tb, G), jnp.float32)],       # block gate inputs
    )

    # ---- VMEM budget derived from the actual footprint (not a hard-coded 32 MiB) ----
    f32b = 4
    weight_bytes = f32b * sum(int(w.size) for w in
                              (wih1, whh1, wih2, whh2, b1, b2, wfc, bfc))
    stream_bytes = 2 * f32b * KT * tb * D          # double-buffered input blocks
    out_bytes = 2 * f32b * tb * Cp
    scratch_bytes = f32b * (4 * tb * Hp + KT * tb * G)
    footprint = 2 * weight_bytes + stream_bytes + out_bytes + scratch_bytes
    vmem_cap = _vmem_capacity_bytes()
    vmem_limit = int(min(vmem_cap * 3 // 4, max(footprint + (8 << 20), 32 << 20)))

    out_padded = pl.pallas_call(
        hierarchical_lstm_kernel,
        out_shape=jax.ShapeDtypeStruct((Bp, Cp), jnp.float32),
        grid_spec=grid_spec,
        compiler_params=pltpu.CompilerParams(
            dimension_semantics=("parallel", "arbitrary"),              # batch x time
            vmem_limit_bytes=vmem_limit,
        ),
    )(x_r, wih1, whh1, wih2, whh2, b1, b2, wfc, bfc)

    return out_padded[:B, :C]


def init_params(key, input_dim, hidden_dim, num_classes):
    """Deterministic synthetic parameters, stored pre-transposed for x @ W."""
    ks = jax.random.split(key, 10)
    s1 = 1.0 / jnp.sqrt(hidden_dim)
    u = lambda k, shape: jax.random.uniform(k, shape, jnp.float32, -s1, s1)
    # PyTorch stores weight_ih as (4H, in); we keep the transpose (in, 4H).
    return {
        "wih1": u(ks[0], (input_dim, 4 * hidden_dim)),
        "whh1": u(ks[1], (hidden_dim, 4 * hidden_dim)),
        # b1 = b_ih + b_hh folded into one (1, 4H) bias (identical math).
        "b1":   u(ks[2], (1, 4 * hidden_dim)) + u(ks[3], (1, 4 * hidden_dim)),
        "wih2": u(ks[4], (hidden_dim, 4 * hidden_dim)),
        "whh2": u(ks[5], (hidden_dim, 4 * hidden_dim)),
        "b2":   u(ks[6], (1, 4 * hidden_dim)) + u(ks[7], (1, 4 * hidden_dim)),
        "wfc":  u(ks[8], (hidden_dim, num_classes)),
        "bfc":  u(ks[9], (1, num_classes)),
    }


def reference_forward(x, params):
    """Pure-JAX reference (lax.scan) mirroring torch.nn.LSTM semantics."""
    B, T, _ = x.shape
    H = params["whh1"].shape[0]

    def cell(x_t, h, c, wih, whh, b):
        g = x_t @ wih + h @ whh + b
        i = jax.nn.sigmoid(g[:, 0 * H:1 * H])
        f = jax.nn.sigmoid(g[:, 1 * H:2 * H])
        gg = jnp.tanh(g[:, 2 * H:3 * H])
        o = jax.nn.sigmoid(g[:, 3 * H:4 * H])
        c = f * c + i * gg
        h = o * jnp.tanh(c)
        return h, c

    def step(carry, x_t):
        h1, c1, h2, c2 = carry
        h1, c1 = cell(x_t, h1, c1, params["wih1"], params["whh1"], params["b1"])
        h2, c2 = cell(h1, h2, c2, params["wih2"], params["whh2"], params["b2"])
        return (h1, c1, h2, c2), None

    zeros = jnp.zeros((B, H), jnp.float32)
    (_, _, h2, _), _ = lax.scan(step, (zeros, zeros, zeros, zeros),
                                jnp.transpose(x, (1, 0, 2)))
    return h2 @ params["wfc"] + params["bfc"]


if __name__ == "__main__":
    B, T, D, H, C = 2, 8, 16, 32, 5   # batch, seq, input_dim, hidden_dim, num_classes
    key = jax.random.PRNGKey(0)
    k_x, k_p = jax.random.split(key)
    x = jax.random.normal(k_x, (B, T, D), jnp.float32)
    params = init_params(k_p, D, H, C)

    out = jax.block_until_ready(hierarchical_model_forward(x, params))
    ref = reference_forward(x, params)

    assert out.shape == (B, C), out.shape
    assert jnp.allclose(out, ref, atol=5e-4, rtol=5e-4), (out, ref)
    print("KERNEL_OK")
</pallas_src>

<mosaic_0001>
module attributes {stable_mosaic.version = 11 : i64} {
  func.func @hierarchical_lstm_kernel(%arg0: i32, %arg1: i32, %arg2: memref<1x64x16xf32, #tpu.memory_space<vmem>>, %arg3: memref<16x512xf32, #tpu.memory_space<vmem>>, %arg4: memref<128x512xf32, #tpu.memory_space<vmem>>, %arg5: memref<128x512xf32, #tpu.memory_space<vmem>>, %arg6: memref<128x512xf32, #tpu.memory_space<vmem>>, %arg7: memref<1x512xf32, #tpu.memory_space<vmem>>, %arg8: memref<1x512xf32, #tpu.memory_space<vmem>>, %arg9: memref<128x128xf32, #tpu.memory_space<vmem>>, %arg10: memref<1x128xf32, #tpu.memory_space<vmem>>, %arg11: memref<8x128xf32, #tpu.memory_space<vmem>>, %arg12: memref<8x128xf32, #tpu.memory_space<vmem>>, %arg13: memref<8x128xf32, #tpu.memory_space<vmem>>, %arg14: memref<8x128xf32, #tpu.memory_space<vmem>>, %arg15: memref<8x128xf32, #tpu.memory_space<vmem>>, %arg16: memref<64x512xf32, #tpu.memory_space<vmem>>) attributes {dimension_semantics = [#tpu.dimension_semantics<parallel>, #tpu.dimension_semantics<arbitrary>], iteration_bounds = array<i64: 1, 1>, scalar_prefetch = 0 : i64, scratch_operands = 5 : i64, tpu.core_type = #tpu.core_type<tc>, window_params = [{transform_indices = @transform_0, window_bounds = array<i64: 1, 64, 16>}, {pipeline_mode = #tpu.pipeline_mode<synchronous>, transform_indices = @transform_1, window_bounds = array<i64: 16, 512>}, {pipeline_mode = #tpu.pipeline_mode<synchronous>, transform_indices = @transform_2, window_bounds = array<i64: 128, 512>}, {pipeline_mode = #tpu.pipeline_mode<synchronous>, transform_indices = @transform_3, window_bounds = array<i64: 128, 512>}, {pipeline_mode = #tpu.pipeline_mode<synchronous>, transform_indices = @transform_4, window_bounds = array<i64: 128, 512>}, {pipeline_mode = #tpu.pipeline_mode<synchronous>, transform_indices = @transform_5, window_bounds = array<i64: 1, 512>}, {pipeline_mode = #tpu.pipeline_mode<synchronous>, transform_indices = @transform_6, window_bounds = array<i64: 1, 512>}, {pipeline_mode = #tpu.pipeline_mode<synchronous>, transform_indices = @transform_7, window_bounds = array<i64: 128, 128>}, {pipeline_mode = #tpu.pipeline_mode<synchronous>, transform_indices = @transform_8, window_bounds = array<i64: 1, 128>}, {transform_indices = @transform_9, window_bounds = array<i64: 8, 128>}]} {
    %c0_i32 = arith.constant 0 : i32
    %0 = arith.cmpi eq, %arg1, %c0_i32 : i32
    %1 = arith.extui %0 : i1 to i32
    %c0_i32_0 = arith.constant 0 : i32
    %2 = arith.cmpi ne, %1, %c0_i32_0 : i32
    scf.if %2 {
      %cst_166 = arith.constant 0.000000e+00 : f32
      %535 = vector.broadcast %cst_166 : f32 to vector<8x128xf32>
      %c0_167 = arith.constant 0 : index
      %c0_168 = arith.constant 0 : index
      %536 = vector.load %arg12[%c0_167, %c0_168] : memref<8x128xf32, #tpu.memory_space<vmem>>, vector<8x128xf32>
      tpu.vector_store %arg12[%c0_167, %c0_168], %535 {strides = array<i32>} : memref<8x128xf32, #tpu.memory_space<vmem>>, vector<8x128xf32>,
      %cst_169 = arith.constant 0.000000e+00 : f32
      %537 = vector.broadcast %cst_169 : f32 to vector<8x128xf32>
      %c0_170 = arith.constant 0 : index
      %c0_171 = arith.constant 0 : index
      %538 = vector.load %arg13[%c0_170, %c0_171] : memref<8x128xf32, #tpu.memory_space<vmem>>, vector<8x128xf32>
      tpu.vector_store %arg13[%c0_170, %c0_171], %537 {strides = array<i32>} : memref<8x128xf32, #tpu.memory_space<vmem>>, vector<8x128xf32>,
      %cst_172 = arith.constant 0.000000e+00 : f32
      %539 = vector.broadcast %cst_172 : f32 to vector<8x128xf32>
      %c0_173 = arith.constant 0 : index
      %c0_174 = arith.constant 0 : index
      %540 = vector.load %arg14[%c0_173, %c0_174] : memref<8x128xf32, #tpu.memory_space<vmem>>, vector<8x128xf32>
      tpu.vector_store %arg14[%c0_173, %c0_174], %539 {strides = array<i32>} : memref<8x128xf32, #tpu.memory_space<vmem>>, vector<8x128xf32>,
      %cst_175 = arith.constant 0.000000e+00 : f32
      %541 = vector.broadcast %cst_175 : f32 to vector<8x128xf32>
      %c0_176 = arith.constant 0 : index
      %c0_177 = arith.constant 0 : index
      %542 = vector.load %arg15[%c0_176, %c0_177] : memref<8x128xf32, #tpu.memory_space<vmem>>, vector<8x128xf32>
      tpu.vector_store %arg15[%c0_176, %c0_177], %541 {strides = array<i32>} : memref<8x128xf32, #tpu.memory_space<vmem>>, vector<8x128xf32>,
    } else {
    }
    %c0 = arith.constant 0 : index
    %c0_1 = arith.constant 0 : index
    %c0_2 = arith.constant 0 : index
    %3 = vector.load %arg2[%c0, %c0_1, %c0_2] : memref<1x64x16xf32, #tpu.memory_space<vmem>>, vector<1x64x16xf32>
    %4 = vector.shape_cast %3 : vector<1x64x16xf32> to vector<64x16xf32>
    %c0_3 = arith.constant 0 : index
    %c0_4 = arith.constant 0 : index
    %5 = vector.load %arg3[%c0_3, %c0_4] : memref<16x512xf32, #tpu.memory_space<vmem>>, vector<16x512xf32>
    %cst = arith.constant dense<0.000000e+00> : vector<64x512xf32>
    %6 = tpu.matmul %4, %5, %cst {dimension_numbers = #tpu.dot_dimension_numbers<[1], [0], [0], [1], [0, 0, 1, 1], [], []>} : vector<64x16xf32>, vector<16x512xf32>, vector<64x512xf32> -> vector<64x512xf32>
    %c0_5 = arith.constant 0 : index
    %c0_6 = arith.constant 0 : index
    %7 = vector.load %arg7[%c0_5, %c0_6] : memref<1x512xf32, #tpu.memory_space<vmem>>, vector<1x512xf32>
    %8 = vector.broadcast %7 : vector<1x512xf32> to vector<64x512xf32>
    %9 = arith.addf %6, %8 : vector<64x512xf32>
    %c0_7 = arith.constant 0 : index
    %c0_8 = arith.constant 0 : index
    %10 = vector.load %arg16[%c0_7, %c0_8] : memref<64x512xf32, #tpu.memory_space<vmem>>, vector<64x512xf32>
    tpu.vector_store %arg16[%c0_7, %c0_8], %9 {strides = array<i32>} : memref<64x512xf32, #tpu.memory_space<vmem>>, vector<64x512xf32>,
    %c0_9 = arith.constant 0 : index
    %c0_10 = arith.constant 0 : index
    %11 = vector.load %arg8[%c0_9, %c0_10] : memref<1x512xf32, #tpu.memory_space<vmem>>, vector<1x512xf32>
    %c0_11 = arith.constant 0 : index
    %c0_12 = arith.constant 0 : index
    %12 = vector.load %arg12[%c0_11, %c0_12] : memref<8x128xf32, #tpu.memory_space<vmem>>, vector<8x128xf32>
    %c0_13 = arith.constant 0 : index
    %c0_14 = arith.constant 0 : index
    %13 = vector.load %arg13[%c0_13, %c0_14] : memref<8x128xf32, #tpu.memory_space<vmem>>, vector<8x128xf32>
    %c0_15 = arith.constant 0 : index
    %c0_16 = arith.constant 0 : index
    %14 = vector.load %arg14[%c0_15, %c0_16] : memref<8x128xf32, #tpu.memory_space<vmem>>, vector<8x128xf32>
    %c0_17 = arith.constant 0 : index
    %c0_18 = arith.constant 0 : index
    %15 = vector.load %arg15[%c0_17, %c0_18] : memref<8x128xf32, #tpu.memory_space<vmem>>, vector<8x128xf32>
    %c0_i32_19 = arith.constant 0 : i32
    %c8_i32 = arith.constant 8 : i32
    %16 = arith.muli %c0_i32_19, %c8_i32 : i32
    %17 = tpu.assume_multiple %16, 8 : i32
    %18 = arith.index_cast %17 : i32 to index
    %c0_20 = arith.constant 0 : index
    %19 = vector.load %arg16[%18, %c0_20] : memref<64x512xf32, #tpu.memory_space<vmem>>, vector<8x512xf32>
    %c0_21 = arith.constant 0 : index
    %c0_22 = arith.constant 0 : index
    %20 = vector.load %arg4[%c0_21, %c0_22] : memref<128x512xf32, #tpu.memory_space<vmem>>, vector<128x512xf32>
    %cst_23 = arith.constant dense<0.000000e+00> : vector<8x512xf32>
    %21 = tpu.matmul %12, %20, %cst_23 {dimension_numbers = #tpu.dot_dimension_numbers<[1], [0], [0], [1], [0, 0, 1, 1], [], []>} : vector<8x128xf32>, vector<128x512xf32>, vector<8x512xf32> -> vector<8x512xf32>
    %22 = arith.addf %19, %21 : vector<8x512xf32>
    %c0_24 = arith.constant 0 : index
    %c0_25 = arith.constant 0 : index
    %23 = vector.load %arg6[%c0_24, %c0_25] : memref<128x512xf32, #tpu.memory_space<vmem>>, vector<128x512xf32>
    %cst_26 = arith.constant dense<0.000000e+00> : vector<8x512xf32>
    %24 = tpu.matmul %14, %23, %cst_26 {dimension_numbers = #tpu.dot_dimension_numbers<[1], [0], [0], [1], [0, 0, 1, 1], [], []>} : vector<8x128xf32>, vector<128x512xf32>, vector<8x512xf32> -> vector<8x512xf32>
    %25 = vector.broadcast %11 : vector<1x512xf32> to vector<8x512xf32>
    %26 = arith.addf %24, %25 : vector<8x512xf32>
    %27 = vector.extract_strided_slice %22 {offsets = [0, 0], sizes = [8, 128], strides = [1, 1]} : vector<8x512xf32> to vector<8x128xf32>
    %28 = arith.negf %27 : vector<8x128xf32>
    %29 = math.exp %28 : vector<8x128xf32>
    %cst_27 = arith.constant 1.000000e+00 : f32
    %30 = vector.broadcast %cst_27 : f32 to vector<8x128xf32>
    %31 = arith.addf %30, %29 : vector<8x128xf32>
    %32 = arith.divf %30, %31 : vector<8x128xf32>
    %33 = vector.extract_strided_slice %22 {offsets = [0, 128], sizes = [8, 128], strides = [1, 1]} : vector<8x512xf32> to vector<8x128xf32>
    %34 = arith.negf %33 : vector<8x128xf32>
    %35 = math.exp %34 : vector<8x128xf32>
    %cst_28 = arith.constant 1.000000e+00 : f32
    %36 = vector.broadcast %cst_28 : f32 to vector<8x128xf32>
    %37 = arith.addf %36, %35 : vector<8x128xf32>
    %38 = arith.divf %36, %37 : vector<8x128xf32>
    %39 = vector.extract_strided_slice %22 {offsets = [0, 256], sizes = [8, 128], strides = [1, 1]} : vector<8x512xf32> to vector<8x128xf32>
    %40 = math.tanh %39 : vector<8x128xf32>
    %41 = vector.extract_strided_slice %22 {offsets = [0, 384], sizes = [8, 128], strides = [1, 1]} : vector<8x512xf32> to vector<8x128xf32>
    %42 = arith.negf %41 : vector<8x128xf32>
    %43 = math.exp %42 : vector<8x128xf32>
    %cst_29 = arith.constant 1.000000e+00 : f32
    %44 = vector.broadcast %cst_29 : f32 to vector<8x128xf32>
    %45 = arith.addf %44, %43 : vector<8x128xf32>
    %46 = arith.divf %44, %45 : vector<8x128xf32>
    %47 = arith.mulf %38, %13 : vector<8x128xf32>
    %48 = arith.mulf %32, %40 : vector<8x128xf32>
    %49 = arith.addf %47, %48 : vector<8x128xf32>
    %50 = math.tanh %49 : vector<8x128xf32>
    %51 = arith.mulf %46, %50 : vector<8x128xf32>
    %c0_30 = arith.constant 0 : index
    %c0_31 = arith.constant 0 : index
    %52 = vector.load %arg5[%c0_30, %c0_31] : memref<128x512xf32, #tpu.memory_space<vmem>>, vector<128x512xf32>
    %cst_32 = arith.constant dense<0.000000e+00> : vector<8x512xf32>
    %53 = tpu.matmul %51, %52, %cst_32 {dimension_numbers = #tpu.dot_dimension_numbers<[1], [0], [0], [1], [0, 0, 1, 1], [], []>} : vector<8x128xf32>, vector<128x512xf32>, vector<8x512xf32> -> vector<8x512xf32>
    %54 = arith.addf %26, %53 : vector<8x512xf32>
    %55 = vector.extract_strided_slice %54 {offsets = [0, 0], sizes = [8, 128], strides = [1, 1]} : vector<8x512xf32> to vector<8x128xf32>
    %56 = arith.negf %55 : vector<8x128xf32>
    %57 = math.exp %56 : vector<8x128xf32>
    %cst_33 = arith.constant 1.000000e+00 : f32
    %58 = vector.broadcast %cst_33 : f32 to vector<8x128xf32>
    %59 = arith.addf %58, %57 : vector<8x128xf32>
    %60 = arith.divf %58, %59 : vector<8x128xf32>
    %61 = vector.extract_strided_slice %54 {offsets = [0, 128], sizes = [8, 128], strides = [1, 1]} : vector<8x512xf32> to vector<8x128xf32>
    %62 = arith.negf %61 : vector<8x128xf32>
    %63 = math.exp %62 : vector<8x128xf32>
    %cst_34 = arith.constant 1.000000e+00 : f32
    %64 = vector.broadcast %cst_34 : f32 to vector<8x128xf32>
    %65 = arith.addf %64, %63 : vector<8x128xf32>
    %66 = arith.divf %64, %65 : vector<8x128xf32>
    %67 = vector.extract_strided_slice %54 {offsets = [0, 256], sizes = [8, 128], strides = [1, 1]} : vector<8x512xf32> to vector<8x128xf32>
    %68 = math.tanh %67 : vector<8x128xf32>
    %69 = vector.extract_strided_slice %54 {offsets = [0, 384], sizes = [8, 128], strides = [1, 1]} : vector<8x512xf32> to vector<8x128xf32>
    %70 = arith.negf %69 : vector<8x128xf32>
    %71 = math.exp %70 : vector<8x128xf32>
    %cst_35 = arith.constant 1.000000e+00 : f32
    %72 = vector.broadcast %cst_35 : f32 to vector<8x128xf32>
    %73 = arith.addf %72, %71 : vector<8x128xf32>
    %74 = arith.divf %72, %73 : vector<8x128xf32>
    %75 = arith.mulf %66, %15 : vector<8x128xf32>
    %76 = arith.mulf %60, %68 : vector<8x128xf32>
    %77 = arith.addf %75, %76 : vector<8x128xf32>
    %78 = math.tanh %77 : vector<8x128xf32>
    %79 = arith.mulf %74, %78 : vector<8x128xf32>
    %c1_i32 = arith.constant 1 : i32
    %c8_i32_36 = arith.constant 8 : i32
    %80 = arith.muli %c1_i32, %c8_i32_36 : i32
    %81 = tpu.assume_multiple %80, 8 : i32
    %82 = arith.index_cast %81 : i32 to index
    %c0_37 = arith.constant 0 : index
    %83 = vector.load %arg16[%82, %c0_37] : memref<64x512xf32, #tpu.memory_space<vmem>>, vector<8x512xf32>
    %c0_38 = arith.constant 0 : index
    %c0_39 = arith.constant 0 : index
    %84 = vector.load %arg4[%c0_38, %c0_39] : memref<128x512xf32, #tpu.memory_space<vmem>>, vector<128x512xf32>
    %cst_40 = arith.constant dense<0.000000e+00> : vector<8x512xf32>
    %85 = tpu.matmul %51, %84, %cst_40 {dimension_numbers = #tpu.dot_dimension_numbers<[1], [0], [0], [1], [0, 0, 1, 1], [], []>} : vector<8x128xf32>, vector<128x512xf32>, vector<8x512xf32> -> vector<8x512xf32>
    %86 = arith.addf %83, %85 : vector<8x512xf32>
    %c0_41 = arith.constant 0 : index
    %c0_42 = arith.constant 0 : index
    %87 = vector.load %arg6[%c0_41, %c0_42] : memref<128x512xf32, #tpu.memory_space<vmem>>, vector<128x512xf32>
    %cst_43 = arith.constant dense<0.000000e+00> : vector<8x512xf32>
    %88 = tpu.matmul %79, %87, %cst_43 {dimension_numbers = #tpu.dot_dimension_numbers<[1], [0], [0], [1], [0, 0, 1, 1], [], []>} : vector<8x128xf32>, vector<128x512xf32>, vector<8x512xf32> -> vector<8x512xf32>
    %89 = vector.broadcast %11 : vector<1x512xf32> to vector<8x512xf32>
    %90 = arith.addf %88, %89 : vector<8x512xf32>
    %91 = vector.extract_strided_slice %86 {offsets = [0, 0], sizes = [8, 128], strides = [1, 1]} : vector<8x512xf32> to vector<8x128xf32>
    %92 = arith.negf %91 : vector<8x128xf32>
    %93 = math.exp %92 : vector<8x128xf32>
    %cst_44 = arith.constant 1.000000e+00 : f32
    %94 = vector.broadcast %cst_44 : f32 to vector<8x128xf32>
    %95 = arith.addf %94, %93 : vector<8x128xf32>
    %96 = arith.divf %94, %95 : vector<8x128xf32>
    %97 = vector.extract_strided_slice %86 {offsets = [0, 128], sizes = [8, 128], strides = [1, 1]} : vector<8x512xf32> to vector<8x128xf32>
    %98 = arith.negf %97 : vector<8x128xf32>
    %99 = math.exp %98 : vector<8x128xf32>
    %cst_45 = arith.constant 1.000000e+00 : f32
    %100 = vector.broadcast %cst_45 : f32 to vector<8x128xf32>
    %101 = arith.addf %100, %99 : vector<8x128xf32>
    %102 = arith.divf %100, %101 : vector<8x128xf32>
    %103 = vector.extract_strided_slice %86 {offsets = [0, 256], sizes = [8, 128], strides = [1, 1]} : vector<8x512xf32> to vector<8x128xf32>
    %104 = math.tanh %103 : vector<8x128xf32>
    %105 = vector.extract_strided_slice %86 {offsets = [0, 384], sizes = [8, 128], strides = [1, 1]} : vector<8x512xf32> to vector<8x128xf32>
    %106 = arith.negf %105 : vector<8x128xf32>
    %107 = math.exp %106 : vector<8x128xf32>
    %cst_46 = arith.constant 1.000000e+00 : f32
    %108 = vector.broadcast %cst_46 : f32 to vector<8x128xf32>
    %109 = arith.addf %108, %107 : vector<8x128xf32>
    %110 = arith.divf %108, %109 : vector<8x128xf32>
    %111 = arith.mulf %102, %49 : vector<8x128xf32>
    %112 = arith.mulf %96, %104 : vector<8x128xf32>
    %113 = arith.addf %111, %112 : vector<8x128xf32>
    %114 = math.tanh %113 : vector<8x128xf32>
    %115 = arith.mulf %110, %114 : vector<8x128xf32>
    %c0_47 = arith.constant 0 : index
    %c0_48 = arith.constant 0 : index
    %116 = vector.load %arg5[%c0_47, %c0_48] : memref<128x512xf32, #tpu.memory_space<vmem>>, vector<128x512xf32>
    %cst_49 = arith.constant dense<0.000000e+00> : vector<8x512xf32>
    %117 = tpu.matmul %115, %116, %cst_49 {dimension_numbers = #tpu.dot_dimension_numbers<[1], [0], [0], [1], [0, 0, 1, 1], [], []>} : vector<8x128xf32>, vector<128x512xf32>, vector<8x512xf32> -> vector<8x512xf32>
    %118 = arith.addf %90, %117 : vector<8x512xf32>
    %119 = vector.extract_strided_slice %118 {offsets = [0, 0], sizes = [8, 128], strides = [1, 1]} : vector<8x512xf32> to vector<8x128xf32>
    %120 = arith.negf %119 : vector<8x128xf32>
    %121 = math.exp %120 : vector<8x128xf32>
    %cst_50 = arith.constant 1.000000e+00 : f32
    %122 = vector.broadcast %cst_50 : f32 to vector<8x128xf32>
    %123 = arith.addf %122, %121 : vector<8x128xf32>
    %124 = arith.divf %122, %123 : vector<8x128xf32>
    %125 = vector.extract_strided_slice %118 {offsets = [0, 128], sizes = [8, 128], strides = [1, 1]} : vector<8x512xf32> to vector<8x128xf32>
    %126 = arith.negf %125 : vector<8x128xf32>
    %127 = math.exp %126 : vector<8x128xf32>
    %cst_51 = arith.constant 1.000000e+00 : f32
    %128 = vector.broadcast %cst_51 : f32 to vector<8x128xf32>
    %129 = arith.addf %128, %127 : vector<8x128xf32>
    %130 = arith.divf %128, %129 : vector<8x128xf32>
    %131 = vector.extract_strided_slice %118 {offsets = [0, 256], sizes = [8, 128], strides = [1, 1]} : vector<8x512xf32> to vector<8x128xf32>
    %132 = math.tanh %131 : vector<8x128xf32>
    %133 = vector.extract_strided_slice %118 {offsets = [0, 384], sizes = [8, 128], strides = [1, 1]} : vector<8x512xf32> to vector<8x128xf32>
    %134 = arith.negf %133 : vector<8x128xf32>
    %135 = math.exp %134 : vector<8x128xf32>
    %cst_52 = arith.constant 1.000000e+00 : f32
    %136 = vector.broadcast %cst_52 : f32 to vector<8x128xf32>
    %137 = arith.addf %136, %135 : vector<8x128xf32>
    %138 = arith.divf %136, %137 : vector<8x128xf32>
    %139 = arith.mulf %130, %77 : vector<8x128xf32>
    %140 = arith.mulf %124, %132 : vector<8x128xf32>
    %141 = arith.addf %139, %140 : vector<8x128xf32>
    %142 = math.tanh %141 : vector<8x128xf32>
    %143 = arith.mulf %138, %142 : vector<8x128xf32>
    %c2_i32 = arith.constant 2 : i32
    %c8_i32_53 = arith.constant 8 : i32
    %144 = arith.muli %c2_i32, %c8_i32_53 : i32
    %145 = tpu.assume_multiple %144, 8 : i32
    %146 = arith.index_cast %145 : i32 to index
    %c0_54 = arith.constant 0 : index
    %147 = vector.load %arg16[%146, %c0_54] : memref<64x512xf32, #tpu.memory_space<vmem>>, vector<8x512xf32>
    %c0_55 = arith.constant 0 : index
    %c0_56 = arith.constant 0 : index
    %148 = vector.load %arg4[%c0_55, %c0_56] : memref<128x512xf32, #tpu.memory_space<vmem>>, vector<128x512xf32>
    %cst_57 = arith.constant dense<0.000000e+00> : vector<8x512xf32>
    %149 = tpu.matmul %115, %148, %cst_57 {dimension_numbers = #tpu.dot_dimension_numbers<[1], [0], [0], [1], [0, 0, 1, 1], [], []>} : vector<8x128xf32>, vector<128x512xf32>, vector<8x512xf32> -> vector<8x512xf32>
    %150 = arith.addf %147, %149 : vector<8x512xf32>
    %c0_58 = arith.constant 0 : index
    %c0_59 = arith.constant 0 : index
    %151 = vector.load %arg6[%c0_58, %c0_59] : memref<128x512xf32, #tpu.memory_space<vmem>>, vector<128x512xf32>
    %cst_60 = arith.constant dense<0.000000e+00> : vector<8x512xf32>
    %152 = tpu.matmul %143, %151, %cst_60 {dimension_numbers = #tpu.dot_dimension_numbers<[1], [0], [0], [1], [0, 0, 1, 1], [], []>} : vector<8x128xf32>, vector<128x512xf32>, vector<8x512xf32> -> vector<8x512xf32>
    %153 = vector.broadcast %11 : vector<1x512xf32> to vector<8x512xf32>
    %154 = arith.addf %152, %153 : vector<8x512xf32>
    %155 = vector.extract_strided_slice %150 {offsets = [0, 0], sizes = [8, 128], strides = [1, 1]} : vector<8x512xf32> to vector<8x128xf32>
    %156 = arith.negf %155 : vector<8x128xf32>
    %157 = math.exp %156 : vector<8x128xf32>
    %cst_61 = arith.constant 1.000000e+00 : f32
    %158 = vector.broadcast %cst_61 : f32 to vector<8x128xf32>
    %159 = arith.addf %158, %157 : vector<8x128xf32>
    %160 = arith.divf %158, %159 : vector<8x128xf32>
    %161 = vector.extract_strided_slice %150 {offsets = [0, 128], sizes = [8, 128], strides = [1, 1]} : vector<8x512xf32> to vector<8x128xf32>
    %162 = arith.negf %161 : vector<8x128xf32>
    %163 = math.exp %162 : vector<8x128xf32>
    %cst_62 = arith.constant 1.000000e+00 : f32
    %164 = vector.broadcast %cst_62 : f32 to vector<8x128xf32>
    %165 = arith.addf %164, %163 : vector<8x128xf32>
    %166 = arith.divf %164, %165 : vector<8x128xf32>
    %167 = vector.extract_strided_slice %150 {offsets = [0, 256], sizes = [8, 128], strides = [1, 1]} : vector<8x512xf32> to vector<8x128xf32>
    %168 = math.tanh %167 : vector<8x128xf32>
    %169 = vector.extract_strided_slice %150 {offsets = [0, 384], sizes = [8, 128], strides = [1, 1]} : vector<8x512xf32> to vector<8x128xf32>
    %170 = arith.negf %169 : vector<8x128xf32>
    %171 = math.exp %170 : vector<8x128xf32>
    %cst_63 = arith.constant 1.000000e+00 : f32
    %172 = vector.broadcast %cst_63 : f32 to vector<8x128xf32>
    %173 = arith.addf %172, %171 : vector<8x128xf32>
    %174 = arith.divf %172, %173 : vector<8x128xf32>
    %175 = arith.mulf %166, %113 : vector<8x128xf32>
    %176 = arith.mulf %160, %168 : vector<8x128xf32>
    %177 = arith.addf %175, %176 : vector<8x128xf32>
    %178 = math.tanh %177 : vector<8x128xf32>
    %179 = arith.mulf %174, %178 : vector<8x128xf32>
    %c0_64 = arith.constant 0 : index
    %c0_65 = arith.constant 0 : index
    %180 = vector.load %arg5[%c0_64, %c0_65] : memref<128x512xf32, #tpu.memory_space<vmem>>, vector<128x512xf32>
    %cst_66 = arith.constant dense<0.000000e+00> : vector<8x512xf32>
    %181 = tpu.matmul %179, %180, %cst_66 {dimension_numbers = #tpu.dot_dimension_numbers<[1], [0], [0], [1], [0, 0, 1, 1], [], []>} : vector<8x128xf32>, vector<128x512xf32>, vector<8x512xf32> -> vector<8x512xf32>
    %182 = arith.addf %154, %181 : vector<8x512xf32>
    %183 = vector.extract_strided_slice %182 {offsets = [0, 0], sizes = [8, 128], strides = [1, 1]} : vector<8x512xf32> to vector<8x128xf32>
    %184 = arith.negf %183 : vector<8x128xf32>
    %185 = math.exp %184 : vector<8x128xf32>
    %cst_67 = arith.constant 1.000000e+00 : f32
    %186 = vector.broadcast %cst_67 : f32 to vector<8x128xf32>
    %187 = arith.addf %186, %185 : vector<8x128xf32>
    %188 = arith.divf %186, %187 : vector<8x128xf32>
    %189 = vector.extract_strided_slice %182 {offsets = [0, 128], sizes = [8, 128], strides = [1, 1]} : vector<8x512xf32> to vector<8x128xf32>
    %190 = arith.negf %189 : vector<8x128xf32>
    %191 = math.exp %190 : vector<8x128xf32>
    %cst_68 = arith.constant 1.000000e+00 : f32
    %192 = vector.broadcast %cst_68 : f32 to vector<8x128xf32>
    %193 = arith.addf %192, %191 : vector<8x128xf32>
    %194 = arith.divf %192, %193 : vector<8x128xf32>
    %195 = vector.extract_strided_slice %182 {offsets = [0, 256], sizes = [8, 128], strides = [1, 1]} : vector<8x512xf32> to vector<8x128xf32>
    %196 = math.tanh %195 : vector<8x128xf32>
    %197 = vector.extract_strided_slice %182 {offsets = [0, 384], sizes = [8, 128], strides = [1, 1]} : vector<8x512xf32> to vector<8x128xf32>
    %198 = arith.negf %197 : vector<8x128xf32>
    %199 = math.exp %198 : vector<8x128xf32>
    %cst_69 = arith.constant 1.000000e+00 : f32
    %200 = vector.broadcast %cst_69 : f32 to vector<8x128xf32>
    %201 = arith.addf %200, %199 : vector<8x128xf32>
    %202 = arith.divf %200, %201 : vector<8x128xf32>
    %203 = arith.mulf %194, %141 : vector<8x128xf32>
    %204 = arith.mulf %188, %196 : vector<8x128xf32>
    %205 = arith.addf %203, %204 : vector<8x128xf32>
    %206 = math.tanh %205 : vector<8x128xf32>
    %207 = arith.mulf %202, %206 : vector<8x128xf32>
    %c3_i32 = arith.constant 3 : i32
    %c8_i32_70 = arith.constant 8 : i32
    %208 = arith.muli %c3_i32, %c8_i32_70 : i32
    %209 = tpu.assume_multiple %208, 8 : i32
    %210 = arith.index_cast %209 : i32 to index
    %c0_71 = arith.constant 0 : index
    %211 = vector.load %arg16[%210, %c0_71] : memref<64x512xf32, #tpu.memory_space<vmem>>, vector<8x512xf32>
    %c0_72 = arith.constant 0 : index
    %c0_73 = arith.constant 0 : index
    %212 = vector.load %arg4[%c0_72, %c0_73] : memref<128x512xf32, #tpu.memory_space<vmem>>, vector<128x512xf32>
    %cst_74 = arith.constant dense<0.000000e+00> : vector<8x512xf32>
    %213 = tpu.matmul %179, %212, %cst_74 {dimension_numbers = #tpu.dot_dimension_numbers<[1], [0], [0], [1], [0, 0, 1, 1], [], []>} : vector<8x128xf32>, vector<128x512xf32>, vector<8x512xf32> -> vector<8x512xf32>
    %214 = arith.addf %211, %213 : vector<8x512xf32>
    %c0_75 = arith.constant 0 : index
    %c0_76 = arith.constant 0 : index
    %215 = vector.load %arg6[%c0_75, %c0_76] : memref<128x512xf32, #tpu.memory_space<vmem>>, vector<128x512xf32>
    %cst_77 = arith.constant dense<0.000000e+00> : vector<8x512xf32>
    %216 = tpu.matmul %207, %215, %cst_77 {dimension_numbers = #tpu.dot_dimension_numbers<[1], [0], [0], [1], [0, 0, 1, 1], [], []>} : vector<8x128xf32>, vector<128x512xf32>, vector<8x512xf32> -> vector<8x512xf32>
    %217 = vector.broadcast %11 : vector<1x512xf32> to vector<8x512xf32>
    %218 = arith.addf %216, %217 : vector<8x512xf32>
    %219 = vector.extract_strided_slice %214 {offsets = [0, 0], sizes = [8, 128], strides = [1, 1]} : vector<8x512xf32> to vector<8x128xf32>
    %220 = arith.negf %219 : vector<8x128xf32>
    %221 = math.exp %220 : vector<8x128xf32>
    %cst_78 = arith.constant 1.000000e+00 : f32
    %222 = vector.broadcast %cst_78 : f32 to vector<8x128xf32>
    %223 = arith.addf %222, %221 : vector<8x128xf32>
    %224 = arith.divf %222, %223 : vector<8x128xf32>
    %225 = vector.extract_strided_slice %214 {offsets = [0, 128], sizes = [8, 128], strides = [1, 1]} : vector<8x512xf32> to vector<8x128xf32>
    %226 = arith.negf %225 : vector<8x128xf32>
    %227 = math.exp %226 : vector<8x128xf32>
    %cst_79 = arith.constant 1.000000e+00 : f32
    %228 = vector.broadcast %cst_79 : f32 to vector<8x128xf32>
    %229 = arith.addf %228, %227 : vector<8x128xf32>
    %230 = arith.divf %228, %229 : vector<8x128xf32>
    %231 = vector.extract_strided_slice %214 {offsets = [0, 256], sizes = [8, 128], strides = [1, 1]} : vector<8x512xf32> to vector<8x128xf32>
    %232 = math.tanh %231 : vector<8x128xf32>
    %233 = vector.extract_strided_slice %214 {offsets = [0, 384], sizes = [8, 128], strides = [1, 1]} : vector<8x512xf32> to vector<8x128xf32>
    %234 = arith.negf %233 : vector<8x128xf32>
    %235 = math.exp %234 : vector<8x128xf32>
    %cst_80 = arith.constant 1.000000e+00 : f32
    %236 = vector.broadcast %cst_80 : f32 to vector<8x128xf32>
    %237 = arith.addf %236, %235 : vector<8x128xf32>
    %238 = arith.divf %236, %237 : vector<8x128xf32>
    %239 = arith.mulf %230, %177 : vector<8x128xf32>
    %240 = arith.mulf %224, %232 : vector<8x128xf32>
    %241 = arith.addf %239, %240 : vector<8x128xf32>
    %242 = math.tanh %241 : vector<8x128xf32>
    %243 = arith.mulf %238, %242 : vector<8x128xf32>
    %c0_81 = arith.constant 0 : index
    %c0_82 = arith.constant 0 : index
    %244 = vector.load %arg5[%c0_81, %c0_82] : memref<128x512xf32, #tpu.memory_space<vmem>>, vector<128x512xf32>
    %cst_83 = arith.constant dense<0.000000e+00> : vector<8x512xf32>
    %245 = tpu.matmul %243, %244, %cst_83 {dimension_numbers = #tpu.dot_dimension_numbers<[1], [0], [0], [1], [0, 0, 1, 1], [], []>} : vector<8x128xf32>, vector<128x512xf32>, vector<8x512xf32> -> vector<8x512xf32>
    %246 = arith.addf %218, %245 : vector<8x512xf32>
    %247 = vector.extract_strided_slice %246 {offsets = [0, 0], sizes = [8, 128], strides = [1, 1]} : vector<8x512xf32> to vector<8x128xf32>
    %248 = arith.negf %247 : vector<8x128xf32>
    %249 = math.exp %248 : vector<8x128xf32>
    %cst_84 = arith.constant 1.000000e+00 : f32
    %250 = vector.broadcast %cst_84 : f32 to vector<8x128xf32>
    %251 = arith.addf %250, %249 : vector<8x128xf32>
    %252 = arith.divf %250, %251 : vector<8x128xf32>
    %253 = vector.extract_strided_slice %246 {offsets = [0, 128], sizes = [8, 128], strides = [1, 1]} : vector<8x512xf32> to vector<8x128xf32>
    %254 = arith.negf %253 : vector<8x128xf32>
    %255 = math.exp %254 : vector<8x128xf32>
    %cst_85 = arith.constant 1.000000e+00 : f32
    %256 = vector.broadcast %cst_85 : f32 to vector<8x128xf32>
    %257 = arith.addf %256, %255 : vector<8x128xf32>
    %258 = arith.divf %256, %257 : vector<8x128xf32>
    %259 = vector.extract_strided_slice %246 {offsets = [0, 256], sizes = [8, 128], strides = [1, 1]} : vector<8x512xf32> to vector<8x128xf32>
    %260 = math.tanh %259 : vector<8x128xf32>
    %261 = vector.extract_strided_slice %246 {offsets = [0, 384], sizes = [8, 128], strides = [1, 1]} : vector<8x512xf32> to vector<8x128xf32>
    %262 = arith.negf %261 : vector<8x128xf32>
    %263 = math.exp %262 : vector<8x128xf32>
    %cst_86 = arith.constant 1.000000e+00 : f32
    %264 = vector.broadcast %cst_86 : f32 to vector<8x128xf32>
    %265 = arith.addf %264, %263 : vector<8x128xf32>
    %266 = arith.divf %264, %265 : vector<8x128xf32>
    %267 = arith.mulf %258, %205 : vector<8x128xf32>
    %268 = arith.mulf %252, %260 : vector<8x128xf32>
    %269 = arith.addf %267, %268 : vector<8x128xf32>
    %270 = math.tanh %269 : vector<8x128xf32>
    %271 = arith.mulf %266, %270 : vector<8x128xf32>
    %c4_i32 = arith.constant 4 : i32
    %c8_i32_87 = arith.constant 8 : i32
    %272 = arith.muli %c4_i32, %c8_i32_87 : i32
    %273 = tpu.assume_multiple %272, 8 : i32
    %274 = arith.index_cast %273 : i32 to index
    %c0_88 = arith.constant 0 : index
    %275 = vector.load %arg16[%274, %c0_88] : memref<64x512xf32, #tpu.memory_space<vmem>>, vector<8x512xf32>
    %c0_89 = arith.constant 0 : index
    %c0_90 = arith.constant 0 : index
    %276 = vector.load %arg4[%c0_89, %c0_90] : memref<128x512xf32, #tpu.memory_space<vmem>>, vector<128x512xf32>
    %cst_91 = arith.constant dense<0.000000e+00> : vector<8x512xf32>
    %277 = tpu.matmul %243, %276, %cst_91 {dimension_numbers = #tpu.dot_dimension_numbers<[1], [0], [0], [1], [0, 0, 1, 1], [], []>} : vector<8x128xf32>, vector<128x512xf32>, vector<8x512xf32> -> vector<8x512xf32>
    %278 = arith.addf %275, %277 : vector<8x512xf32>
    %c0_92 = arith.constant 0 : index
    %c0_93 = arith.constant 0 : index
    %279 = vector.load %arg6[%c0_92, %c0_93] : memref<128x512xf32, #tpu.memory_space<vmem>>, vector<128x512xf32>
    %cst_94 = arith.constant dense<0.000000e+00> : vector<8x512xf32>
    %280 = tpu.matmul %271, %279, %cst_94 {dimension_numbers = #tpu.dot_dimension_numbers<[1], [0], [0], [1], [0, 0, 1, 1], [], []>} : vector<8x128xf32>, vector<128x512xf32>, vector<8x512xf32> -> vector<8x512xf32>
    %281 = vector.broadcast %11 : vector<1x512xf32> to vector<8x512xf32>
    %282 = arith.addf %280, %281 : vector<8x512xf32>
    %283 = vector.extract_strided_slice %278 {offsets = [0, 0], sizes = [8, 128], strides = [1, 1]} : vector<8x512xf32> to vector<8x128xf32>
    %284 = arith.negf %283 : vector<8x128xf32>
    %285 = math.exp %284 : vector<8x128xf32>
    %cst_95 = arith.constant 1.000000e+00 : f32
    %286 = vector.broadcast %cst_95 : f32 to vector<8x128xf32>
    %287 = arith.addf %286, %285 : vector<8x128xf32>
    %288 = arith.divf %286, %287 : vector<8x128xf32>
    %289 = vector.extract_strided_slice %278 {offsets = [0, 128], sizes = [8, 128], strides = [1, 1]} : vector<8x512xf32> to vector<8x128xf32>
    %290 = arith.negf %289 : vector<8x128xf32>
    %291 = math.exp %290 : vector<8x128xf32>
    %cst_96 = arith.constant 1.000000e+00 : f32
    %292 = vector.broadcast %cst_96 : f32 to vector<8x128xf32>
    %293 = arith.addf %292, %291 : vector<8x128xf32>
    %294 = arith.divf %292, %293 : vector<8x128xf32>
    %295 = vector.extract_strided_slice %278 {offsets = [0, 256], sizes = [8, 128], strides = [1, 1]} : vector<8x512xf32> to vector<8x128xf32>
    %296 = math.tanh %295 : vector<8x128xf32>
    %297 = vector.extract_strided_slice %278 {offsets = [0, 384], sizes = [8, 128], strides = [1, 1]} : vector<8x512xf32> to vector<8x128xf32>
    %298 = arith.negf %297 : vector<8x128xf32>
    %299 = math.exp %298 : vector<8x128xf32>
    %cst_97 = arith.constant 1.000000e+00 : f32
    %300 = vector.broadcast %cst_97 : f32 to vector<8x128xf32>
    %301 = arith.addf %300, %299 : vector<8x128xf32>
    %302 = arith.divf %300, %301 : vector<8x128xf32>
    %303 = arith.mulf %294, %241 : vector<8x128xf32>
    %304 = arith.mulf %288, %296 : vector<8x128xf32>
    %305 = arith.addf %303, %304 : vector<8x128xf32>
    %306 = math.tanh %305 : vector<8x128xf32>
    %307 = arith.mulf %302, %306 : vector<8x128xf32>
    %c0_98 = arith.constant 0 : index
    %c0_99 = arith.constant 0 : index
    %308 = vector.load %arg5[%c0_98, %c0_99] : memref<128x512xf32, #tpu.memory_space<vmem>>, vector<128x512xf32>
    %cst_100 = arith.constant dense<0.000000e+00> : vector<8x512xf32>
    %309 = tpu.matmul %307, %308, %cst_100 {dimension_numbers = #tpu.dot_dimension_numbers<[1], [0], [0], [1], [0, 0, 1, 1], [], []>} : vector<8x128xf32>, vector<128x512xf32>, vector<8x512xf32> -> vector<8x512xf32>
    %310 = arith.addf %282, %309 : vector<8x512xf32>
    %311 = vector.extract_strided_slice %310 {offsets = [0, 0], sizes = [8, 128], strides = [1, 1]} : vector<8x512xf32> to vector<8x128xf32>
    %312 = arith.negf %311 : vector<8x128xf32>
    %313 = math.exp %312 : vector<8x128xf32>
    %cst_101 = arith.constant 1.000000e+00 : f32
    %314 = vector.broadcast %cst_101 : f32 to vector<8x128xf32>
    %315 = arith.addf %314, %313 : vector<8x128xf32>
    %316 = arith.divf %314, %315 : vector<8x128xf32>
    %317 = vector.extract_strided_slice %310 {offsets = [0, 128], sizes = [8, 128], strides = [1, 1]} : vector<8x512xf32> to vector<8x128xf32>
    %318 = arith.negf %317 : vector<8x128xf32>
    %319 = math.exp %318 : vector<8x128xf32>
    %cst_102 = arith.constant 1.000000e+00 : f32
    %320 = vector.broadcast %cst_102 : f32 to vector<8x128xf32>
    %321 = arith.addf %320, %319 : vector<8x128xf32>
    %322 = arith.divf %320, %321 : vector<8x128xf32>
    %323 = vector.extract_strided_slice %310 {offsets = [0, 256], sizes = [8, 128], strides = [1, 1]} : vector<8x512xf32> to vector<8x128xf32>
    %324 = math.tanh %323 : vector<8x128xf32>
    %325 = vector.extract_strided_slice %310 {offsets = [0, 384], sizes = [8, 128], strides = [1, 1]} : vector<8x512xf32> to vector<8x128xf32>
    %326 = arith.negf %325 : vector<8x128xf32>
    %327 = math.exp %326 : vector<8x128xf32>
    %cst_103 = arith.constant 1.000000e+00 : f32
    %328 = vector.broadcast %cst_103 : f32 to vector<8x128xf32>
    %329 = arith.addf %328, %327 : vector<8x128xf32>
    %330 = arith.divf %328, %329 : vector<8x128xf32>
    %331 = arith.mulf %322, %269 : vector<8x128xf32>
    %332 = arith.mulf %316, %324 : vector<8x128xf32>
    %333 = arith.addf %331, %332 : vector<8x128xf32>
    %334 = math.tanh %333 : vector<8x128xf32>
    %335 = arith.mulf %330, %334 : vector<8x128xf32>
    %c5_i32 = arith.constant 5 : i32
    %c8_i32_104 = arith.constant 8 : i32
    %336 = arith.muli %c5_i32, %c8_i32_104 : i32
    %337 = tpu.assume_multiple %336, 8 : i32
    %338 = arith.index_cast %337 : i32 to index
    %c0_105 = arith.constant 0 : index
    %339 = vector.load %arg16[%338, %c0_105] : memref<64x512xf32, #tpu.memory_space<vmem>>, vector<8x512xf32>
    %c0_106 = arith.constant 0 : index
    %c0_107 = arith.constant 0 : index
    %340 = vector.load %arg4[%c0_106, %c0_107] : memref<128x512xf32, #tpu.memory_space<vmem>>, vector<128x512xf32>
    %cst_108 = arith.constant dense<0.000000e+00> : vector<8x512xf32>
    %341 = tpu.matmul %307, %340, %cst_108 {dimension_numbers = #tpu.dot_dimension_numbers<[1], [0], [0], [1], [0, 0, 1, 1], [], []>} : vector<8x128xf32>, vector<128x512xf32>, vector<8x512xf32> -> vector<8x512xf32>
    %342 = arith.addf %339, %341 : vector<8x512xf32>
    %c0_109 = arith.constant 0 : index
    %c0_110 = arith.constant 0 : index
    %343 = vector.load %arg6[%c0_109, %c0_110] : memref<128x512xf32, #tpu.memory_space<vmem>>, vector<128x512xf32>
    %cst_111 = arith.constant dense<0.000000e+00> : vector<8x512xf32>
    %344 = tpu.matmul %335, %343, %cst_111 {dimension_numbers = #tpu.dot_dimension_numbers<[1], [0], [0], [1], [0, 0, 1, 1], [], []>} : vector<8x128xf32>, vector<128x512xf32>, vector<8x512xf32> -> vector<8x512xf32>
    %345 = vector.broadcast %11 : vector<1x512xf32> to vector<8x512xf32>
    %346 = arith.addf %344, %345 : vector<8x512xf32>
    %347 = vector.extract_strided_slice %342 {offsets = [0, 0], sizes = [8, 128], strides = [1, 1]} : vector<8x512xf32> to vector<8x128xf32>
    %348 = arith.negf %347 : vector<8x128xf32>
    %349 = math.exp %348 : vector<8x128xf32>
    %cst_112 = arith.constant 1.000000e+00 : f32
    %350 = vector.broadcast %cst_112 : f32 to vector<8x128xf32>
    %351 = arith.addf %350, %349 : vector<8x128xf32>
    %352 = arith.divf %350, %351 : vector<8x128xf32>
    %353 = vector.extract_strided_slice %342 {offsets = [0, 128], sizes = [8, 128], strides = [1, 1]} : vector<8x512xf32> to vector<8x128xf32>
    %354 = arith.negf %353 : vector<8x128xf32>
    %355 = math.exp %354 : vector<8x128xf32>
    %cst_113 = arith.constant 1.000000e+00 : f32
    %356 = vector.broadcast %cst_113 : f32 to vector<8x128xf32>
    %357 = arith.addf %356, %355 : vector<8x128xf32>
    %358 = arith.divf %356, %357 : vector<8x128xf32>
    %359 = vector.extract_strided_slice %342 {offsets = [0, 256], sizes = [8, 128], strides = [1, 1]} : vector<8x512xf32> to vector<8x128xf32>
    %360 = math.tanh %359 : vector<8x128xf32>
    %361 = vector.extract_strided_slice %342 {offsets = [0, 384], sizes = [8, 128], strides = [1, 1]} : vector<8x512xf32> to vector<8x128xf32>
    %362 = arith.negf %361 : vector<8x128xf32>
    %363 = math.exp %362 : vector<8x128xf32>
    %cst_114 = arith.constant 1.000000e+00 : f32
    %364 = vector.broadcast %cst_114 : f32 to vector<8x128xf32>
    %365 = arith.addf %364, %363 : vector<8x128xf32>
    %366 = arith.divf %364, %365 : vector<8x128xf32>
    %367 = arith.mulf %358, %305 : vector<8x128xf32>
    %368 = arith.mulf %352, %360 : vector<8x128xf32>
    %369 = arith.addf %367, %368 : vector<8x128xf32>
    %370 = math.tanh %369 : vector<8x128xf32>
    %371 = arith.mulf %366, %370 : vector<8x128xf32>
    %c0_115 = arith.constant 0 : index
    %c0_116 = arith.constant 0 : index
    %372 = vector.load %arg5[%c0_115, %c0_116] : memref<128x512xf32, #tpu.memory_space<vmem>>, vector<128x512xf32>
    %cst_117 = arith.constant dense<0.000000e+00> : vector<8x512xf32>
    %373 = tpu.matmul %371, %372, %cst_117 {dimension_numbers = #tpu.dot_dimension_numbers<[1], [0], [0], [1], [0, 0, 1, 1], [], []>} : vector<8x128xf32>, vector<128x512xf32>, vector<8x512xf32> -> vector<8x512xf32>
    %374 = arith.addf %346, %373 : vector<8x512xf32>
    %375 = vector.extract_strided_slice %374 {offsets = [0, 0], sizes = [8, 128], strides = [1, 1]} : vector<8x512xf32> to vector<8x128xf32>
    %376 = arith.negf %375 : vector<8x128xf32>
    %377 = math.exp %376 : vector<8x128xf32>
    %cst_118 = arith.constant 1.000000e+00 : f32
    %378 = vector.broadcast %cst_118 : f32 to vector<8x128xf32>
    %379 = arith.addf %378, %377 : vector<8x128xf32>
    %380 = arith.divf %378, %379 : vector<8x128xf32>
    %381 = vector.extract_strided_slice %374 {offsets = [0, 128], sizes = [8, 128], strides = [1, 1]} : vector<8x512xf32> to vector<8x128xf32>
    %382 = arith.negf %381 : vector<8x128xf32>
    %383 = math.exp %382 : vector<8x128xf32>
    %cst_119 = arith.constant 1.000000e+00 : f32
    %384 = vector.broadcast %cst_119 : f32 to vector<8x128xf32>
    %385 = arith.addf %384, %383 : vector<8x128xf32>
    %386 = arith.divf %384, %385 : vector<8x128xf32>
    %387 = vector.extract_strided_slice %374 {offsets = [0, 256], sizes = [8, 128], strides = [1, 1]} : vector<8x512xf32> to vector<8x128xf32>
    %388 = math.tanh %387 : vector<8x128xf32>
    %389 = vector.extract_strided_slice %374 {offsets = [0, 384], sizes = [8, 128], strides = [1, 1]} : vector<8x512xf32> to vector<8x128xf32>
    %390 = arith.negf %389 : vector<8x128xf32>
    %391 = math.exp %390 : vector<8x128xf32>
    %cst_120 = arith.constant 1.000000e+00 : f32
    %392 = vector.broadcast %cst_120 : f32 to vector<8x128xf32>
    %393 = arith.addf %392, %391 : vector<8x128xf32>
    %394 = arith.divf %392, %393 : vector<8x128xf32>
    %395 = arith.mulf %386, %333 : vector<8x128xf32>
    %396 = arith.mulf %380, %388 : vector<8x128xf32>
    %397 = arith.addf %395, %396 : vector<8x128xf32>
    %398 = math.tanh %397 : vector<8x128xf32>
    %399 = arith.mulf %394, %398 : vector<8x128xf32>
    %c6_i32 = arith.constant 6 : i32
    %c8_i32_121 = arith.constant 8 : i32
    %400 = arith.muli %c6_i32, %c8_i32_121 : i32
    %401 = tpu.assume_multiple %400, 8 : i32
    %402 = arith.index_cast %401 : i32 to index
    %c0_122 = arith.constant 0 : index
    %403 = vector.load %arg16[%402, %c0_122] : memref<64x512xf32, #tpu.memory_space<vmem>>, vector<8x512xf32>
    %c0_123 = arith.constant 0 : index
    %c0_124 = arith.constant 0 : index
    %404 = vector.load %arg4[%c0_123, %c0_124] : memref<128x512xf32, #tpu.memory_space<vmem>>, vector<128x512xf32>
    %cst_125 = arith.constant dense<0.000000e+00> : vector<8x512xf32>
    %405 = tpu.matmul %371, %404, %cst_125 {dimension_numbers = #tpu.dot_dimension_numbers<[1], [0], [0], [1], [0, 0, 1, 1], [], []>} : vector<8x128xf32>, vector<128x512xf32>, vector<8x512xf32> -> vector<8x512xf32>
    %406 = arith.addf %403, %405 : vector<8x512xf32>
    %c0_126 = arith.constant 0 : index
    %c0_127 = arith.constant 0 : index
    %407 = vector.load %arg6[%c0_126, %c0_127] : memref<128x512xf32, #tpu.memory_space<vmem>>, vector<128x512xf32>
    %cst_128 = arith.constant dense<0.000000e+00> : vector<8x512xf32>
    %408 = tpu.matmul %399, %407, %cst_128 {dimension_numbers = #tpu.dot_dimension_numbers<[1], [0], [0], [1], [0, 0, 1, 1], [], []>} : vector<8x128xf32>, vector<128x512xf32>, vector<8x512xf32> -> vector<8x512xf32>
    %409 = vector.broadcast %11 : vector<1x512xf32> to vector<8x512xf32>
    %410 = arith.addf %408, %409 : vector<8x512xf32>
    %411 = vector.extract_strided_slice %406 {offsets = [0, 0], sizes = [8, 128], strides = [1, 1]} : vector<8x512xf32> to vector<8x128xf32>
    %412 = arith.negf %411 : vector<8x128xf32>
    %413 = math.exp %412 : vector<8x128xf32>
    %cst_129 = arith.constant 1.000000e+00 : f32
    %414 = vector.broadcast %cst_129 : f32 to vector<8x128xf32>
    %415 = arith.addf %414, %413 : vector<8x128xf32>
    %416 = arith.divf %414, %415 : vector<8x128xf32>
    %417 = vector.extract_strided_slice %406 {offsets = [0, 128], sizes = [8, 128], strides = [1, 1]} : vector<8x512xf32> to vector<8x128xf32>
    %418 = arith.negf %417 : vector<8x128xf32>
    %419 = math.exp %418 : vector<8x128xf32>
    %cst_130 = arith.constant 1.000000e+00 : f32
    %420 = vector.broadcast %cst_130 : f32 to vector<8x128xf32>
    %421 = arith.addf %420, %419 : vector<8x128xf32>
    %422 = arith.divf %420, %421 : vector<8x128xf32>
    %423 = vector.extract_strided_slice %406 {offsets = [0, 256], sizes = [8, 128], strides = [1, 1]} : vector<8x512xf32> to vector<8x128xf32>
    %424 = math.tanh %423 : vector<8x128xf32>
    %425 = vector.extract_strided_slice %406 {offsets = [0, 384], sizes = [8, 128], strides = [1, 1]} : vector<8x512xf32> to vector<8x128xf32>
    %426 = arith.negf %425 : vector<8x128xf32>
    %427 = math.exp %426 : vector<8x128xf32>
    %cst_131 = arith.constant 1.000000e+00 : f32
    %428 = vector.broadcast %cst_131 : f32 to vector<8x128xf32>
    %429 = arith.addf %428, %427 : vector<8x128xf32>
    %430 = arith.divf %428, %429 : vector<8x128xf32>
    %431 = arith.mulf %422, %369 : vector<8x128xf32>
    %432 = arith.mulf %416, %424 : vector<8x128xf32>
    %433 = arith.addf %431, %432 : vector<8x128xf32>
    %434 = math.tanh %433 : vector<8x128xf32>
    %435 = arith.mulf %430, %434 : vector<8x128xf32>
    %c0_132 = arith.constant 0 : index
    %c0_133 = arith.constant 0 : index
    %436 = vector.load %arg5[%c0_132, %c0_133] : memref<128x512xf32, #tpu.memory_space<vmem>>, vector<128x512xf32>
    %cst_134 = arith.constant dense<0.000000e+00> : vector<8x512xf32>
    %437 = tpu.matmul %435, %436, %cst_134 {dimension_numbers = #tpu.dot_dimension_numbers<[1], [0], [0], [1], [0, 0, 1, 1], [], []>} : vector<8x128xf32>, vector<128x512xf32>, vector<8x512xf32> -> vector<8x512xf32>
    %438 = arith.addf %410, %437 : vector<8x512xf32>
    %439 = vector.extract_strided_slice %438 {offsets = [0, 0], sizes = [8, 128], strides = [1, 1]} : vector<8x512xf32> to vector<8x128xf32>
    %440 = arith.negf %439 : vector<8x128xf32>
    %441 = math.exp %440 : vector<8x128xf32>
    %cst_135 = arith.constant 1.000000e+00 : f32
    %442 = vector.broadcast %cst_135 : f32 to vector<8x128xf32>
    %443 = arith.addf %442, %441 : vector<8x128xf32>
    %444 = arith.divf %442, %443 : vector<8x128xf32>
    %445 = vector.extract_strided_slice %438 {offsets = [0, 128], sizes = [8, 128], strides = [1, 1]} : vector<8x512xf32> to vector<8x128xf32>
    %446 = arith.negf %445 : vector<8x128xf32>
    %447 = math.exp %446 : vector<8x128xf32>
    %cst_136 = arith.constant 1.000000e+00 : f32
    %448 = vector.broadcast %cst_136 : f32 to vector<8x128xf32>
    %449 = arith.addf %448, %447 : vector<8x128xf32>
    %450 = arith.divf %448, %449 : vector<8x128xf32>
    %451 = vector.extract_strided_slice %438 {offsets = [0, 256], sizes = [8, 128], strides = [1, 1]} : vector<8x512xf32> to vector<8x128xf32>
    %452 = math.tanh %451 : vector<8x128xf32>
    %453 = vector.extract_strided_slice %438 {offsets = [0, 384], sizes = [8, 128], strides = [1, 1]} : vector<8x512xf32> to vector<8x128xf32>
    %454 = arith.negf %453 : vector<8x128xf32>
    %455 = math.exp %454 : vector<8x128xf32>
    %cst_137 = arith.constant 1.000000e+00 : f32
    %456 = vector.broadcast %cst_137 : f32 to vector<8x128xf32>
    %457 = arith.addf %456, %455 : vector<8x128xf32>
    %458 = arith.divf %456, %457 : vector<8x128xf32>
    %459 = arith.mulf %450, %397 : vector<8x128xf32>
    %460 = arith.mulf %444, %452 : vector<8x128xf32>
    %461 = arith.addf %459, %460 : vector<8x128xf32>
    %462 = math.tanh %461 : vector<8x128xf32>
    %463 = arith.mulf %458, %462 : vector<8x128xf32>
    %c7_i32 = arith.constant 7 : i32
    %c8_i32_138 = arith.constant 8 : i32
    %464 = arith.muli %c7_i32, %c8_i32_138 : i32
    %465 = tpu.assume_multiple %464, 8 : i32
    %466 = arith.index_cast %465 : i32 to index
    %c0_139 = arith.constant 0 : index
    %467 = vector.load %arg16[%466, %c0_139] : memref<64x512xf32, #tpu.memory_space<vmem>>, vector<8x512xf32>
    %c0_140 = arith.constant 0 : index
    %c0_141 = arith.constant 0 : index
    %468 = vector.load %arg4[%c0_140, %c0_141] : memref<128x512xf32, #tpu.memory_space<vmem>>, vector<128x512xf32>
    %cst_142 = arith.constant dense<0.000000e+00> : vector<8x512xf32>
    %469 = tpu.matmul %435, %468, %cst_142 {dimension_numbers = #tpu.dot_dimension_numbers<[1], [0], [0], [1], [0, 0, 1, 1], [], []>} : vector<8x128xf32>, vector<128x512xf32>, vector<8x512xf32> -> vector<8x512xf32>
    %470 = arith.addf %467, %469 : vector<8x512xf32>
    %c0_143 = arith.constant 0 : index
    %c0_144 = arith.constant 0 : index
    %471 = vector.load %arg6[%c0_143, %c0_144] : memref<128x512xf32, #tpu.memory_space<vmem>>, vector<128x512xf32>
    %cst_145 = arith.constant dense<0.000000e+00> : vector<8x512xf32>
    %472 = tpu.matmul %463, %471, %cst_145 {dimension_numbers = #tpu.dot_dimension_numbers<[1], [0], [0], [1], [0, 0, 1, 1], [], []>} : vector<8x128xf32>, vector<128x512xf32>, vector<8x512xf32> -> vector<8x512xf32>
    %473 = vector.broadcast %11 : vector<1x512xf32> to vector<8x512xf32>
    %474 = arith.addf %472, %473 : vector<8x512xf32>
    %475 = vector.extract_strided_slice %470 {offsets = [0, 0], sizes = [8, 128], strides = [1, 1]} : vector<8x512xf32> to vector<8x128xf32>
    %476 = arith.negf %475 : vector<8x128xf32>
    %477 = math.exp %476 : vector<8x128xf32>
    %cst_146 = arith.constant 1.000000e+00 : f32
    %478 = vector.broadcast %cst_146 : f32 to vector<8x128xf32>
    %479 = arith.addf %478, %477 : vector<8x128xf32>
    %480 = arith.divf %478, %479 : vector<8x128xf32>
    %481 = vector.extract_strided_slice %470 {offsets = [0, 128], sizes = [8, 128], strides = [1, 1]} : vector<8x512xf32> to vector<8x128xf32>
    %482 = arith.negf %481 : vector<8x128xf32>
    %483 = math.exp %482 : vector<8x128xf32>
    %cst_147 = arith.constant 1.000000e+00 : f32
    %484 = vector.broadcast %cst_147 : f32 to vector<8x128xf32>
    %485 = arith.addf %484, %483 : vector<8x128xf32>
    %486 = arith.divf %484, %485 : vector<8x128xf32>
    %487 = vector.extract_strided_slice %470 {offsets = [0, 256], sizes = [8, 128], strides = [1, 1]} : vector<8x512xf32> to vector<8x128xf32>
    %488 = math.tanh %487 : vector<8x128xf32>
    %489 = vector.extract_strided_slice %470 {offsets = [0, 384], sizes = [8, 128], strides = [1, 1]} : vector<8x512xf32> to vector<8x128xf32>
    %490 = arith.negf %489 : vector<8x128xf32>
    %491 = math.exp %490 : vector<8x128xf32>
    %cst_148 = arith.constant 1.000000e+00 : f32
    %492 = vector.broadcast %cst_148 : f32 to vector<8x128xf32>
    %493 = arith.addf %492, %491 : vector<8x128xf32>
    %494 = arith.divf %492, %493 : vector<8x128xf32>
    %495 = arith.mulf %486, %433 : vector<8x128xf32>
    %496 = arith.mulf %480, %488 : vector<8x128xf32>
    %497 = arith.addf %495, %496 : vector<8x128xf32>
    %498 = math.tanh %497 : vector<8x128xf32>
    %499 = arith.mulf %494, %498 : vector<8x128xf32>
    %c0_149 = arith.constant 0 : index
    %c0_150 = arith.constant 0 : index
    %500 = vector.load %arg5[%c0_149, %c0_150] : memref<128x512xf32, #tpu.memory_space<vmem>>, vector<128x512xf32>
    %cst_151 = arith.constant dense<0.000000e+00> : vector<8x512xf32>
    %501 = tpu.matmul %499, %500, %cst_151 {dimension_numbers = #tpu.dot_dimension_numbers<[1], [0], [0], [1], [0, 0, 1, 1], [], []>} : vector<8x128xf32>, vector<128x512xf32>, vector<8x512xf32> -> vector<8x512xf32>
    %502 = arith.addf %474, %501 : vector<8x512xf32>
    %503 = vector.extract_strided_slice %502 {offsets = [0, 0], sizes = [8, 128], strides = [1, 1]} : vector<8x512xf32> to vector<8x128xf32>
    %504 = arith.negf %503 : vector<8x128xf32>
    %505 = math.exp %504 : vector<8x128xf32>
    %cst_152 = arith.constant 1.000000e+00 : f32
    %506 = vector.broadcast %cst_152 : f32 to vector<8x128xf32>
    %507 = arith.addf %506, %505 : vector<8x128xf32>
    %508 = arith.divf %506, %507 : vector<8x128xf32>
    %509 = vector.extract_strided_slice %502 {offsets = [0, 128], sizes = [8, 128], strides = [1, 1]} : vector<8x512xf32> to vector<8x128xf32>
    %510 = arith.negf %509 : vector<8x128xf32>
    %511 = math.exp %510 : vector<8x128xf32>
    %cst_153 = arith.constant 1.000000e+00 : f32
    %512 = vector.broadcast %cst_153 : f32 to vector<8x128xf32>
    %513 = arith.addf %512, %511 : vector<8x128xf32>
    %514 = arith.divf %512, %513 : vector<8x128xf32>
    %515 = vector.extract_strided_slice %502 {offsets = [0, 256], sizes = [8, 128], strides = [1, 1]} : vector<8x512xf32> to vector<8x128xf32>
    %516 = math.tanh %515 : vector<8x128xf32>
    %517 = vector.extract_strided_slice %502 {offsets = [0, 384], sizes = [8, 128], strides = [1, 1]} : vector<8x512xf32> to vector<8x128xf32>
    %518 = arith.negf %517 : vector<8x128xf32>
    %519 = math.exp %518 : vector<8x128xf32>
    %cst_154 = arith.constant 1.000000e+00 : f32
    %520 = vector.broadcast %cst_154 : f32 to vector<8x128xf32>
    %521 = arith.addf %520, %519 : vector<8x128xf32>
    %522 = arith.divf %520, %521 : vector<8x128xf32>
    %523 = arith.mulf %514, %461 : vector<8x128xf32>
    %524 = arith.mulf %508, %516 : vector<8x128xf32>
    %525 = arith.addf %523, %524 : vector<8x128xf32>
    %526 = math.tanh %525 : vector<8x128xf32>
    %527 = arith.mulf %522, %526 : vector<8x128xf32>
    %c8_i32_155 = arith.constant 8 : i32
    %c0_156 = arith.constant 0 : index
    %c0_157 = arith.constant 0 : index
    %528 = vector.load %arg12[%c0_156, %c0_157] : memref<8x128xf32, #tpu.memory_space<vmem>>, vector<8x128xf32>
    tpu.vector_store %arg12[%c0_156, %c0_157], %499 {strides = array<i32>} : memref<8x128xf32, #tpu.memory_space<vmem>>, vector<8x128xf32>,
    %c0_158 = arith.constant 0 : index
    %c0_159 = arith.constant 0 : index
    %529 = vector.load %arg13[%c0_158, %c0_159] : memref<8x128xf32, #tpu.memory_space<vmem>>, vector<8x128xf32>
    tpu.vector_store %arg13[%c0_158, %c0_159], %497 {strides = array<i32>} : memref<8x128xf32, #tpu.memory_space<vmem>>, vector<8x128xf32>,
    %c0_160 = arith.constant 0 : index
    %c0_161 = arith.constant 0 : index
    %530 = vector.load %arg14[%c0_160, %c0_161] : memref<8x128xf32, #tpu.memory_space<vmem>>, vector<8x128xf32>
    tpu.vector_store %arg14[%c0_160, %c0_161], %527 {strides = array<i32>} : memref<8x128xf32, #tpu.memory_space<vmem>>, vector<8x128xf32>,
    %c0_162 = arith.constant 0 : index
    %c0_163 = arith.constant 0 : index
    %531 = vector.load %arg15[%c0_162, %c0_163] : memref<8x128xf32, #tpu.memory_space<vmem>>, vector<8x128xf32>
    tpu.vector_store %arg15[%c0_162, %c0_163], %525 {strides = array<i32>} : memref<8x128xf32, #tpu.memory_space<vmem>>, vector<8x128xf32>,
    %c0_i32_164 = arith.constant 0 : i32
    %532 = arith.cmpi eq, %arg1, %c0_i32_164 : i32
    %533 = arith.extui %532 : i1 to i32
    %c0_i32_165 = arith.constant 0 : i32
    %534 = arith.cmpi ne, %533, %c0_i32_165 : i32
    scf.if %534 {
      %c0_166 = arith.constant 0 : index
      %c0_167 = arith.constant 0 : index
      %535 = vector.load %arg9[%c0_166, %c0_167] : memref<128x128xf32, #tpu.memory_space<vmem>>, vector<128x128xf32>
      %cst_168 = arith.constant dense<0.000000e+00> : vector<8x128xf32>
      %536 = tpu.matmul %527, %535, %cst_168 {dimension_numbers = #tpu.dot_dimension_numbers<[1], [0], [0], [1], [0, 0, 1, 1], [], []>} : vector<8x128xf32>, vector<128x128xf32>, vector<8x128xf32> -> vector<8x128xf32>
      %c0_169 = arith.constant 0 : index
      %c0_170 = arith.constant 0 : index
      %537 = vector.load %arg10[%c0_169, %c0_170] : memref<1x128xf32, #tpu.memory_space<vmem>>, vector<1x128xf32>
      %538 = vector.broadcast %537 : vector<1x128xf32> to vector<8x128xf32>
      %539 = arith.addf %536, %538 : vector<8x128xf32>
      %c0_171 = arith.constant 0 : index
      %c0_172 = arith.constant 0 : index
      %540 = vector.load %arg11[%c0_171, %c0_172] : memref<8x128xf32, #tpu.memory_space<vmem>>, vector<8x128xf32>
      tpu.vector_store %arg11[%c0_171, %c0_172], %539 {strides = array<i32>} : memref<8x128xf32, #tpu.memory_space<vmem>>, vector<8x128xf32>,
    } else {
    }
    return
  }
  func.func @transform_0(%arg0: i32, %arg1: i32) -> (i32, i32, i32) {
    %c0_i32 = arith.constant 0 : i32
    %c0_i32_0 = arith.constant 0 : i32
    return %arg0, %arg1, %c0_i32 : i32, i32, i32
  }
  func.func @transform_1(%arg0: i32, %arg1: i32) -> (i32, i32) {
    %c0_i32 = arith.constant 0 : i32
    %c0_i32_0 = arith.constant 0 : i32
    %c0_i32_1 = arith.constant 0 : i32
    return %c0_i32, %c0_i32_0 : i32, i32
  }
  func.func @transform_2(%arg0: i32, %arg1: i32) -> (i32, i32) {
    %c0_i32 = arith.constant 0 : i32
    %c0_i32_0 = arith.constant 0 : i32
    %c0_i32_1 = arith.constant 0 : i32
    return %c0_i32, %c0_i32_0 : i32, i32
  }
  func.func @transform_3(%arg0: i32, %arg1: i32) -> (i32, i32) {
    %c0_i32 = arith.constant 0 : i32
    %c0_i32_0 = arith.constant 0 : i32
    %c0_i32_1 = arith.constant 0 : i32
    return %c0_i32, %c0_i32_0 : i32, i32
  }
  func.func @transform_4(%arg0: i32, %arg1: i32) -> (i32, i32) {
    %c0_i32 = arith.constant 0 : i32
    %c0_i32_0 = arith.constant 0 : i32
    %c0_i32_1 = arith.constant 0 : i32
    return %c0_i32, %c0_i32_0 : i32, i32
  }
  func.func @transform_5(%arg0: i32, %arg1: i32) -> (i32, i32) {
    %c0_i32 = arith.constant 0 : i32
    %c0_i32_0 = arith.constant 0 : i32
    %c0_i32_1 = arith.constant 0 : i32
    return %c0_i32, %c0_i32_0 : i32, i32
  }
  func.func @transform_6(%arg0: i32, %arg1: i32) -> (i32, i32) {
    %c0_i32 = arith.constant 0 : i32
    %c0_i32_0 = arith.constant 0 : i32
    %c0_i32_1 = arith.constant 0 : i32
    return %c0_i32, %c0_i32_0 : i32, i32
  }
  func.func @transform_7(%arg0: i32, %arg1: i32) -> (i32, i32) {
    %c0_i32 = arith.constant 0 : i32
    %c0_i32_0 = arith.constant 0 : i32
    %c0_i32_1 = arith.constant 0 : i32
    return %c0_i32, %c0_i32_0 : i32, i32
  }
  func.func @transform_8(%arg0: i32, %arg1: i32) -> (i32, i32) {
    %c0_i32 = arith.constant 0 : i32
    %c0_i32_0 = arith.constant 0 : i32
    %c0_i32_1 = arith.constant 0 : i32
    return %c0_i32, %c0_i32_0 : i32, i32
  }
  func.func @transform_9(%arg0: i32, %arg1: i32) -> (i32, i32) {
    %c0_i32 = arith.constant 0 : i32
    %c0_i32_0 = arith.constant 0 : i32
    return %arg0, %c0_i32 : i32, i32
  }
}

</mosaic_0001>

<llo_original>
// kernel: tpu_custom_call.1
$region0: #{tpu_custom_call.1}
  #allocation0 [shape = 'u32[]', space=smem, size = 0x4, offset = 0x4, fixed_abs, tag = 'smem constant byte address 0x4 - core index']
  #allocation1 [shape = 'u32[72,128]{1,0:T(1,128)}', space=vmem, size = 0x9000, scoped, tag = 'internal scratch']
  #allocation2 [shape = 'f32[8,128]{1,0:T(8,128)}', space=vmem, size = 0x1000, scoped, tag = 'scratch operand']
  #allocation3 [shape = 'f32[8,128]{1,0:T(8,128)}', space=vmem, size = 0x1000, scoped, tag = 'scratch operand']
  #allocation4 [shape = 'f32[8,128]{1,0:T(8,128)}', space=vmem, size = 0x1000, scoped, tag = 'scratch operand']
  #allocation5 [shape = 'f32[8,128]{1,0:T(8,128)}', space=vmem, size = 0x1000, scoped, tag = 'scratch operand']
  #allocation6 [shape = 'f32[64,512]{1,0:T(8,128)}', space=vmem, size = 0x20000, scoped, tag = 'scratch operand']
  %s0 = inlined_call_operand.vmem [shape: f32[1,64,16], index: 0, kind: input, shape index: {}]
  %s1 = inlined_call_operand.vmem [shape: f32[16,512], index: 1, kind: input, shape index: {}]
  %s2 = inlined_call_operand.hbm [shape: f32[128,512], index: 2, kind: input, shape index: {}]
  %s3 = inlined_call_operand.hbm [shape: f32[128,512], index: 3, kind: input, shape index: {}]
  %s4 = inlined_call_operand.hbm [shape: f32[128,512], index: 4, kind: input, shape index: {}]
  %s5 = inlined_call_operand.vmem [shape: f32[1,512], index: 5, kind: input, shape index: {}]
  %s6 = inlined_call_operand.vmem [shape: f32[1,512], index: 6, kind: input, shape index: {}]
  %s7 = inlined_call_operand.hbm [shape: f32[128,128], index: 7, kind: input, shape index: {}]
  %s8 = inlined_call_operand.vmem [shape: f32[1,128], index: 8, kind: input, shape index: {}]
  %s9 = inlined_call_operand.hbm [shape: f32[8,128], index: 9, kind: output, shape index: {}]
  %s10 = sld [smem:[#allocation0]]
  $region70: #{tpu_custom_call.1} parent=0
    _
  %s12 = ssub.s32 1, %s10
  %s13 = scalar_select 0, %s12, %s10
  $region1: #{tpu_custom_call.1} parent=0
    #allocation7 [shape = 'u8[262144]{0}', space=vmem, size = 0x40000, scoped, tag = 'input window, operand 2, single buffered']
    #allocation8 [shape = 's32[1]{0}', space=sflag, size = 0x4, scoped, tag = 'scoped memory for tpu_custom_call.1']
    #allocation9 [shape = 's32[1]{0}', space=sflag, size = 0x4, scoped, tag = 'scoped memory for tpu_custom_call.1']
    #allocation10 [shape = 'u8[262144]{0}', space=vmem, size = 0x40000, scoped, tag = 'input window, operand 3, single buffered']
    #allocation11 [shape = 's32[1]{0}', space=sflag, size = 0x4, scoped, tag = 'scoped memory for tpu_custom_call.1']
    #allocation12 [shape = 'u8[262144]{0}', space=vmem, size = 0x40000, scoped, tag = 'input window, operand 4, single buffered']
    #allocation13 [shape = 'u8[65536]{0}', space=vmem, size = 0x10000, scoped, tag = 'input window, operand 7, single buffered']
    #allocation14 [shape = 's32[1]{0}', space=sflag, size = 0x4, scoped, tag = 'scoped memory for tpu_custom_call.1']
    #allocation15 [shape = 'u8[4096]{0}', space=vmem, size = 0x1000, scoped, tag = 'output window, operand 0, single buffered']
    %14 = vsyncpa [#allocation8], 0
    %15 = vsyncpa [#allocation11], 0
    %16 = vsyncpa [#allocation14], 0
    %17 = vsyncpa [#allocation9], 0
    // Predicated region
    $region2: #{tpu_custom_call.1} parent=1 // pred_check
      _
    $region3: #{tpu_custom_call.1} parent=1 // pred_check_branch
      %19 = sbr.rel (0) target = $region5
    $region4: #{tpu_custom_call.1} parent=1 // pred_region
      _
    $region5: #{tpu_custom_call.1} parent=1 // pred_fallthru
      _
    // Predicated region
    $region6: #{tpu_custom_call.1} parent=1 // pred_check
      _
    $region7: #{tpu_custom_call.1} parent=1 // pred_check_branch
      %21 = sbr.rel (0) target = $region9
    $region8: #{tpu_custom_call.1} parent=1 // pred_region
      _
    $region9: #{tpu_custom_call.1} parent=1 // pred_fallthru
      _
    // Predicated region
    $region10: #{tpu_custom_call.1} parent=1 // pred_check
      _
    $region11: #{tpu_custom_call.1} parent=1 // pred_check_branch
      %23 = sbr.rel (0) target = $region13
    $region12: #{tpu_custom_call.1} parent=1 // pred_region
      %25 = vsyncadd [#allocation8], 0
      %s26 = sshll.u32 %s2, 4
      %s27 = int_to_ptr.hbm [resolvable:$true] %s26
      %s28 = sshll.u32 [#allocation7], 4
      %s29 = int_to_ptr.vmem [resolvable:$true] %s28
      %34 = dma.hbm_to_vmem [thread:$0]  %s27, 8192, %s29, [#allocation8], 512, 512, 32
    $region13: #{tpu_custom_call.1} parent=1 // pred_fallthru
      _
    // Predicated region
    $region14: #{tpu_custom_call.1} parent=1 // pred_check
      _
    $region15: #{tpu_custom_call.1} parent=1 // pred_check_branch
      %36 = sbr.rel (0) target = $region17
    $region16: #{tpu_custom_call.1} parent=1 // pred_region
      %38 = vsyncadd [#allocation11], 0
      %s39 = sshll.u32 %s3, 4
      %s40 = int_to_ptr.hbm [resolvable:$true] %s39
      %s41 = sshll.u32 [#allocation10], 4
      %s42 = int_to_ptr.vmem [resolvable:$true] %s41
      %47 = dma.hbm_to_vmem [thread:$0]  %s40, 8192, %s42, [#allocation11], 512, 512, 32
    $region17: #{tpu_custom_call.1} parent=1 // pred_fallthru
      _
    // Predicated region
    $region18: #{tpu_custom_call.1} parent=1 // pred_check
      _
    $region19: #{tpu_custom_call.1} parent=1 // pred_check_branch
      %49 = sbr.rel (0) target = $region21
    $region20: #{tpu_custom_call.1} parent=1 // pred_region
      %51 = vsyncadd [#allocation11], 0
      %s52 = sshll.u32 %s4, 4
      %s53 = int_to_ptr.hbm [resolvable:$true] %s52
      %s54 = sshll.u32 [#allocation12], 4
      %s55 = int_to_ptr.vmem [resolvable:$true] %s54
      %60 = dma.hbm_to_vmem [thread:$0]  %s53, 8192, %s55, [#allocation11], 512, 512, 32
    $region21: #{tpu_custom_call.1} parent=1 // pred_fallthru
      _
    // Predicated region
    $region22: #{tpu_custom_call.1} parent=1 // pred_check
      _
    $region23: #{tpu_custom_call.1} parent=1 // pred_check_branch
      %62 = sbr.rel (0) target = $region25
    $region24: #{tpu_custom_call.1} parent=1 // pred_region
      _
    $region25: #{tpu_custom_call.1} parent=1 // pred_fallthru
      _
    // Predicated region
    $region26: #{tpu_custom_call.1} parent=1 // pred_check
      _
    $region27: #{tpu_custom_call.1} parent=1 // pred_check_branch
      %64 = sbr.rel (0) target = $region29
    $region28: #{tpu_custom_call.1} parent=1 // pred_region
      _
    $region29: #{tpu_custom_call.1} parent=1 // pred_fallthru
      _
    // Predicated region
    $region30: #{tpu_custom_call.1} parent=1 // pred_check
      _
    $region31: #{tpu_custom_call.1} parent=1 // pred_check_branch
      %66 = sbr.rel (0) target = $region33
    $region32: #{tpu_custom_call.1} parent=1 // pred_region
      %68 = vsyncadd [#allocation14], 0
      %s69 = sshll.u32 %s7, 4
      %s70 = int_to_ptr.hbm [resolvable:$true] %s69
      %s71 = sshll.u32 [#allocation13], 4
      %s72 = int_to_ptr.vmem [resolvable:$true] %s71
      %77 = dma.hbm_to_vmem [thread:$0]  %s70, 2048, %s72, [#allocation14], 128, 128, 8
    $region33: #{tpu_custom_call.1} parent=1 // pred_fallthru
      _
    // Predicated region
    $region34: #{tpu_custom_call.1} parent=1 // pred_check
      _
    $region35: #{tpu_custom_call.1} parent=1 // pred_check_branch
      %79 = sbr.rel (0) target = $region37
    $region36: #{tpu_custom_call.1} parent=1 // pred_region
      _
    $region37: #{tpu_custom_call.1} parent=1 // pred_fallthru
      _
    // Predicated region
    $region38: #{tpu_custom_call.1} parent=1 // pred_check
      _
    $region39: #{tpu_custom_call.1} parent=1 // pred_check_branch
      %81 = sbr.rel (0) target = $region41
    $region40: #{tpu_custom_call.1} parent=1 // pred_region
      %83 = dma.done [#allocation8], 8192
    $region41: #{tpu_custom_call.1} parent=1 // pred_fallthru
      _
    // Predicated region
    $region42: #{tpu_custom_call.1} parent=1 // pred_check
      _
    $region43: #{tpu_custom_call.1} parent=1 // pred_check_branch
      %85 = sbr.rel (0) target = $region45
    $region44: #{tpu_custom_call.1} parent=1 // pred_region
      %87 = dma.done [#allocation11], 8192
    $region45: #{tpu_custom_call.1} parent=1 // pred_fallthru
      _
    // Predicated region
    $region46: #{tpu_custom_call.1} parent=1 // pred_check
      _
    $region47: #{tpu_custom_call.1} parent=1 // pred_check_branch
      %89 = sbr.rel (0) target = $region49
    $region48: #{tpu_custom_call.1} parent=1 // pred_region
      %91 = dma.done [#allocation11], 8192
    $region49: #{tpu_custom_call.1} parent=1 // pred_fallthru
      _
    // Predicated region
    $region50: #{tpu_custom_call.1} parent=1 // pred_check
      _
    $region51: #{tpu_custom_call.1} parent=1 // pred_check_branch
      %93 = sbr.rel (0) target = $region53
    $region52: #{tpu_custom_call.1} parent=1 // pred_region
      %95 = dma.done [#allocation14], 2048
    $region53: #{tpu_custom_call.1} parent=1 // pred_fallthru
      _
    %p96 = scmp.eq.s32.totalorder 0, 0
    // Predicated region
    $region54: #{tpu_custom_call.1} parent=1 // pred_check
      %p97 = pneg %p96
    $region55: #{tpu_custom_call.1} parent=1 // pred_check_branch
      %99 = sbr.rel (%p97) target = $region57
    $region56: #{tpu_custom_call.1} parent=1 // pred_region
      %100 = vst [vmem:[#allocation2] sm:$0xff] 0.0
      %101 = vst [vmem:[#allocation3] sm:$0xff] 0.0
      %102 = vst [vmem:[#allocation4] sm:$0xff] 0.0
      %103 = vst [vmem:[#allocation5] sm:$0xff] 0.0
    $region57: #{tpu_custom_call.1} parent=1 // pred_fallthru
      _
    %v104 = vld [vmem:[%s0] sm:$0xff]
    %v105 = vld [vmem:[%s0 + $0x8] sm:$0xff]
    %v106 = vld [vmem:[%s0 + $0x10] sm:$0xff]
    %v107 = vld [vmem:[%s0 + $0x18] sm:$0xff]
    %v108 = vld [vmem:[%s0 + $0x20] sm:$0xff]
    %v109 = vld [vmem:[%s0 + $0x28] sm:$0xff]
    %v110 = vld [vmem:[%s0 + $0x30] sm:$0xff]
    %v111 = vld [vmem:[%s0 + $0x38] sm:$0xff]
    %v112 = vld [vmem:[%s1] sm:$0xff]
    %v113 = vld [vmem:[%s1 + $0x8] sm:$0xff]
    %v114 = vld [vmem:[%s1 + $0x10] sm:$0xff]
    %v115 = vld [vmem:[%s1 + $0x18] sm:$0xff]
    %v116 = vld [vmem:[%s1 + $0x20] sm:$0xff]
    %v117 = vld [vmem:[%s1 + $0x28] sm:$0xff]
    %v118 = vld [vmem:[%s1 + $0x30] sm:$0xff]
    %v119 = vld [vmem:[%s1 + $0x38] sm:$0xff]
    %v120 = vld [vmem:[%s5] sm:$0xf]
    %v122 = vperm.slane %v120, 0
    %v123 = vperm.slane %v120, 1
    %v124 = vperm.slane %v120, 2
    %v125 = vperm.slane %v120, 3
    %vm130 = vcmask 130048
    %v132 = vsel %vm130, %v104, 0
    %v135 = vsel %vm130, %v105, 0
    %v138 = vsel %vm130, %v106, 0
    %v141 = vsel %vm130, %v107, 0
    %v144 = vsel %vm130, %v108, 0
    %v147 = vsel %vm130, %v109, 0
    %v150 = vsel %vm130, %v110, 0
    %v153 = vsel %vm130, %v111, 0
    %155 = vmatpush.msra.mxu0 0.0
    %156 = vmatpush.msra.mxu0 0.0
    %157 = vmatpush.msra.mxu0 0.0
    %158 = vmatpush.msra.mxu0 0.0
    %159 = vmatpush.msra.mxu0 0.0
    %160 = vmatpush.msra.mxu0 0.0
    %161 = vmatpush.msra.mxu0 0.0
    %162 = vmatpush.msra.mxu0 0.0
    %163 = vmatpush.msra.mxu0 0.0
    %164 = vmatpush.msra.mxu0 0.0
    %165 = vmatpush.msra.mxu0 0.0
    %166 = vmatpush.msra.mxu0 0.0
    %167 = vmatpush.msra.mxu0 0.0
    %168 = vmatpush.msra.mxu0 0.0
    %169 = vmatpush.msra.mxu0 %v116
    %170 = vmatpush.msra.mxu0 %v112
    %171 = vmatmul.f32.gmra.mxu0 %v132
    %v172 = vpop.f32.mrf.mxu0
    %v173 = vadd.f32 %v122, %v172
    %174 = vmatmul.f32.gmra.mxu0 %v135
    %v175 = vpop.f32.mrf.mxu0
    %v176 = vadd.f32 %v122, %v175
    %177 = vmatmul.f32.gmra.mxu0 %v138
    %v178 = vpop.f32.mrf.mxu0
    %v179 = vadd.f32 %v122, %v178
    %180 = vmatmul.f32.gmra.mxu0 %v141
    %v181 = vpop.f32.mrf.mxu0
    %v182 = vadd.f32 %v122, %v181
    %183 = vmatmul.f32.gmra.mxu0 %v144
    %v184 = vpop.f32.mrf.mxu0
    %v185 = vadd.f32 %v122, %v184
    %186 = vmatmul.f32.gmra.mxu0 %v147
    %v187 = vpop.f32.mrf.mxu0
    %v188 = vadd.f32 %v122, %v187
    %189 = vmatmul.f32.gmra.mxu0 %v150
    %v190 = vpop.f32.mrf.mxu0
    %v191 = vadd.f32 %v122, %v190
    %192 = vmatmul.f32.gmra.mxu0 %v153
    %v193 = vpop.f32.mrf.mxu0
    %v194 = vadd.f32 %v122, %v193
    %195 = vdwg.mxu0
    %196 = vmatpush.msra.mxu0 0.0
    %197 = vmatpush.msra.mxu0 0.0
    %198 = vmatpush.msra.mxu0 0.0
    %199 = vmatpush.msra.mxu0 0.0
    %200 = vmatpush.msra.mxu0 0.0
    %201 = vmatpush.msra.mxu0 0.0
    %202 = vmatpush.msra.mxu0 0.0
    %203 = vmatpush.msra.mxu0 0.0
    %204 = vmatpush.msra.mxu0 0.0
    %205 = vmatpush.msra.mxu0 0.0
    %206 = vmatpush.msra.mxu0 0.0
    %207 = vmatpush.msra.mxu0 0.0
    %208 = vmatpush.msra.mxu0 0.0
    %209 = vmatpush.msra.mxu0 0.0
    %210 = vmatpush.msra.mxu0 %v117
    %211 = vmatpush.msra.mxu0 %v113
    %212 = vmatmul.f32.gmra.mxu0 %v132
    %v213 = vpop.f32.mrf.mxu0
    %v214 = vadd.f32 %v123, %v213
    %215 = vmatmul.f32.gmra.mxu0 %v135
    %v216 = vpop.f32.mrf.mxu0
    %v217 = vadd.f32 %v123, %v216
    %218 = vmatmul.f32.gmra.mxu0 %v138
    %v219 = vpop.f32.mrf.mxu0
    %v220 = vadd.f32 %v123, %v219
    %221 = vmatmul.f32.gmra.mxu0 %v141
    %v222 = vpop.f32.mrf.mxu0
    %v223 = vadd.f32 %v123, %v222
    %224 = vmatmul.f32.gmra.mxu0 %v144
    %v225 = vpop.f32.mrf.mxu0
    %v226 = vadd.f32 %v123, %v225
    %227 = vmatmul.f32.gmra.mxu0 %v147
    %v228 = vpop.f32.mrf.mxu0
    %v229 = vadd.f32 %v123, %v228
    %230 = vmatmul.f32.gmra.mxu0 %v150
    %v231 = vpop.f32.mrf.mxu0
    %v232 = vadd.f32 %v123, %v231
    %233 = vmatmul.f32.gmra.mxu0 %v153
    %v234 = vpop.f32.mrf.mxu0
    %v235 = vadd.f32 %v123, %v234
    %236 = vdwg.mxu0
    %237 = vmatpush.msra.mxu0 0.0
    %238 = vmatpush.msra.mxu0 0.0
    %239 = vmatpush.msra.mxu0 0.0
    %240 = vmatpush.msra.mxu0 0.0
    %241 = vmatpush.msra.mxu0 0.0
    %242 = vmatpush.msra.mxu0 0.0
    %243 = vmatpush.msra.mxu0 0.0
    %244 = vmatpush.msra.mxu0 0.0
    %245 = vmatpush.msra.mxu0 0.0
    %246 = vmatpush.msra.mxu0 0.0
    %247 = vmatpush.msra.mxu0 0.0
    %248 = vmatpush.msra.mxu0 0.0
    %249 = vmatpush.msra.mxu0 0.0
    %250 = vmatpush.msra.mxu0 0.0
    %251 = vmatpush.msra.mxu0 %v118
    %252 = vmatpush.msra.mxu0 %v114
    %253 = vmatmul.f32.gmra.mxu0 %v132
    %v254 = vpop.f32.mrf.mxu0
    %v255 = vadd.f32 %v124, %v254
    %256 = vmatmul.f32.gmra.mxu0 %v135
    %v257 = vpop.f32.mrf.mxu0
    %v258 = vadd.f32 %v124, %v257
    %259 = vmatmul.f32.gmra.mxu0 %v138
    %v260 = vpop.f32.mrf.mxu0
    %v261 = vadd.f32 %v124, %v260
    %262 = vmatmul.f32.gmra.mxu0 %v141
    %v263 = vpop.f32.mrf.mxu0
    %v264 = vadd.f32 %v124, %v263
    %265 = vmatmul.f32.gmra.mxu0 %v144
    %v266 = vpop.f32.mrf.mxu0
    %v267 = vadd.f32 %v124, %v266
    %268 = vmatmul.f32.gmra.mxu0 %v147
    %v269 = vpop.f32.mrf.mxu0
    %v270 = vadd.f32 %v124, %v269
    %271 = vmatmul.f32.gmra.mxu0 %v150
    %v272 = vpop.f32.mrf.mxu0
    %v273 = vadd.f32 %v124, %v272
    %274 = vmatmul.f32.gmra.mxu0 %v153
    %v275 = vpop.f32.mrf.mxu0
    %v276 = vadd.f32 %v124, %v275
    %277 = vdwg.mxu0
    %278 = vmatpush.msra.mxu0 0.0
    %279 = vmatpush.msra.mxu0 0.0
    %280 = vmatpush.msra.mxu0 0.0
    %281 = vmatpush.msra.mxu0 0.0
    %282 = vmatpush.msra.mxu0 0.0
    %283 = vmatpush.msra.mxu0 0.0
    %284 = vmatpush.msra.mxu0 0.0
    %285 = vmatpush.msra.mxu0 0.0
    %286 = vmatpush.msra.mxu0 0.0
    %287 = vmatpush.msra.mxu0 0.0
    %288 = vmatpush.msra.mxu0 0.0
    %289 = vmatpush.msra.mxu0 0.0
    %290 = vmatpush.msra.mxu0 0.0
    %291 = vmatpush.msra.mxu0 0.0
    %292 = vmatpush.msra.mxu0 %v119
    %293 = vmatpush.msra.mxu0 %v115
    %294 = vmatmul.f32.gmra.mxu0 %v132
    %v295 = vpop.f32.mrf.mxu0
    %v296 = vadd.f32 %v125, %v295
    %297 = vmatmul.f32.gmra.mxu0 %v135
    %v298 = vpop.f32.mrf.mxu0
    %v299 = vadd.f32 %v125, %v298
    %300 = vmatmul.f32.gmra.mxu0 %v138
    %v301 = vpop.f32.mrf.mxu0
    %v302 = vadd.f32 %v125, %v301
    %303 = vmatmul.f32.gmra.mxu0 %v141
    %v304 = vpop.f32.mrf.mxu0
    %v305 = vadd.f32 %v125, %v304
    %306 = vmatmul.f32.gmra.mxu0 %v144
    %v307 = vpop.f32.mrf.mxu0
    %v308 = vadd.f32 %v125, %v307
    %309 = vmatmul.f32.gmra.mxu0 %v147
    %v310 = vpop.f32.mrf.mxu0
    %v311 = vadd.f32 %v125, %v310
    %312 = vmatmul.f32.gmra.mxu0 %v150
    %v313 = vpop.f32.mrf.mxu0
    %v314 = vadd.f32 %v125, %v313
    %315 = vmatmul.f32.gmra.mxu0 %v153
    %v316 = vpop.f32.mrf.mxu0
    %v317 = vadd.f32 %v125, %v316
    %318 = vdwg.mxu0
    %319 = vst [vmem:[#allocation6] sm:$0xff] %v173
    %320 = vst [vmem:[#allocation6 + $0x8] sm:$0xff] %v214
    %321 = vst [vmem:[#allocation6 + $0x10] sm:$0xff] %v255
    %322 = vst [vmem:[#allocation6 + $0x18] sm:$0xff] %v296
    %323 = vst [vmem:[#allocation6 + $0x20] sm:$0xff] %v176
    %324 = vst [vmem:[#allocation6 + $0x28] sm:$0xff] %v217
    %325 = vst [vmem:[#allocation6 + $0x30] sm:$0xff] %v258
    %326 = vst [vmem:[#allocation6 + $0x38] sm:$0xff] %v299
    %327 = vst [vmem:[#allocation6 + $0x40] sm:$0xff] %v179
    %328 = vst [vmem:[#allocation6 + $0x48] sm:$0xff] %v220
    %329 = vst [vmem:[#allocation6 + $0x50] sm:$0xff] %v261
    %330 = vst [vmem:[#allocation6 + $0x58] sm:$0xff] %v302
    %331 = vst [vmem:[#allocation6 + $0x60] sm:$0xff] %v182
    %332 = vst [vmem:[#allocation6 + $0x68] sm:$0xff] %v223
    %333 = vst [vmem:[#allocation6 + $0x70] sm:$0xff] %v264
    %334 = vst [vmem:[#allocation6 + $0x78] sm:$0xff] %v305
    %335 = vst [vmem:[#allocation6 + $0x80] sm:$0xff] %v185
    %336 = vst [vmem:[#allocation6 + $0x88] sm:$0xff] %v226
    %337 = vst [vmem:[#allocation6 + $0x90] sm:$0xff] %v267
    %338 = vst [vmem:[#allocation6 + $0x98] sm:$0xff] %v308
    %339 = vst [vmem:[#allocation6 + $0xa0] sm:$0xff] %v188
    %340 = vst [vmem:[#allocation6 + $0xa8] sm:$0xff] %v229
    %341 = vst [vmem:[#allocation6 + $0xb0] sm:$0xff] %v270
    %342 = vst [vmem:[#allocation6 + $0xb8] sm:$0xff] %v311
    %343 = vst [vmem:[#allocation6 + $0xc0] sm:$0xff] %v191
    %344 = vst [vmem:[#allocation6 + $0xc8] sm:$0xff] %v232
    %345 = vst [vmem:[#allocation6 + $0xd0] sm:$0xff] %v273
    %346 = vst [vmem:[#allocation6 + $0xd8] sm:$0xff] %v314
    %347 = vst [vmem:[#allocation6 + $0xe0] sm:$0xff] %v194
    %348 = vst [vmem:[#allocation6 + $0xe8] sm:$0xff] %v235
    %349 = vst [vmem:[#allocation6 + $0xf0] sm:$0xff] %v276
    %350 = vst [vmem:[#allocation6 + $0xf8] sm:$0xff] %v317
    %v351 = vld [vmem:[%s6] sm:$0xf]
    %v352 = vld [vmem:[#allocation2] sm:$0xff]
    %v353 = vld [vmem:[#allocation3] sm:$0xff]
    %v354 = vld [vmem:[#allocation4] sm:$0xff]
    %v355 = vld [vmem:[#allocation5] sm:$0xff]
    %s356 = smul.u32 0, 4
    %s357 = smul.addr %s356, 8
    %s358 = scalar_lea.vmem [#allocation6], %s357
    %v359 = vld [vmem:[%s358] sm:$0xff]
    %v360 = vld [vmem:[%s358 + $0x8] sm:$0xff]
    %v361 = vld [vmem:[%s358 + $0x10] sm:$0xff]
    %v362 = vld [vmem:[%s358 + $0x18] sm:$0xff]
    %v363 = vld [vmem:[#allocation7] sm:$0xff]
    %v364 = vld [vmem:[#allocation7 + $0x8] sm:$0xff]
    %v365 = vld [vmem:[#allocation7 + $0x10] sm:$0xff]
    %v366 = vld [vmem:[#allocation7 + $0x18] sm:$0xff]
    %v367 = vld [vmem:[#allocation7 + $0x20] sm:$0xff]
    %v368 = vld [vmem:[#allocation7 + $0x28] sm:$0xff]
    %v369 = vld [vmem:[#allocation7 + $0x30] sm:$0xff]
    %v370 = vld [vmem:[#allocation7 + $0x38] sm:$0xff]
    %v371 = vld [vmem:[#allocation7 + $0x40] sm:$0xff]
    %v372 = vld [vmem:[#allocation7 + $0x48] sm:$0xff]
    %v373 = vld [vmem:[#allocation7 + $0x50] sm:$0xff]
    %v374 = vld [vmem:[#allocation7 + $0x58] sm:$0xff]
    %v375 = vld [vmem:[#allocation7 + $0x60] sm:$0xff]
    %v376 = vld [vmem:[#allocation7 + $0x68] sm:$0xff]
    %v377 = vld [vmem:[#allocation7 + $0x70] sm:$0xff]
    %v378 = vld [vmem:[#allocation7 + $0x78] sm:$0xff]
    %v379 = vld [vmem:[#allocation7 + $0x80] sm:$0xff]
    %v380 = vld [vmem:[#allocation7 + $0x88] sm:$0xff]
    %v381 = vld [vmem:[#allocation7 + $0x90] sm:$0xff]
    %v382 = vld [vmem:[#allocation7 + $0x98] sm:$0xff]
    %v383 = vld [vmem:[#allocation7 + $0xa0] sm:$0xff]
    %v384 = vld [vmem:[#allocation7 + $0xa8] sm:$0xff]
    %v385 = vld [vmem:[#allocation7 + $0xb0] sm:$0xff]
    %v386 = vld [vmem:[#allocation7 + $0xb8] sm:$0xff]
    %v387 = vld [vmem:[#allocation7 + $0xc0] sm:$0xff]
    %v388 = vld [vmem:[#allocation7 + $0xc8] sm:$0xff]
    %v389 = vld [vmem:[#allocation7 + $0xd0] sm:$0xff]
    %v390 = vld [vmem:[#allocation7 + $0xd8] sm:$0xff]
    %v391 = vld [vmem:[#allocation7 + $0xe0] sm:$0xff]
    %v392 = vld [vmem:[#allocation7 + $0xe8] sm:$0xff]
    %v393 = vld [vmem:[#allocation7 + $0xf0] sm:$0xff]
    %v394 = vld [vmem:[#allocation7 + $0xf8] sm:$0xff]
    %v395 = vld [vmem:[#allocation7 + $0x100] sm:$0xff]
    %v396 = vld [vmem:[#allocation7 + $0x108] sm:$0xff]
    %v397 = vld [vmem:[#allocation7 + $0x110] sm:$0xff]
    %v398 = vld [vmem:[#allocation7 + $0x118] sm:$0xff]
    %v399 = vld [vmem:[#allocation7 + $0x120] sm:$0xff]
    %v400 = vld [vmem:[#allocation7 + $0x128] sm:$0xff]
    %v401 = vld [vmem:[#allocation7 + $0x130] sm:$0xff]
    %v402 = vld [vmem:[#allocation7 + $0x138] sm:$0xff]
    %v403 = vld [vmem:[#allocation7 + $0x140] sm:$0xff]
    %v404 = vld [vmem:[#allocation7 + $0x148] sm:$0xff]
    %v405 = vld [vmem:[#allocation7 + $0x150] sm:$0xff]
    %v406 = vld [vmem:[#allocation7 + $0x158] sm:$0xff]
    %v407 = vld [vmem:[#allocation7 + $0x160] sm:$0xff]
    %v408 = vld [vmem:[#allocation7 + $0x168] sm:$0xff]
    %v409 = vld [vmem:[#allocation7 + $0x170] sm:$0xff]
    %v410 = vld [vmem:[#allocation7 + $0x178] sm:$0xff]
    %v411 = vld [vmem:[#allocation7 + $0x180] sm:$0xff]
    %v412 = vld [vmem:[#allocation7 + $0x188] sm:$0xff]
    %v413 = vld [vmem:[#allocation7 + $0x190] sm:$0xff]
    %v414 = vld [vmem:[#allocation7 + $0x198] sm:$0xff]
    %v415 = vld [vmem:[#allocation7 + $0x1a0] sm:$0xff]
    %v416 = vld [vmem:[#allocation7 + $0x1a8] sm:$0xff]
    %v417 = vld [vmem:[#allocation7 + $0x1b0] sm:$0xff]
    %v418 = vld [vmem:[#allocation7 + $0x1b8] sm:$0xff]
    %v419 = vld [vmem:[#allocation7 + $0x1c0] sm:$0xff]
    %v420 = vld [vmem:[#allocation7 + $0x1c8] sm:$0xff]
    %v421 = vld [vmem:[#allocation7 + $0x1d0] sm:$0xff]
    %v422 = vld [vmem:[#allocation7 + $0x1d8] sm:$0xff]
    %v423 = vld [vmem:[#allocation7 + $0x1e0] sm:$0xff]
    %v424 = vld [vmem:[#allocation7 + $0x1e8] sm:$0xff]
    %v425 = vld [vmem:[#allocation7 + $0x1f0] sm:$0xff]
    %v426 = vld [vmem:[#allocation7 + $0x1f8] sm:$0xff]
    %427 = vmatpush.msra.mxu0 %v423
    %428 = vmatpush.msra.mxu0 %v419
    %429 = vmatpush.msra.mxu0 %v415
    %430 = vmatpush.msra.mxu0 %v411
    %431 = vmatpush.msra.mxu0 %v407
    %432 = vmatpush.msra.mxu0 %v403
    %433 = vmatpush.msra.mxu0 %v399
    %434 = vmatpush.msra.mxu0 %v395
    %435 = vmatpush.msra.mxu0 %v391
    %436 = vmatpush.msra.mxu0 %v387
    %437 = vmatpush.msra.mxu0 %v383
    %438 = vmatpush.msra.mxu0 %v379
    %439 = vmatpush.msra.mxu0 %v375
    %440 = vmatpush.msra.mxu0 %v371
    %441 = vmatpush.msra.mxu0 %v367
    %442 = vmatpush.msra.mxu0 %v363
    %443 = vmatmul.f32.gmra.mxu0 %v352
    %v444 = vpop.f32.mrf.mxu0
    %v445 = vadd.f32 0.0, %v444
    %446 = vdwg.mxu0
    %447 = vmatpush.msra.mxu0 %v424
    %448 = vmatpush.msra.mxu0 %v420
    %449 = vmatpush.msra.mxu0 %v416
    %450 = vmatpush.msra.mxu0 %v412
    %451 = vmatpush.msra.mxu0 %v408
    %452 = vmatpush.msra.mxu0 %v404
    %453 = vmatpush.msra.mxu0 %v400
    %454 = vmatpush.msra.mxu0 %v396
    %455 = vmatpush.msra.mxu0 %v392
    %456 = vmatpush.msra.mxu0 %v388
    %457 = vmatpush.msra.mxu0 %v384
    %458 = vmatpush.msra.mxu0 %v380
    %459 = vmatpush.msra.mxu0 %v376
    %460 = vmatpush.msra.mxu0 %v372
    %461 = vmatpush.msra.mxu0 %v368
    %462 = vmatpush.msra.mxu0 %v364
    %463 = vmatmul.f32.gmra.mxu0 %v352
    %v464 = vpop.f32.mrf.mxu0
    %v465 = vadd.f32 0.0, %v464
    %466 = vdwg.mxu0
    %467 = vmatpush.msra.mxu0 %v425
    %468 = vmatpush.msra.mxu0 %v421
    %469 = vmatpush.msra.mxu0 %v417
    %470 = vmatpush.msra.mxu0 %v413
    %471 = vmatpush.msra.mxu0 %v409
    %472 = vmatpush.msra.mxu0 %v405
    %473 = vmatpush.msra.mxu0 %v401
    %474 = vmatpush.msra.mxu0 %v397
    %475 = vmatpush.msra.mxu0 %v393
    %476 = vmatpush.msra.mxu0 %v389
    %477 = vmatpush.msra.mxu0 %v385
    %478 = vmatpush.msra.mxu0 %v381
    %479 = vmatpush.msra.mxu0 %v377
    %480 = vmatpush.msra.mxu0 %v373
    %481 = vmatpush.msra.mxu0 %v369
    %482 = vmatpush.msra.mxu0 %v365
    %483 = vmatmul.f32.gmra.mxu0 %v352
    %v484 = vpop.f32.mrf.mxu0
    %v485 = vadd.f32 0.0, %v484
    %486 = vdwg.mxu0
    %487 = vmatpush.msra.mxu0 %v426
    %488 = vmatpush.msra.mxu0 %v422
    %489 = vmatpush.msra.mxu0 %v418
    %490 = vmatpush.msra.mxu0 %v414
    %491 = vmatpush.msra.mxu0 %v410
    %492 = vmatpush.msra.mxu0 %v406
    %493 = vmatpush.msra.mxu0 %v402
    %494 = vmatpush.msra.mxu0 %v398
    %495 = vmatpush.msra.mxu0 %v394
    %496 = vmatpush.msra.mxu0 %v390
    %497 = vmatpush.msra.mxu0 %v386
    %498 = vmatpush.msra.mxu0 %v382
    %499 = vmatpush.msra.mxu0 %v378
    %500 = vmatpush.msra.mxu0 %v374
    %501 = vmatpush.msra.mxu0 %v370
    %502 = vmatpush.msra.mxu0 %v366
    %503 = vmatmul.f32.gmra.mxu0 %v352
    %v504 = vpop.f32.mrf.mxu0
    %v505 = vadd.f32 0.0, %v504
    %506 = vdwg.mxu0
    %v507 = vadd.f32 %v359, %v445
    %v508 = vadd.f32 %v360, %v465
    %v509 = vadd.f32 %v361, %v485
    %v510 = vadd.f32 %v362, %v505
    %v511 = vld [vmem:[#allocation12] sm:$0xff]
    %v512 = vld [vmem:[#allocation12 + $0x8] sm:$0xff]
    %v513 = vld [vmem:[#allocation12 + $0x10] sm:$0xff]
    %v514 = vld [vmem:[#allocation12 + $0x18] sm:$0xff]
    %v515 = vld [vmem:[#allocation12 + $0x20] sm:$0xff]
    %v516 = vld [vmem:[#allocation12 + $0x28] sm:$0xff]
    %v517 = vld [vmem:[#allocation12 + $0x30] sm:$0xff]
    %v518 = vld [vmem:[#allocation12 + $0x38] sm:$0xff]
    %v519 = vld [vmem:[#allocation12 + $0x40] sm:$0xff]
    %v520 = vld [vmem:[#allocation12 + $0x48] sm:$0xff]
    %v521 = vld [vmem:[#allocation12 + $0x50] sm:$0xff]
    %v522 = vld [vmem:[#allocation12 + $0x58] sm:$0xff]
    %v523 = vld [vmem:[#allocation12 + $0x60] sm:$0xff]
    %v524 = vld [vmem:[#allocation12 + $0x68] sm:$0xff]
    %v525 = vld [vmem:[#allocation12 + $0x70] sm:$0xff]
    %v526 = vld [vmem:[#allocation12 + $0x78] sm:$0xff]
    %v527 = vld [vmem:[#allocation12 + $0x80] sm:$0xff]
    %v528 = vld [vmem:[#allocation12 + $0x88] sm:$0xff]
    %v529 = vld [vmem:[#allocation12 + $0x90] sm:$0xff]
    %v530 = vld [vmem:[#allocation12 + $0x98] sm:$0xff]
    %v531 = vld [vmem:[#allocation12 + $0xa0] sm:$0xff]
    %v532 = vld [vmem:[#allocation12 + $0xa8] sm:$0xff]
    %v533 = vld [vmem:[#allocation12 + $0xb0] sm:$0xff]
    %v534 = vld [vmem:[#allocation12 + $0xb8] sm:$0xff]
    %v535 = vld [vmem:[#allocation12 + $0xc0] sm:$0xff]
    %v536 = vld [vmem:[#allocation12 + $0xc8] sm:$0xff]
    %v537 = vld [vmem:[#allocation12 + $0xd0] sm:$0xff]
    %v538 = vld [vmem:[#allocation12 + $0xd8] sm:$0xff]
    %v539 = vld [vmem:[#allocation12 + $0xe0] sm:$0xff]
    %v540 = vld [vmem:[#allocation12 + $0xe8] sm:$0xff]
    %v541 = vld [vmem:[#allocation12 + $0xf0] sm:$0xff]
    %v542 = vld [vmem:[#allocation12 + $0xf8] sm:$0xff]
    %v543 = vld [vmem:[#allocation12 + $0x100] sm:$0xff]
    %v544 = vld [vmem:[#allocation12 + $0x108] sm:$0xff]
    %v545 = vld [vmem:[#allocation12 + $0x110] sm:$0xff]
    %v546 = vld [vmem:[#allocation12 + $0x118] sm:$0xff]
    %v547 = vld [vmem:[#allocation12 + $0x120] sm:$0xff]
    %v548 = vld [vmem:[#allocation12 + $0x128] sm:$0xff]
    %v549 = vld [vmem:[#allocation12 + $0x130] sm:$0xff]
    %v550 = vld [vmem:[#allocation12 + $0x138] sm:$0xff]
    %v551 = vld [vmem:[#allocation12 + $0x140] sm:$0xff]
    %v552 = vld [vmem:[#allocation12 + $0x148] sm:$0xff]
    %v553 = vld [vmem:[#allocation12 + $0x150] sm:$0xff]
    %v554 = vld [vmem:[#allocation12 + $0x158] sm:$0xff]
    %v555 = vld [vmem:[#allocation12 + $0x160] sm:$0xff]
    %v556 = vld [vmem:[#allocation12 + $0x168] sm:$0xff]
    %v557 = vld [vmem:[#allocation12 + $0x170] sm:$0xff]
    %v558 = vld [vmem:[#allocation12 + $0x178] sm:$0xff]
    %v559 = vld [vmem:[#allocation12 + $0x180] sm:$0xff]
    %v560 = vld [vmem:[#allocation12 + $0x188] sm:$0xff]
    %v561 = vld [vmem:[#allocation12 + $0x190] sm:$0xff]
    %v562 = vld [vmem:[#allocation12 + $0x198] sm:$0xff]
    %v563 = vld [vmem:[#allocation12 + $0x1a0] sm:$0xff]
    %v564 = vld [vmem:[#allocation12 + $0x1a8] sm:$0xff]
    %v565 = vld [vmem:[#allocation12 + $0x1b0] sm:$0xff]
    %v566 = vld [vmem:[#allocation12 + $0x1b8] sm:$0xff]
    %v567 = vld [vmem:[#allocation12 + $0x1c0] sm:$0xff]
    %v568 = vld [vmem:[#allocation12 + $0x1c8] sm:$0xff]
    %v569 = vld [vmem:[#allocation12 + $0x1d0] sm:$0xff]
    %v570 = vld [vmem:[#allocation12 + $0x1d8] sm:$0xff]
    %v571 = vld [vmem:[#allocation12 + $0x1e0] sm:$0xff]
    %v572 = vld [vmem:[#allocation12 + $0x1e8] sm:$0xff]
    %v573 = vld [vmem:[#allocation12 + $0x1f0] sm:$0xff]
    %v574 = vld [vmem:[#allocation12 + $0x1f8] sm:$0xff]
    %v576 = vperm.slane %v351, 0
    %v577 = vperm.slane %v351, 1
    %v578 = vperm.slane %v351, 2
    %v579 = vperm.slane %v351, 3
    %584 = vmatpush.msra.mxu0 %v571
    %585 = vmatpush.msra.mxu0 %v567
    %586 = vmatpush.msra.mxu0 %v563
    %587 = vmatpush.msra.mxu0 %v559
    %588 = vmatpush.msra.mxu0 %v555
    %589 = vmatpush.msra.mxu0 %v551
    %590 = vmatpush.msra.mxu0 %v547
    %591 = vmatpush.msra.mxu0 %v543
    %592 = vmatpush.msra.mxu0 %v539
    %593 = vmatpush.msra.mxu0 %v535
    %594 = vmatpush.msra.mxu0 %v531
    %595 = vmatpush.msra.mxu0 %v527
    %596 = vmatpush.msra.mxu0 %v523
    %597 = vmatpush.msra.mxu0 %v519
    %598 = vmatpush.msra.mxu0 %v515
    %599 = vmatpush.msra.mxu0 %v511
    %600 = vmatmul.f32.gmra.mxu0 %v354
    %v601 = vpop.f32.mrf.mxu0
    %v602 = vadd.f32 %v576, %v601
    %603 = vdwg.mxu0
    %604 = vmatpush.msra.mxu0 %v572
    %605 = vmatpush.msra.mxu0 %v568
    %606 = vmatpush.msra.mxu0 %v564
    %607 = vmatpush.msra.mxu0 %v560
    %608 = vmatpush.msra.mxu0 %v556
    %609 = vmatpush.msra.mxu0 %v552
    %610 = vmatpush.msra.mxu0 %v548
    %611 = vmatpush.msra.mxu0 %v544
    %612 = vmatpush.msra.mxu0 %v540
    %613 = vmatpush.msra.mxu0 %v536
    %614 = vmatpush.msra.mxu0 %v532
    %615 = vmatpush.msra.mxu0 %v528
    %616 = vmatpush.msra.mxu0 %v524
    %617 = vmatpush.msra.mxu0 %v520
    %618 = vmatpush.msra.mxu0 %v516
    %619 = vmatpush.msra.mxu0 %v512
    %620 = vmatmul.f32.gmra.mxu0 %v354
    %v621 = vpop.f32.mrf.mxu0
    %v622 = vadd.f32 %v577, %v621
    %623 = vdwg.mxu0
    %624 = vmatpush.msra.mxu0 %v573
    %625 = vmatpush.msra.mxu0 %v569
    %626 = vmatpush.msra.mxu0 %v565
    %627 = vmatpush.msra.mxu0 %v561
    %628 = vmatpush.msra.mxu0 %v557
    %629 = vmatpush.msra.mxu0 %v553
    %630 = vmatpush.msra.mxu0 %v549
    %631 = vmatpush.msra.mxu0 %v545
    %632 = vmatpush.msra.mxu0 %v541
    %633 = vmatpush.msra.mxu0 %v537
    %634 = vmatpush.msra.mxu0 %v533
    %635 = vmatpush.msra.mxu0 %v529
    %636 = vmatpush.msra.mxu0 %v525
    %637 = vmatpush.msra.mxu0 %v521
    %638 = vmatpush.msra.mxu0 %v517
    %639 = vmatpush.msra.mxu0 %v513
    %640 = vmatmul.f32.gmra.mxu0 %v354
    %v641 = vpop.f32.mrf.mxu0
    %v642 = vadd.f32 %v578, %v641
    %643 = vdwg.mxu0
    %644 = vmatpush.msra.mxu0 %v574
    %645 = vmatpush.msra.mxu0 %v570
    %646 = vmatpush.msra.mxu0 %v566
    %647 = vmatpush.msra.mxu0 %v562
    %648 = vmatpush.msra.mxu0 %v558
    %649 = vmatpush.msra.mxu0 %v554
    %650 = vmatpush.msra.mxu0 %v550
    %651 = vmatpush.msra.mxu0 %v546
    %652 = vmatpush.msra.mxu0 %v542
    %653 = vmatpush.msra.mxu0 %v538
    %654 = vmatpush.msra.mxu0 %v534
    %655 = vmatpush.msra.mxu0 %v530
    %656 = vmatpush.msra.mxu0 %v526
    %657 = vmatpush.msra.mxu0 %v522
    %658 = vmatpush.msra.mxu0 %v518
    %659 = vmatpush.msra.mxu0 %v514
    %660 = vmatmul.f32.gmra.mxu0 %v354
    %v661 = vpop.f32.mrf.mxu0
    %v662 = vadd.f32 %v579, %v661
    %663 = vdwg.mxu0
    %v664 = vxor.u32 %v507, 2147483648
    %v665 = vmul.f32 %v664, 1.442695
    %v666 = vpow.pop %v665
    %v667 = vadd.f32 %v666, 1.0
    %v668 = vrcp.pop %v667
    %v669 = vmul.f32 %v667, %v668
    %v670 = vsub.f32 1.0, %v669
    %v671 = vmul.f32 %v668, %v670
    %v672 = vadd.f32 %v668, %v671
    %vm673 = vweird.f32 %v667
    %vm674 = vweird.f32 %v668
    %vm675 = vmor %vm673, %vm674
    %v676 = vsel %vm675, %v668, %v672
    %v677 = vand.u32 2147483647, %v667
    %vm678 = vcmp.eq.f32.partialorder %v677, 8.507059e+37
    %v679 = vand.u32 %v667, 2147483648
    %v680 = vor.u32 1.1754944e-38, %v679
    %v681 = vsel %vm678, %v680, %v676
    %v682 = vmul.f32 1.0, %v681
    %v683 = vxor.u32 %v508, 2147483648
    %v684 = vmul.f32 %v683, 1.442695
    %v685 = vpow.pop %v684
    %v686 = vadd.f32 %v685, 1.0
    %v687 = vrcp.pop %v686
    %v688 = vmul.f32 %v686, %v687
    %v689 = vsub.f32 1.0, %v688
    %v690 = vmul.f32 %v687, %v689
    %v691 = vadd.f32 %v687, %v690
    %vm692 = vweird.f32 %v686
    %vm693 = vweird.f32 %v687
    %vm694 = vmor %vm692, %vm693
    %v695 = vsel %vm694, %v687, %v691
    %v696 = vand.u32 2147483647, %v686
    %vm697 = vcmp.eq.f32.partialorder %v696, 8.507059e+37
    %v698 = vand.u32 %v686, 2147483648
    %v699 = vor.u32 1.1754944e-38, %v698
    %v700 = vsel %vm697, %v699, %v695
    %v701 = vmul.f32 1.0, %v700
    %v702 = vtanh.pop %v509
    %v703 = vxor.u32 %v510, 2147483648
    %v704 = vmul.f32 %v703, 1.442695
    %v705 = vpow.pop %v704
    %v706 = vadd.f32 %v705, 1.0
    %v707 = vrcp.pop %v706
    %v708 = vmul.f32 %v706, %v707
    %v709 = vsub.f32 1.0, %v708
    %v710 = vmul.f32 %v707, %v709
    %v711 = vadd.f32 %v707, %v710
    %vm712 = vweird.f32 %v706
    %vm713 = vweird.f32 %v707
    %vm714 = vmor %vm712, %vm713
    %v715 = vsel %vm714, %v707, %v711
    %v716 = vand.u32 2147483647, %v706
    %vm717 = vcmp.eq.f32.partialorder %v716, 8.507059e+37
    %v718 = vand.u32 %v706, 2147483648
    %v719 = vor.u32 1.1754944e-38, %v718
    %v720 = vsel %vm717, %v719, %v715
    %v721 = vmul.f32 1.0, %v720
    %v722 = vmul.f32 %v701, %v353
    %v723 = vmul.f32 %v682, %v702
    %v724 = vadd.f32 %v722, %v723
    %v725 = vtanh.pop %v724
    %v726 = vmul.f32 %v721, %v725
    %v727 = vld [vmem:[#allocation10] sm:$0xff]
    %v728 = vld [vmem:[#allocation10 + $0x8] sm:$0xff]
    %v729 = vld [vmem:[#allocation10 + $0x10] sm:$0xff]
    %v730 = vld [vmem:[#allocation10 + $0x18] sm:$0xff]
    %v731 = vld [vmem:[#allocation10 + $0x20] sm:$0xff]
    %v732 = vld [vmem:[#allocation10 + $0x28] sm:$0xff]
    %v733 = vld [vmem:[#allocation10 + $0x30] sm:$0xff]
    %v734 = vld [vmem:[#allocation10 + $0x38] sm:$0xff]
    %v735 = vld [vmem:[#allocation10 + $0x40] sm:$0xff]
    %v736 = vld [vmem:[#allocation10 + $0x48] sm:$0xff]
    %v737 = vld [vmem:[#allocation10 + $0x50] sm:$0xff]
    %v738 = vld [vmem:[#allocation10 + $0x58] sm:$0xff]
    %v739 = vld [vmem:[#allocation10 + $0x60] sm:$0xff]
    %v740 = vld [vmem:[#allocation10 + $0x68] sm:$0xff]
    %v741 = vld [vmem:[#allocation10 + $0x70] sm:$0xff]
    %v742 = vld [vmem:[#allocation10 + $0x78] sm:$0xff]
    %v743 = vld [vmem:[#allocation10 + $0x80] sm:$0xff]
    %v744 = vld [vmem:[#allocation10 + $0x88] sm:$0xff]
    %v745 = vld [vmem:[#allocation10 + $0x90] sm:$0xff]
    %v746 = vld [vmem:[#allocation10 + $0x98] sm:$0xff]
    %v747 = vld [vmem:[#allocation10 + $0xa0] sm:$0xff]
    %v748 = vld [vmem:[#allocation10 + $0xa8] sm:$0xff]
    %v749 = vld [vmem:[#allocation10 + $0xb0] sm:$0xff]
    %v750 = vld [vmem:[#allocation10 + $0xb8] sm:$0xff]
    %v751 = vld [vmem:[#allocation10 + $0xc0] sm:$0xff]
    %v752 = vld [vmem:[#allocation10 + $0xc8] sm:$0xff]
    %v753 = vld [vmem:[#allocation10 + $0xd0] sm:$0xff]
    %v754 = vld [vmem:[#allocation10 + $0xd8] sm:$0xff]
    %v755 = vld [vmem:[#allocation10 + $0xe0] sm:$0xff]
    %v756 = vld [vmem:[#allocation10 + $0xe8] sm:$0xff]
    %v757 = vld [vmem:[#allocation10 + $0xf0] sm:$0xff]
    %v758 = vld [vmem:[#allocation10 + $0xf8] sm:$0xff]
    %v759 = vld [vmem:[#allocation10 + $0x100] sm:$0xff]
    %v760 = vld [vmem:[#allocation10 + $0x108] sm:$0xff]
    %v761 = vld [vmem:[#allocation10 + $0x110] sm:$0xff]
    %v762 = vld [vmem:[#allocation10 + $0x118] sm:$0xff]
    %v763 = vld [vmem:[#allocation10 + $0x120] sm:$0xff]
    %v764 = vld [vmem:[#allocation10 + $0x128] sm:$0xff]
    %v765 = vld [vmem:[#allocation10 + $0x130] sm:$0xff]
    %v766 = vld [vmem:[#allocation10 + $0x138] sm:$0xff]
    %v767 = vld [vmem:[#allocation10 + $0x140] sm:$0xff]
    %v768 = vld [vmem:[#allocation10 + $0x148] sm:$0xff]
    %v769 = vld [vmem:[#allocation10 + $0x150] sm:$0xff]
    %v770 = vld [vmem:[#allocation10 + $0x158] sm:$0xff]
    %v771 = vld [vmem:[#allocation10 + $0x160] sm:$0xff]
    %v772 = vld [vmem:[#allocation10 + $0x168] sm:$0xff]
    %v773 = vld [vmem:[#allocation10 + $0x170] sm:$0xff]
    %v774 = vld [vmem:[#allocation10 + $0x178] sm:$0xff]
    %v775 = vld [vmem:[#allocation10 + $0x180] sm:$0xff]
    %v776 = vld [vmem:[#allocation10 + $0x188] sm:$0xff]
    %v777 = vld [vmem:[#allocation10 + $0x190] sm:$0xff]
    %v778 = vld [vmem:[#allocation10 + $0x198] sm:$0xff]
    %v779 = vld [vmem:[#allocation10 + $0x1a0] sm:$0xff]
    %v780 = vld [vmem:[#allocation10 + $0x1a8] sm:$0xff]
    %v781 = vld [vmem:[#allocation10 + $0x1b0] sm:$0xff]
    %v782 = vld [vmem:[#allocation10 + $0x1b8] sm:$0xff]
    %v783 = vld [vmem:[#allocation10 + $0x1c0] sm:$0xff]
    %v784 = vld [vmem:[#allocation10 + $0x1c8] sm:$0xff]
    %v785 = vld [vmem:[#allocation10 + $0x1d0] sm:$0xff]
    %v786 = vld [vmem:[#allocation10 + $0x1d8] sm:$0xff]
    %v787 = vld [vmem:[#allocation10 + $0x1e0] sm:$0xff]
    %v788 = vld [vmem:[#allocation10 + $0x1e8] sm:$0xff]
    %v789 = vld [vmem:[#allocation10 + $0x1f0] sm:$0xff]
    %v790 = vld [vmem:[#allocation10 + $0x1f8] sm:$0xff]
    %791 = vmatpush.msra.mxu0 %v787
    %792 = vmatpush.msra.mxu0 %v783
    %793 = vmatpush.msra.mxu0 %v779
    %794 = vmatpush.msra.mxu0 %v775
    %795 = vmatpush.msra.mxu0 %v771
    %796 = vmatpush.msra.mxu0 %v767
    %797 = vmatpush.msra.mxu0 %v763
    %798 = vmatpush.msra.mxu0 %v759
    %799 = vmatpush.msra.mxu0 %v755
    %800 = vmatpush.msra.mxu0 %v751
    %801 = vmatpush.msra.mxu0 %v747
    %802 = vmatpush.msra.mxu0 %v743
    %803 = vmatpush.msra.mxu0 %v739
    %804 = vmatpush.msra.mxu0 %v735
    %805 = vmatpush.msra.mxu0 %v731
    %806 = vmatpush.msra.mxu0 %v727
    %807 = vmatmul.f32.gmra.mxu0 %v726
    %v808 = vpop.f32.mrf.mxu0
    %v809 = vadd.f32 0.0, %v808
    %810 = vdwg.mxu0
    %811 = vmatpush.msra.mxu0 %v788
    %812 = vmatpush.msra.mxu0 %v784
    %813 = vmatpush.msra.mxu0 %v780
    %814 = vmatpush.msra.mxu0 %v776
    %815 = vmatpush.msra.mxu0 %v772
    %816 = vmatpush.msra.mxu0 %v768
    %817 = vmatpush.msra.mxu0 %v764
    %818 = vmatpush.msra.mxu0 %v760
    %819 = vmatpush.msra.mxu0 %v756
    %820 = vmatpush.msra.mxu0 %v752
    %821 = vmatpush.msra.mxu0 %v748
    %822 = vmatpush.msra.mxu0 %v744
    %823 = vmatpush.msra.mxu0 %v740
    %824 = vmatpush.msra.mxu0 %v736
    %825 = vmatpush.msra.mxu0 %v732
    %826 = vmatpush.msra.mxu0 %v728
    %827 = vmatmul.f32.gmra.mxu0 %v726
    %v828 = vpop.f32.mrf.mxu0
    %v829 = vadd.f32 0.0, %v828
    %830 = vdwg.mxu0
    %831 = vmatpush.msra.mxu0 %v789
    %832 = vmatpush.msra.mxu0 %v785
    %833 = vmatpush.msra.mxu0 %v781
    %834 = vmatpush.msra.mxu0 %v777
    %835 = vmatpush.msra.mxu0 %v773
    %836 = vmatpush.msra.mxu0 %v769
    %837 = vmatpush.msra.mxu0 %v765
    %838 = vmatpush.msra.mxu0 %v761
    %839 = vmatpush.msra.mxu0 %v757
    %840 = vmatpush.msra.mxu0 %v753
    %841 = vmatpush.msra.mxu0 %v749
    %842 = vmatpush.msra.mxu0 %v745
    %843 = vmatpush.msra.mxu0 %v741
    %844 = vmatpush.msra.mxu0 %v737
    %845 = vmatpush.msra.mxu0 %v733
    %846 = vmatpush.msra.mxu0 %v729
    %847 = vmatmul.f32.gmra.mxu0 %v726
    %v848 = vpop.f32.mrf.mxu0
    %v849 = vadd.f32 0.0, %v848
    %850 = vdwg.mxu0
    %851 = vmatpush.msra.mxu0 %v790
    %852 = vmatpush.msra.mxu0 %v786
    %853 = vmatpush.msra.mxu0 %v782
    %854 = vmatpush.msra.mxu0 %v778
    %855 = vmatpush.msra.mxu0 %v774
    %856 = vmatpush.msra.mxu0 %v770
    %857 = vmatpush.msra.mxu0 %v766
    %858 = vmatpush.msra.mxu0 %v762
    %859 = vmatpush.msra.mxu0 %v758
    %860 = vmatpush.msra.mxu0 %v754
    %861 = vmatpush.msra.mxu0 %v750
    %862 = vmatpush.msra.mxu0 %v746
    %863 = vmatpush.msra.mxu0 %v742
    %864 = vmatpush.msra.mxu0 %v738
    %865 = vmatpush.msra.mxu0 %v734
    %866 = vmatpush.msra.mxu0 %v730
    %867 = vmatmul.f32.gmra.mxu0 %v726
    %v868 = vpop.f32.mrf.mxu0
    %v869 = vadd.f32 0.0, %v868
    %870 = vdwg.mxu0
    %v871 = vadd.f32 %v602, %v809
    %v872 = vadd.f32 %v622, %v829
    %v873 = vadd.f32 %v642, %v849
    %v874 = vadd.f32 %v662, %v869
    %v875 = vxor.u32 %v871, 2147483648
    %v876 = vmul.f32 %v875, 1.442695
    %v877 = vpow.pop %v876
    %v878 = vadd.f32 %v877, 1.0
    %v879 = vrcp.pop %v878
    %v880 = vmul.f32 %v878, %v879
    %v881 = vsub.f32 1.0, %v880
    %v882 = vmul.f32 %v879, %v881
    %v883 = vadd.f32 %v879, %v882
    %vm884 = vweird.f32 %v878
    %vm885 = vweird.f32 %v879
    %vm886 = vmor %vm884, %vm885
    %v887 = vsel %vm886, %v879, %v883
    %v888 = vand.u32 2147483647, %v878
    %vm889 = vcmp.eq.f32.partialorder %v888, 8.507059e+37
    %v890 = vand.u32 %v878, 2147483648
    %v891 = vor.u32 1.1754944e-38, %v890
    %v892 = vsel %vm889, %v891, %v887
    %v893 = vmul.f32 1.0, %v892
    %v894 = vxor.u32 %v872, 2147483648
    %v895 = vmul.f32 %v894, 1.442695
    %v896 = vpow.pop %v895
    %v897 = vadd.f32 %v896, 1.0
    %v898 = vrcp.pop %v897
    %v899 = vmul.f32 %v897, %v898
    %v900 = vsub.f32 1.0, %v899
    %v901 = vmul.f32 %v898, %v900
    %v902 = vadd.f32 %v898, %v901
    %vm903 = vweird.f32 %v897
    %vm904 = vweird.f32 %v898
    %vm905 = vmor %vm903, %vm904
    %v906 = vsel %vm905, %v898, %v902
    %v907 = vand.u32 2147483647, %v897
    %vm908 = vcmp.eq.f32.partialorder %v907, 8.507059e+37
    %v909 = vand.u32 %v897, 2147483648
    %v910 = vor.u32 1.1754944e-38, %v909
    %v911 = vsel %vm908, %v910, %v906
    %v912 = vmul.f32 1.0, %v911
    %v913 = vtanh.pop %v873
    %v914 = vxor.u32 %v874, 2147483648
    %v915 = vmul.f32 %v914, 1.442695
    %v916 = vpow.pop %v915
    %v917 = vadd.f32 %v916, 1.0
    %v918 = vrcp.pop %v917
    %v919 = vmul.f32 %v917, %v918
    %v920 = vsub.f32 1.0, %v919
    %v921 = vmul.f32 %v918, %v920
    %v922 = vadd.f32 %v918, %v921
    %vm923 = vweird.f32 %v917
    %vm924 = vweird.f32 %v918
    %vm925 = vmor %vm923, %vm924
    %v926 = vsel %vm925, %v918, %v922
    %v927 = vand.u32 2147483647, %v917
    %vm928 = vcmp.eq.f32.partialorder %v927, 8.507059e+37
    %v929 = vand.u32 %v917, 2147483648
    %v930 = vor.u32 1.1754944e-38, %v929
    %v931 = vsel %vm928, %v930, %v926
    %v932 = vmul.f32 1.0, %v931
    %v933 = vmul.f32 %v912, %v355
    %v934 = vmul.f32 %v893, %v913
    %v935 = vadd.f32 %v933, %v934
    %v936 = vtanh.pop %v935
    %v937 = vmul.f32 %v932, %v936
    %s938 = smul.u32 1, 4
    %s939 = smul.addr %s938, 8
    %s940 = scalar_lea.vmem [#allocation6], %s939
    %v941 = vld [vmem:[%s940] sm:$0xff]
    %v942 = vld [vmem:[%s940 + $0x8] sm:$0xff]
    %v943 = vld [vmem:[%s940 + $0x10] sm:$0xff]
    %v944 = vld [vmem:[%s940 + $0x18] sm:$0xff]
    %945 = vmatpush.msra.mxu0 %v423
    %946 = vmatpush.msra.mxu0 %v419
    %947 = vmatpush.msra.mxu0 %v415
    %948 = vmatpush.msra.mxu0 %v411
    %949 = vmatpush.msra.mxu0 %v407
    %950 = vmatpush.msra.mxu0 %v403
    %951 = vmatpush.msra.mxu0 %v399
    %952 = vmatpush.msra.mxu0 %v395
    %953 = vmatpush.msra.mxu0 %v391
    %954 = vmatpush.msra.mxu0 %v387
    %955 = vmatpush.msra.mxu0 %v383
    %956 = vmatpush.msra.mxu0 %v379
    %957 = vmatpush.msra.mxu0 %v375
    %958 = vmatpush.msra.mxu0 %v371
    %959 = vmatpush.msra.mxu0 %v367
    %960 = vmatpush.msra.mxu0 %v363
    %961 = vmatmul.f32.gmra.mxu0 %v726
    %v962 = vpop.f32.mrf.mxu0
    %v963 = vadd.f32 0.0, %v962
    %964 = vdwg.mxu0
    %965 = vmatpush.msra.mxu0 %v424
    %966 = vmatpush.msra.mxu0 %v420
    %967 = vmatpush.msra.mxu0 %v416
    %968 = vmatpush.msra.mxu0 %v412
    %969 = vmatpush.msra.mxu0 %v408
    %970 = vmatpush.msra.mxu0 %v404
    %971 = vmatpush.msra.mxu0 %v400
    %972 = vmatpush.msra.mxu0 %v396
    %973 = vmatpush.msra.mxu0 %v392
    %974 = vmatpush.msra.mxu0 %v388
    %975 = vmatpush.msra.mxu0 %v384
    %976 = vmatpush.msra.mxu0 %v380
    %977 = vmatpush.msra.mxu0 %v376
    %978 = vmatpush.msra.mxu0 %v372
    %979 = vmatpush.msra.mxu0 %v368
    %980 = vmatpush.msra.mxu0 %v364
    %981 = vmatmul.f32.gmra.mxu0 %v726
    %v982 = vpop.f32.mrf.mxu0
    %v983 = vadd.f32 0.0, %v982
    %984 = vdwg.mxu0
    %985 = vmatpush.msra.mxu0 %v425
    %986 = vmatpush.msra.mxu0 %v421
    %987 = vmatpush.msra.mxu0 %v417
    %988 = vmatpush.msra.mxu0 %v413
    %989 = vmatpush.msra.mxu0 %v409
    %990 = vmatpush.msra.mxu0 %v405
    %991 = vmatpush.msra.mxu0 %v401
    %992 = vmatpush.msra.mxu0 %v397
    %993 = vmatpush.msra.mxu0 %v393
    %994 = vmatpush.msra.mxu0 %v389
    %995 = vmatpush.msra.mxu0 %v385
    %996 = vmatpush.msra.mxu0 %v381
    %997 = vmatpush.msra.mxu0 %v377
    %998 = vmatpush.msra.mxu0 %v373
    %999 = vmatpush.msra.mxu0 %v369
    %1000 = vmatpush.msra.mxu0 %v365
    %1001 = vmatmul.f32.gmra.mxu0 %v726
    %v1002 = vpop.f32.mrf.mxu0
    %v1003 = vadd.f32 0.0, %v1002
    %1004 = vdwg.mxu0
    %1005 = vmatpush.msra.mxu0 %v426
    %1006 = vmatpush.msra.mxu0 %v422
    %1007 = vmatpush.msra.mxu0 %v418
    %1008 = vmatpush.msra.mxu0 %v414
    %1009 = vmatpush.msra.mxu0 %v410
    %1010 = vmatpush.msra.mxu0 %v406
    %1011 = vmatpush.msra.mxu0 %v402
    %1012 = vmatpush.msra.mxu0 %v398
    %1013 = vmatpush.msra.mxu0 %v394
    %1014 = vmatpush.msra.mxu0 %v390
    %1015 = vmatpush.msra.mxu0 %v386
    %1016 = vmatpush.msra.mxu0 %v382
    %1017 = vmatpush.msra.mxu0 %v378
    %1018 = vmatpush.msra.mxu0 %v374
    %1019 = vmatpush.msra.mxu0 %v370
    %1020 = vmatpush.msra.mxu0 %v366
    %1021 = vmatmul.f32.gmra.mxu0 %v726
    %v1022 = vpop.f32.mrf.mxu0
    %v1023 = vadd.f32 0.0, %v1022
    %1024 = vdwg.mxu0
    %v1025 = vadd.f32 %v941, %v963
    %v1026 = vadd.f32 %v942, %v983
    %v1027 = vadd.f32 %v943, %v1003
    %v1028 = vadd.f32 %v944, %v1023
    %1029 = vmatpush.msra.mxu0 %v571
    %1030 = vmatpush.msra.mxu0 %v567
    %1031 = vmatpush.msra.mxu0 %v563
    %1032 = vmatpush.msra.mxu0 %v559
    %1033 = vmatpush.msra.mxu0 %v555
    %1034 = vmatpush.msra.mxu0 %v551
    %1035 = vmatpush.msra.mxu0 %v547
    %1036 = vmatpush.msra.mxu0 %v543
    %1037 = vmatpush.msra.mxu0 %v539
    %1038 = vmatpush.msra.mxu0 %v535
    %1039 = vmatpush.msra.mxu0 %v531
    %1040 = vmatpush.msra.mxu0 %v527
    %1041 = vmatpush.msra.mxu0 %v523
    %1042 = vmatpush.msra.mxu0 %v519
    %1043 = vmatpush.msra.mxu0 %v515
    %1044 = vmatpush.msra.mxu0 %v511
    %1045 = vmatmul.f32.gmra.mxu0 %v937
    %v1046 = vpop.f32.mrf.mxu0
    %v1047 = vadd.f32 %v576, %v1046
    %1048 = vdwg.mxu0
    %1049 = vmatpush.msra.mxu0 %v572
    %1050 = vmatpush.msra.mxu0 %v568
    %1051 = vmatpush.msra.mxu0 %v564
    %1052 = vmatpush.msra.mxu0 %v560
    %1053 = vmatpush.msra.mxu0 %v556
    %1054 = vmatpush.msra.mxu0 %v552
    %1055 = vmatpush.msra.mxu0 %v548
    %1056 = vmatpush.msra.mxu0 %v544
    %1057 = vmatpush.msra.mxu0 %v540
    %1058 = vmatpush.msra.mxu0 %v536
    %1059 = vmatpush.msra.mxu0 %v532
    %1060 = vmatpush.msra.mxu0 %v528
    %1061 = vmatpush.msra.mxu0 %v524
    %1062 = vmatpush.msra.mxu0 %v520
    %1063 = vmatpush.msra.mxu0 %v516
    %1064 = vmatpush.msra.mxu0 %v512
    %1065 = vmatmul.f32.gmra.mxu0 %v937
    %v1066 = vpop.f32.mrf.mxu0
    %v1067 = vadd.f32 %v577, %v1066
    %1068 = vdwg.mxu0
    %1069 = vmatpush.msra.mxu0 %v573
    %1070 = vmatpush.msra.mxu0 %v569
    %1071 = vmatpush.msra.mxu0 %v565
    %1072 = vmatpush.msra.mxu0 %v561
    %1073 = vmatpush.msra.mxu0 %v557
    %1074 = vmatpush.msra.mxu0 %v553
    %1075 = vmatpush.msra.mxu0 %v549
    %1076 = vmatpush.msra.mxu0 %v545
    %1077 = vmatpush.msra.mxu0 %v541
    %1078 = vmatpush.msra.mxu0 %v537
    %1079 = vmatpush.msra.mxu0 %v533
    %1080 = vmatpush.msra.mxu0 %v529
    %1081 = vmatpush.msra.mxu0 %v525
    %1082 = vmatpush.msra.mxu0 %v521
    %1083 = vmatpush.msra.mxu0 %v517
    %1084 = vmatpush.msra.mxu0 %v513
    %1085 = vmatmul.f32.gmra.mxu0 %v937
    %v1086 = vpop.f32.mrf.mxu0
    %v1087 = vadd.f32 %v578, %v1086
    %1088 = vdwg.mxu0
    %1089 = vmatpush.msra.mxu0 %v574
    %1090 = vmatpush.msra.mxu0 %v570
    %1091 = vmatpush.msra.mxu0 %v566
    %1092 = vmatpush.msra.mxu0 %v562
    %1093 = vmatpush.msra.mxu0 %v558
    %1094 = vmatpush.msra.mxu0 %v554
    %1095 = vmatpush.msra.mxu0 %v550
    %1096 = vmatpush.msra.mxu0 %v546
    %1097 = vmatpush.msra.mxu0 %v542
    %1098 = vmatpush.msra.mxu0 %v538
    %1099 = vmatpush.msra.mxu0 %v534
    %1100 = vmatpush.msra.mxu0 %v530
    %1101 = vmatpush.msra.mxu0 %v526
    %1102 = vmatpush.msra.mxu0 %v522
    %1103 = vmatpush.msra.mxu0 %v518
    %1104 = vmatpush.msra.mxu0 %v514
    %1105 = vmatmul.f32.gmra.mxu0 %v937
    %v1106 = vpop.f32.mrf.mxu0
    %v1107 = vadd.f32 %v579, %v1106
    %1108 = vdwg.mxu0
    %v1109 = vxor.u32 %v1025, 2147483648
    %v1110 = vmul.f32 %v1109, 1.442695
    %v1111 = vpow.pop %v1110
    %v1112 = vadd.f32 %v1111, 1.0
    %v1113 = vrcp.pop %v1112
    %v1114 = vmul.f32 %v1112, %v1113
    %v1115 = vsub.f32 1.0, %v1114
    %v1116 = vmul.f32 %v1113, %v1115
    %v1117 = vadd.f32 %v1113, %v1116
    %vm1118 = vweird.f32 %v1112
    %vm1119 = vweird.f32 %v1113
    %vm1120 = vmor %vm1118, %vm1119
    %v1121 = vsel %vm1120, %v1113, %v1117
    %v1122 = vand.u32 2147483647, %v1112
    %vm1123 = vcmp.eq.f32.partialorder %v1122, 8.507059e+37
    %v1124 = vand.u32 %v1112, 2147483648
    %v1125 = vor.u32 1.1754944e-38, %v1124
    %v1126 = vsel %vm1123, %v1125, %v1121
    %v1127 = vmul.f32 1.0, %v1126
    %v1128 = vxor.u32 %v1026, 2147483648
    %v1129 = vmul.f32 %v1128, 1.442695
    %v1130 = vpow.pop %v1129
    %v1131 = vadd.f32 %v1130, 1.0
    %v1132 = vrcp.pop %v1131
    %v1133 = vmul.f32 %v1131, %v1132
    %v1134 = vsub.f32 1.0, %v1133
    %v1135 = vmul.f32 %v1132, %v1134
    %v1136 = vadd.f32 %v1132, %v1135
    %vm1137 = vweird.f32 %v1131
    %vm1138 = vweird.f32 %v1132
    %vm1139 = vmor %vm1137, %vm1138
    %v1140 = vsel %vm1139, %v1132, %v1136
    %v1141 = vand.u32 2147483647, %v1131
    %vm1142 = vcmp.eq.f32.partialorder %v1141, 8.507059e+37
    %v1143 = vand.u32 %v1131, 2147483648
    %v1144 = vor.u32 1.1754944e-38, %v1143
    %v1145 = vsel %vm1142, %v1144, %v1140
    %v1146 = vmul.f32 1.0, %v1145
    %v1147 = vtanh.pop %v1027
    %v1148 = vxor.u32 %v1028, 2147483648
    %v1149 = vmul.f32 %v1148, 1.442695
    %v1150 = vpow.pop %v1149
    %v1151 = vadd.f32 %v1150, 1.0
    %v1152 = vrcp.pop %v1151
    %v1153 = vmul.f32 %v1151, %v1152
    %v1154 = vsub.f32 1.0, %v1153
    %v1155 = vmul.f32 %v1152, %v1154
    %v1156 = vadd.f32 %v1152, %v1155
    %vm1157 = vweird.f32 %v1151
    %vm1158 = vweird.f32 %v1152
    %vm1159 = vmor %vm1157, %vm1158
    %v1160 = vsel %vm1159, %v1152, %v1156
    %v1161 = vand.u32 2147483647, %v1151
    %vm1162 = vcmp.eq.f32.partialorder %v1161, 8.507059e+37
    %v1163 = vand.u32 %v1151, 2147483648
    %v1164 = vor.u32 1.1754944e-38, %v1163
    %v1165 = vsel %vm1162, %v1164, %v1160
    %v1166 = vmul.f32 1.0, %v1165
    %v1167 = vmul.f32 %v1146, %v724
    %v1168 = vmul.f32 %v1127, %v1147
    %v1169 = vadd.f32 %v1167, %v1168
    %v1170 = vtanh.pop %v1169
    %v1171 = vmul.f32 %v1166, %v1170
    %1172 = vmatpush.msra.mxu0 %v787
    %1173 = vmatpush.msra.mxu0 %v783
    %1174 = vmatpush.msra.mxu0 %v779
    %1175 = vmatpush.msra.mxu0 %v775
    %1176 = vmatpush.msra.mxu0 %v771
    %1177 = vmatpush.msra.mxu0 %v767
    %1178 = vmatpush.msra.mxu0 %v763
    %1179 = vmatpush.msra.mxu0 %v759
    %1180 = vmatpush.msra.mxu0 %v755
    %1181 = vmatpush.msra.mxu0 %v751
    %1182 = vmatpush.msra.mxu0 %v747
    %1183 = vmatpush.msra.mxu0 %v743
    %1184 = vmatpush.msra.mxu0 %v739
    %1185 = vmatpush.msra.mxu0 %v735
    %1186 = vmatpush.msra.mxu0 %v731
    %1187 = vmatpush.msra.mxu0 %v727
    %1188 = vmatmul.f32.gmra.mxu0 %v1171
    %v1189 = vpop.f32.mrf.mxu0
    %v1190 = vadd.f32 0.0, %v1189
    %1191 = vdwg.mxu0
    %1192 = vmatpush.msra.mxu0 %v788
    %1193 = vmatpush.msra.mxu0 %v784
    %1194 = vmatpush.msra.mxu0 %v780
    %1195 = vmatpush.msra.mxu0 %v776
    %1196 = vmatpush.msra.mxu0 %v772
    %1197 = vmatpush.msra.mxu0 %v768
    %1198 = vmatpush.msra.mxu0 %v764
    %1199 = vmatpush.msra.mxu0 %v760
    %1200 = vmatpush.msra.mxu0 %v756
    %1201 = vmatpush.msra.mxu0 %v752
    %1202 = vmatpush.msra.mxu0 %v748
    %1203 = vmatpush.msra.mxu0 %v744
    %1204 = vmatpush.msra.mxu0 %v740
    %1205 = vmatpush.msra.mxu0 %v736
    %1206 = vmatpush.msra.mxu0 %v732
    %1207 = vmatpush.msra.mxu0 %v728
    %1208 = vmatmul.f32.gmra.mxu0 %v1171
    %v1209 = vpop.f32.mrf.mxu0
    %v1210 = vadd.f32 0.0, %v1209
    %1211 = vdwg.mxu0
    %1212 = vmatpush.msra.mxu0 %v789
    %1213 = vmatpush.msra.mxu0 %v785
    %1214 = vmatpush.msra.mxu0 %v781
    %1215 = vmatpush.msra.mxu0 %v777
    %1216 = vmatpush.msra.mxu0 %v773
    %1217 = vmatpush.msra.mxu0 %v769
    %1218 = vmatpush.msra.mxu0 %v765
    %1219 = vmatpush.msra.mxu0 %v761
    %1220 = vmatpush.msra.mxu0 %v757
    %1221 = vmatpush.msra.mxu0 %v753
    %1222 = vmatpush.msra.mxu0 %v749
    %1223 = vmatpush.msra.mxu0 %v745
    %1224 = vmatpush.msra.mxu0 %v741
    %1225 = vmatpush.msra.mxu0 %v737
    %1226 = vmatpush.msra.mxu0 %v733
    %1227 = vmatpush.msra.mxu0 %v729
    %1228 = vmatmul.f32.gmra.mxu0 %v1171
    %v1229 = vpop.f32.mrf.mxu0
    %v1230 = vadd.f32 0.0, %v1229
    %1231 = vdwg.mxu0
    %1232 = vmatpush.msra.mxu0 %v790
    %1233 = vmatpush.msra.mxu0 %v786
    %1234 = vmatpush.msra.mxu0 %v782
    %1235 = vmatpush.msra.mxu0 %v778
    %1236 = vmatpush.msra.mxu0 %v774
    %1237 = vmatpush.msra.mxu0 %v770
    %1238 = vmatpush.msra.mxu0 %v766
    %1239 = vmatpush.msra.mxu0 %v762
    %1240 = vmatpush.msra.mxu0 %v758
    %1241 = vmatpush.msra.mxu0 %v754
    %1242 = vmatpush.msra.mxu0 %v750
    %1243 = vmatpush.msra.mxu0 %v746
    %1244 = vmatpush.msra.mxu0 %v742
    %1245 = vmatpush.msra.mxu0 %v738
    %1246 = vmatpush.msra.mxu0 %v734
    %1247 = vmatpush.msra.mxu0 %v730
    %1248 = vmatmul.f32.gmra.mxu0 %v1171
    %v1249 = vpop.f32.mrf.mxu0
    %v1250 = vadd.f32 0.0, %v1249
    %1251 = vdwg.mxu0
    %v1252 = vadd.f32 %v1047, %v1190
    %v1253 = vadd.f32 %v1067, %v1210
    %v1254 = vadd.f32 %v1087, %v1230
    %v1255 = vadd.f32 %v1107, %v1250
    %v1256 = vxor.u32 %v1252, 2147483648
    %v1257 = vmul.f32 %v1256, 1.442695
    %v1258 = vpow.pop %v1257
    %v1259 = vadd.f32 %v1258, 1.0
    %v1260 = vrcp.pop %v1259
    %v1261 = vmul.f32 %v1259, %v1260
    %v1262 = vsub.f32 1.0, %v1261
    %v1263 = vmul.f32 %v1260, %v1262
    %v1264 = vadd.f32 %v1260, %v1263
    %vm1265 = vweird.f32 %v1259
    %vm1266 = vweird.f32 %v1260
    %vm1267 = vmor %vm1265, %vm1266
    %v1268 = vsel %vm1267, %v1260, %v1264
    %v1269 = vand.u32 2147483647, %v1259
    %vm1270 = vcmp.eq.f32.partialorder %v1269, 8.507059e+37
    %v1271 = vand.u32 %v1259, 2147483648
    %v1272 = vor.u32 1.1754944e-38, %v1271
    %v1273 = vsel %vm1270, %v1272, %v1268
    %v1274 = vmul.f32 1.0, %v1273
    %v1275 = vxor.u32 %v1253, 2147483648
    %v1276 = vmul.f32 %v1275, 1.442695
    %v1277 = vpow.pop %v1276
    %v1278 = vadd.f32 %v1277, 1.0
    %v1279 = vrcp.pop %v1278
    %v1280 = vmul.f32 %v1278, %v1279
    %v1281 = vsub.f32 1.0, %v1280
    %v1282 = vmul.f32 %v1279, %v1281
    %v1283 = vadd.f32 %v1279, %v1282
    %vm1284 = vweird.f32 %v1278
    %vm1285 = vweird.f32 %v1279
    %vm1286 = vmor %vm1284, %vm1285
    %v1287 = vsel %vm1286, %v1279, %v1283
    %v1288 = vand.u32 2147483647, %v1278
    %vm1289 = vcmp.eq.f32.partialorder %v1288, 8.507059e+37
    %v1290 = vand.u32 %v1278, 2147483648
    %v1291 = vor.u32 1.1754944e-38, %v1290
    %v1292 = vsel %vm1289, %v1291, %v1287
    %v1293 = vmul.f32 1.0, %v1292
    %v1294 = vtanh.pop %v1254
    %v1295 = vxor.u32 %v1255, 2147483648
    %v1296 = vmul.f32 %v1295, 1.442695
    %v1297 = vpow.pop %v1296
    %v1298 = vadd.f32 %v1297, 1.0
    %v1299 = vrcp.pop %v1298
    %v1300 = vmul.f32 %v1298, %v1299
    %v1301 = vsub.f32 1.0, %v1300
    %v1302 = vmul.f32 %v1299, %v1301
    %v1303 = vadd.f32 %v1299, %v1302
    %vm1304 = vweird.f32 %v1298
    %vm1305 = vweird.f32 %v1299
    %vm1306 = vmor %vm1304, %vm1305
    %v1307 = vsel %vm1306, %v1299, %v1303
    %v1308 = vand.u32 2147483647, %v1298
    %vm1309 = vcmp.eq.f32.partialorder %v1308, 8.507059e+37
    %v1310 = vand.u32 %v1298, 2147483648
    %v1311 = vor.u32 1.1754944e-38, %v1310
    %v1312 = vsel %vm1309, %v1311, %v1307
    %v1313 = vmul.f32 1.0, %v1312
    %v1314 = vmul.f32 %v1293, %v935
    %v1315 = vmul.f32 %v1274, %v1294
    %v1316 = vadd.f32 %v1314, %v1315
    %v1317 = vtanh.pop %v1316
    %v1318 = vmul.f32 %v1313, %v1317
    %s1319 = smul.u32 2, 4
    %s1320 = smul.addr %s1319, 8
    %s1321 = scalar_lea.vmem [#allocation6], %s1320
    %v1322 = vld [vmem:[%s1321] sm:$0xff]
    %v1323 = vld [vmem:[%s1321 + $0x8] sm:$0xff]
    %v1324 = vld [vmem:[%s1321 + $0x10] sm:$0xff]
    %v1325 = vld [vmem:[%s1321 + $0x18] sm:$0xff]
    %1326 = vmatpush.msra.mxu0 %v423
    %1327 = vmatpush.msra.mxu0 %v419
    %1328 = vmatpush.msra.mxu0 %v415
    %1329 = vmatpush.msra.mxu0 %v411
    %1330 = vmatpush.msra.mxu0 %v407
    %1331 = vmatpush.msra.mxu0 %v403
    %1332 = vmatpush.msra.mxu0 %v399
    %1333 = vmatpush.msra.mxu0 %v395
    %1334 = vmatpush.msra.mxu0 %v391
    %1335 = vmatpush.msra.mxu0 %v387
    %1336 = vmatpush.msra.mxu0 %v383
    %1337 = vmatpush.msra.mxu0 %v379
    %1338 = vmatpush.msra.mxu0 %v375
    %1339 = vmatpush.msra.mxu0 %v371
    %1340 = vmatpush.msra.mxu0 %v367
    %1341 = vmatpush.msra.mxu0 %v363
    %1342 = vmatmul.f32.gmra.mxu0 %v1171
    %v1343 = vpop.f32.mrf.mxu0
    %v1344 = vadd.f32 0.0, %v1343
    %1345 = vdwg.mxu0
    %1346 = vmatpush.msra.mxu0 %v424
    %1347 = vmatpush.msra.mxu0 %v420
    %1348 = vmatpush.msra.mxu0 %v416
    %1349 = vmatpush.msra.mxu0 %v412
    %1350 = vmatpush.msra.mxu0 %v408
    %1351 = vmatpush.msra.mxu0 %v404
    %1352 = vmatpush.msra.mxu0 %v400
    %1353 = vmatpush.msra.mxu0 %v396
    %1354 = vmatpush.msra.mxu0 %v392
    %1355 = vmatpush.msra.mxu0 %v388
    %1356 = vmatpush.msra.mxu0 %v384
    %1357 = vmatpush.msra.mxu0 %v380
    %1358 = vmatpush.msra.mxu0 %v376
    %1359 = vmatpush.msra.mxu0 %v372
    %1360 = vmatpush.msra.mxu0 %v368
    %1361 = vmatpush.msra.mxu0 %v364
    %1362 = vmatmul.f32.gmra.mxu0 %v1171
    %v1363 = vpop.f32.mrf.mxu0
    %v1364 = vadd.f32 0.0, %v1363
    %1365 = vdwg.mxu0
    %1366 = vmatpush.msra.mxu0 %v425
    %1367 = vmatpush.msra.mxu0 %v421
    %1368 = vmatpush.msra.mxu0 %v417
    %1369 = vmatpush.msra.mxu0 %v413
    %1370 = vmatpush.msra.mxu0 %v409
    %1371 = vmatpush.msra.mxu0 %v405
    %1372 = vmatpush.msra.mxu0 %v401
    %1373 = vmatpush.msra.mxu0 %v397
    %1374 = vmatpush.msra.mxu0 %v393
    %1375 = vmatpush.msra.mxu0 %v389
    %1376 = vmatpush.msra.mxu0 %v385
    %1377 = vmatpush.msra.mxu0 %v381
    %1378 = vmatpush.msra.mxu0 %v377
    %1379 = vmatpush.msra.mxu0 %v373
    %1380 = vmatpush.msra.mxu0 %v369
    %1381 = vmatpush.msra.mxu0 %v365
    %1382 = vmatmul.f32.gmra.mxu0 %v1171
    %v1383 = vpop.f32.mrf.mxu0
    %v1384 = vadd.f32 0.0, %v1383
    %1385 = vdwg.mxu0
    %1386 = vmatpush.msra.mxu0 %v426
    %1387 = vmatpush.msra.mxu0 %v422
    %1388 = vmatpush.msra.mxu0 %v418
    %1389 = vmatpush.msra.mxu0 %v414
    %1390 = vmatpush.msra.mxu0 %v410
    %1391 = vmatpush.msra.mxu0 %v406
    %1392 = vmatpush.msra.mxu0 %v402
    %1393 = vmatpush.msra.mxu0 %v398
    %1394 = vmatpush.msra.mxu0 %v394
    %1395 = vmatpush.msra.mxu0 %v390
    %1396 = vmatpush.msra.mxu0 %v386
    %1397 = vmatpush.msra.mxu0 %v382
    %1398 = vmatpush.msra.mxu0 %v378
    %1399 = vmatpush.msra.mxu0 %v374
    %1400 = vmatpush.msra.mxu0 %v370
    %1401 = vmatpush.msra.mxu0 %v366
    %1402 = vmatmul.f32.gmra.mxu0 %v1171
    %v1403 = vpop.f32.mrf.mxu0
    %v1404 = vadd.f32 0.0, %v1403
    %1405 = vdwg.mxu0
    %v1406 = vadd.f32 %v1322, %v1344
    %v1407 = vadd.f32 %v1323, %v1364
    %v1408 = vadd.f32 %v1324, %v1384
    %v1409 = vadd.f32 %v1325, %v1404
    %1410 = vmatpush.msra.mxu0 %v571
    %1411 = vmatpush.msra.mxu0 %v567
    %1412 = vmatpush.msra.mxu0 %v563
    %1413 = vmatpush.msra.mxu0 %v559
    %1414 = vmatpush.msra.mxu0 %v555
    %1415 = vmatpush.msra.mxu0 %v551
    %1416 = vmatpush.msra.mxu0 %v547
    %1417 = vmatpush.msra.mxu0 %v543
    %1418 = vmatpush.msra.mxu0 %v539
    %1419 = vmatpush.msra.mxu0 %v535
    %1420 = vmatpush.msra.mxu0 %v531
    %1421 = vmatpush.msra.mxu0 %v527
    %1422 = vmatpush.msra.mxu0 %v523
    %1423 = vmatpush.msra.mxu0 %v519
    %1424 = vmatpush.msra.mxu0 %v515
    %1425 = vmatpush.msra.mxu0 %v511
    %1426 = vmatmul.f32.gmra.mxu0 %v1318
    %v1427 = vpop.f32.mrf.mxu0
    %v1428 = vadd.f32 %v576, %v1427
    %1429 = vdwg.mxu0
    %1430 = vmatpush.msra.mxu0 %v572
    %1431 = vmatpush.msra.mxu0 %v568
    %1432 = vmatpush.msra.mxu0 %v564
    %1433 = vmatpush.msra.mxu0 %v560
    %1434 = vmatpush.msra.mxu0 %v556
    %1435 = vmatpush.msra.mxu0 %v552
    %1436 = vmatpush.msra.mxu0 %v548
    %1437 = vmatpush.msra.mxu0 %v544
    %1438 = vmatpush.msra.mxu0 %v540
    %1439 = vmatpush.msra.mxu0 %v536
    %1440 = vmatpush.msra.mxu0 %v532
    %1441 = vmatpush.msra.mxu0 %v528
    %1442 = vmatpush.msra.mxu0 %v524
    %1443 = vmatpush.msra.mxu0 %v520
    %1444 = vmatpush.msra.mxu0 %v516
    %1445 = vmatpush.msra.mxu0 %v512
    %1446 = vmatmul.f32.gmra.mxu0 %v1318
    %v1447 = vpop.f32.mrf.mxu0
    %v1448 = vadd.f32 %v577, %v1447
    %1449 = vdwg.mxu0
    %1450 = vmatpush.msra.mxu0 %v573
    %1451 = vmatpush.msra.mxu0 %v569
    %1452 = vmatpush.msra.mxu0 %v565
    %1453 = vmatpush.msra.mxu0 %v561
    %1454 = vmatpush.msra.mxu0 %v557
    %1455 = vmatpush.msra.mxu0 %v553
    %1456 = vmatpush.msra.mxu0 %v549
    %1457 = vmatpush.msra.mxu0 %v545
    %1458 = vmatpush.msra.mxu0 %v541
    %1459 = vmatpush.msra.mxu0 %v537
    %1460 = vmatpush.msra.mxu0 %v533
    %1461 = vmatpush.msra.mxu0 %v529
    %1462 = vmatpush.msra.mxu0 %v525
    %1463 = vmatpush.msra.mxu0 %v521
    %1464 = vmatpush.msra.mxu0 %v517
    %1465 = vmatpush.msra.mxu0 %v513
    %1466 = vmatmul.f32.gmra.mxu0 %v1318
    %v1467 = vpop.f32.mrf.mxu0
    %v1468 = vadd.f32 %v578, %v1467
    %1469 = vdwg.mxu0
    %1470 = vmatpush.msra.mxu0 %v574
    %1471 = vmatpush.msra.mxu0 %v570
    %1472 = vmatpush.msra.mxu0 %v566
    %1473 = vmatpush.msra.mxu0 %v562
    %1474 = vmatpush.msra.mxu0 %v558
    %1475 = vmatpush.msra.mxu0 %v554
    %1476 = vmatpush.msra.mxu0 %v550
    %1477 = vmatpush.msra.mxu0 %v546
    %1478 = vmatpush.msra.mxu0 %v542
    %1479 = vmatpush.msra.mxu0 %v538
    %1480 = vmatpush.msra.mxu0 %v534
    %1481 = vmatpush.msra.mxu0 %v530
    %1482 = vmatpush.msra.mxu0 %v526
    %1483 = vmatpush.msra.mxu0 %v522
    %1484 = vmatpush.msra.mxu0 %v518
    %1485 = vmatpush.msra.mxu0 %v514
    %1486 = vmatmul.f32.gmra.mxu0 %v1318
    %v1487 = vpop.f32.mrf.mxu0
    %v1488 = vadd.f32 %v579, %v1487
    %1489 = vdwg.mxu0
    %v1490 = vxor.u32 %v1406, 2147483648
    %v1491 = vmul.f32 %v1490, 1.442695
    %v1492 = vpow.pop %v1491
    %v1493 = vadd.f32 %v1492, 1.0
    %v1494 = vrcp.pop %v1493
    %v1495 = vmul.f32 %v1493, %v1494
    %v1496 = vsub.f32 1.0, %v1495
    %v1497 = vmul.f32 %v1494, %v1496
    %v1498 = vadd.f32 %v1494, %v1497
    %vm1499 = vweird.f32 %v1493
    %vm1500 = vweird.f32 %v1494
    %vm1501 = vmor %vm1499, %vm1500
    %v1502 = vsel %vm1501, %v1494, %v1498
    %v1503 = vand.u32 2147483647, %v1493
    %vm1504 = vcmp.eq.f32.partialorder %v1503, 8.507059e+37
    %v1505 = vand.u32 %v1493, 2147483648
    %v1506 = vor.u32 1.1754944e-38, %v1505
    %v1507 = vsel %vm1504, %v1506, %v1502
    %v1508 = vmul.f32 1.0, %v1507
    %v1509 = vxor.u32 %v1407, 2147483648
    %v1510 = vmul.f32 %v1509, 1.442695
    %v1511 = vpow.pop %v1510
    %v1512 = vadd.f32 %v1511, 1.0
    %v1513 = vrcp.pop %v1512
    %v1514 = vmul.f32 %v1512, %v1513
    %v1515 = vsub.f32 1.0, %v1514
    %v1516 = vmul.f32 %v1513, %v1515
    %v1517 = vadd.f32 %v1513, %v1516
    %vm1518 = vweird.f32 %v1512
    %vm1519 = vweird.f32 %v1513
    %vm1520 = vmor %vm1518, %vm1519
    %v1521 = vsel %vm1520, %v1513, %v1517
    %v1522 = vand.u32 2147483647, %v1512
    %vm1523 = vcmp.eq.f32.partialorder %v1522, 8.507059e+37
    %v1524 = vand.u32 %v1512, 2147483648
    %v1525 = vor.u32 1.1754944e-38, %v1524
    %v1526 = vsel %vm1523, %v1525, %v1521
    %v1527 = vmul.f32 1.0, %v1526
    %v1528 = vtanh.pop %v1408
    %v1529 = vxor.u32 %v1409, 2147483648
    %v1530 = vmul.f32 %v1529, 1.442695
    %v1531 = vpow.pop %v1530
    %v1532 = vadd.f32 %v1531, 1.0
    %v1533 = vrcp.pop %v1532
    %v1534 = vmul.f32 %v1532, %v1533
    %v1535 = vsub.f32 1.0, %v1534
    %v1536 = vmul.f32 %v1533, %v1535
    %v1537 = vadd.f32 %v1533, %v1536
    %vm1538 = vweird.f32 %v1532
    %vm1539 = vweird.f32 %v1533
    %vm1540 = vmor %vm1538, %vm1539
    %v1541 = vsel %vm1540, %v1533, %v1537
    %v1542 = vand.u32 2147483647, %v1532
    %vm1543 = vcmp.eq.f32.partialorder %v1542, 8.507059e+37
    %v1544 = vand.u32 %v1532, 2147483648
    %v1545 = vor.u32 1.1754944e-38, %v1544
    %v1546 = vsel %vm1543, %v1545, %v1541
    %v1547 = vmul.f32 1.0, %v1546
    %v1548 = vmul.f32 %v1527, %v1169
    %v1549 = vmul.f32 %v1508, %v1528
    %v1550 = vadd.f32 %v1548, %v1549
    %v1551 = vtanh.pop %v1550
    %v1552 = vmul.f32 %v1547, %v1551
    %1553 = vmatpush.msra.mxu0 %v787
    %1554 = vmatpush.msra.mxu0 %v783
    %1555 = vmatpush.msra.mxu0 %v779
    %1556 = vmatpush.msra.mxu0 %v775
    %1557 = vmatpush.msra.mxu0 %v771
    %1558 = vmatpush.msra.mxu0 %v767
    %1559 = vmatpush.msra.mxu0 %v763
    %1560 = vmatpush.msra.mxu0 %v759
    %1561 = vmatpush.msra.mxu0 %v755
    %1562 = vmatpush.msra.mxu0 %v751
    %1563 = vmatpush.msra.mxu0 %v747
    %1564 = vmatpush.msra.mxu0 %v743
    %1565 = vmatpush.msra.mxu0 %v739
    %1566 = vmatpush.msra.mxu0 %v735
    %1567 = vmatpush.msra.mxu0 %v731
    %1568 = vmatpush.msra.mxu0 %v727
    %1569 = vmatmul.f32.gmra.mxu0 %v1552
    %v1570 = vpop.f32.mrf.mxu0
    %v1571 = vadd.f32 0.0, %v1570
    %1572 = vdwg.mxu0
    %1573 = vmatpush.msra.mxu0 %v788
    %1574 = vmatpush.msra.mxu0 %v784
    %1575 = vmatpush.msra.mxu0 %v780
    %1576 = vmatpush.msra.mxu0 %v776
    %1577 = vmatpush.msra.mxu0 %v772
    %1578 = vmatpush.msra.mxu0 %v768
    %1579 = vmatpush.msra.mxu0 %v764
    %1580 = vmatpush.msra.mxu0 %v760
    %1581 = vmatpush.msra.mxu0 %v756
    %1582 = vmatpush.msra.mxu0 %v752
    %1583 = vmatpush.msra.mxu0 %v748
    %1584 = vmatpush.msra.mxu0 %v744
    %1585 = vmatpush.msra.mxu0 %v740
    %1586 = vmatpush.msra.mxu0 %v736
    %1587 = vmatpush.msra.mxu0 %v732
    %1588 = vmatpush.msra.mxu0 %v728
    %1589 = vmatmul.f32.gmra.mxu0 %v1552
    %v1590 = vpop.f32.mrf.mxu0
    %v1591 = vadd.f32 0.0, %v1590
    %1592 = vdwg.mxu0
    %1593 = vmatpush.msra.mxu0 %v789
    %1594 = vmatpush.msra.mxu0 %v785
    %1595 = vmatpush.msra.mxu0 %v781
    %1596 = vmatpush.msra.mxu0 %v777
    %1597 = vmatpush.msra.mxu0 %v773
    %1598 = vmatpush.msra.mxu0 %v769
    %1599 = vmatpush.msra.mxu0 %v765
    %1600 = vmatpush.msra.mxu0 %v761
    %1601 = vmatpush.msra.mxu0 %v757
    %1602 = vmatpush.msra.mxu0 %v753
    %1603 = vmatpush.msra.mxu0 %v749
    %1604 = vmatpush.msra.mxu0 %v745
    %1605 = vmatpush.msra.mxu0 %v741
    %1606 = vmatpush.msra.mxu0 %v737
    %1607 = vmatpush.msra.mxu0 %v733
    %1608 = vmatpush.msra.mxu0 %v729
    %1609 = vmatmul.f32.gmra.mxu0 %v1552
    %v1610 = vpop.f32.mrf.mxu0
    %v1611 = vadd.f32 0.0, %v1610
    %1612 = vdwg.mxu0
    %1613 = vmatpush.msra.mxu0 %v790
    %1614 = vmatpush.msra.mxu0 %v786
    %1615 = vmatpush.msra.mxu0 %v782
    %1616 = vmatpush.msra.mxu0 %v778
    %1617 = vmatpush.msra.mxu0 %v774
    %1618 = vmatpush.msra.mxu0 %v770
    %1619 = vmatpush.msra.mxu0 %v766
    %1620 = vmatpush.msra.mxu0 %v762
    %1621 = vmatpush.msra.mxu0 %v758
    %1622 = vmatpush.msra.mxu0 %v754
    %1623 = vmatpush.msra.mxu0 %v750
    %1624 = vmatpush.msra.mxu0 %v746
    %1625 = vmatpush.msra.mxu0 %v742
    %1626 = vmatpush.msra.mxu0 %v738
    %1627 = vmatpush.msra.mxu0 %v734
    %1628 = vmatpush.msra.mxu0 %v730
    %1629 = vmatmul.f32.gmra.mxu0 %v1552
    %v1630 = vpop.f32.mrf.mxu0
    %v1631 = vadd.f32 0.0, %v1630
    %1632 = vdwg.mxu0
    %v1633 = vadd.f32 %v1428, %v1571
    %v1634 = vadd.f32 %v1448, %v1591
    %v1635 = vadd.f32 %v1468, %v1611
    %v1636 = vadd.f32 %v1488, %v1631
    %v1637 = vxor.u32 %v1633, 2147483648
    %v1638 = vmul.f32 %v1637, 1.442695
    %v1639 = vpow.pop %v1638
    %v1640 = vadd.f32 %v1639, 1.0
    %v1641 = vrcp.pop %v1640
    %v1642 = vmul.f32 %v1640, %v1641
    %v1643 = vsub.f32 1.0, %v1642
    %v1644 = vmul.f32 %v1641, %v1643
    %v1645 = vadd.f32 %v1641, %v1644
    %vm1646 = vweird.f32 %v1640
    %vm1647 = vweird.f32 %v1641
    %vm1648 = vmor %vm1646, %vm1647
    %v1649 = vsel %vm1648, %v1641, %v1645
    %v1650 = vand.u32 2147483647, %v1640
    %vm1651 = vcmp.eq.f32.partialorder %v1650, 8.507059e+37
    %v1652 = vand.u32 %v1640, 2147483648
    %v1653 = vor.u32 1.1754944e-38, %v1652
    %v1654 = vsel %vm1651, %v1653, %v1649
    %v1655 = vmul.f32 1.0, %v1654
    %v1656 = vxor.u32 %v1634, 2147483648
    %v1657 = vmul.f32 %v1656, 1.442695
    %v1658 = vpow.pop %v1657
    %v1659 = vadd.f32 %v1658, 1.0
    %v1660 = vrcp.pop %v1659
    %v1661 = vmul.f32 %v1659, %v1660
    %v1662 = vsub.f32 1.0, %v1661
    %v1663 = vmul.f32 %v1660, %v1662
    %v1664 = vadd.f32 %v1660, %v1663
    %vm1665 = vweird.f32 %v1659
    %vm1666 = vweird.f32 %v1660
    %vm1667 = vmor %vm1665, %vm1666
    %v1668 = vsel %vm1667, %v1660, %v1664
    %v1669 = vand.u32 2147483647, %v1659
    %vm1670 = vcmp.eq.f32.partialorder %v1669, 8.507059e+37
    %v1671 = vand.u32 %v1659, 2147483648
    %v1672 = vor.u32 1.1754944e-38, %v1671
    %v1673 = vsel %vm1670, %v1672, %v1668
    %v1674 = vmul.f32 1.0, %v1673
    %v1675 = vtanh.pop %v1635
    %v1676 = vxor.u32 %v1636, 2147483648
    %v1677 = vmul.f32 %v1676, 1.442695
    %v1678 = vpow.pop %v1677
    %v1679 = vadd.f32 %v1678, 1.0
    %v1680 = vrcp.pop %v1679
    %v1681 = vmul.f32 %v1679, %v1680
    %v1682 = vsub.f32 1.0, %v1681
    %v1683 = vmul.f32 %v1680, %v1682
    %v1684 = vadd.f32 %v1680, %v1683
    %vm1685 = vweird.f32 %v1679
    %vm1686 = vweird.f32 %v1680
    %vm1687 = vmor %vm1685, %vm1686
    %v1688 = vsel %vm1687, %v1680, %v1684
    %v1689 = vand.u32 2147483647, %v1679
    %vm1690 = vcmp.eq.f32.partialorder %v1689, 8.507059e+37
    %v1691 = vand.u32 %v1679, 2147483648
    %v1692 = vor.u32 1.1754944e-38, %v1691
    %v1693 = vsel %vm1690, %v1692, %v1688
    %v1694 = vmul.f32 1.0, %v1693
    %v1695 = vmul.f32 %v1674, %v1316
    %v1696 = vmul.f32 %v1655, %v1675
    %v1697 = vadd.f32 %v1695, %v1696
    %v1698 = vtanh.pop %v1697
    %v1699 = vmul.f32 %v1694, %v1698
    %s1700 = smul.u32 3, 4
    %s1701 = smul.addr %s1700, 8
    %s1702 = scalar_lea.vmem [#allocation6], %s1701
    %v1703 = vld [vmem:[%s1702] sm:$0xff]
    %v1704 = vld [vmem:[%s1702 + $0x8] sm:$0xff]
    %v1705 = vld [vmem:[%s1702 + $0x10] sm:$0xff]
    %v1706 = vld [vmem:[%s1702 + $0x18] sm:$0xff]
    %1707 = vmatpush.msra.mxu0 %v423
    %1708 = vmatpush.msra.mxu0 %v419
    %1709 = vmatpush.msra.mxu0 %v415
    %1710 = vmatpush.msra.mxu0 %v411
    %1711 = vmatpush.msra.mxu0 %v407
    %1712 = vmatpush.msra.mxu0 %v403
    %1713 = vmatpush.msra.mxu0 %v399
    %1714 = vmatpush.msra.mxu0 %v395
    %1715 = vmatpush.msra.mxu0 %v391
    %1716 = vmatpush.msra.mxu0 %v387
    %1717 = vmatpush.msra.mxu0 %v383
    %1718 = vmatpush.msra.mxu0 %v379
    %1719 = vmatpush.msra.mxu0 %v375
    %1720 = vmatpush.msra.mxu0 %v371
    %1721 = vmatpush.msra.mxu0 %v367
    %1722 = vmatpush.msra.mxu0 %v363
    %1723 = vmatmul.f32.gmra.mxu0 %v1552
    %v1724 = vpop.f32.mrf.mxu0
    %v1725 = vadd.f32 0.0, %v1724
    %1726 = vdwg.mxu0
    %1727 = vmatpush.msra.mxu0 %v424
    %1728 = vmatpush.msra.mxu0 %v420
    %1729 = vmatpush.msra.mxu0 %v416
    %1730 = vmatpush.msra.mxu0 %v412
    %1731 = vmatpush.msra.mxu0 %v408
    %1732 = vmatpush.msra.mxu0 %v404
    %1733 = vmatpush.msra.mxu0 %v400
    %1734 = vmatpush.msra.mxu0 %v396
    %1735 = vmatpush.msra.mxu0 %v392
    %1736 = vmatpush.msra.mxu0 %v388
    %1737 = vmatpush.msra.mxu0 %v384
    %1738 = vmatpush.msra.mxu0 %v380
    %1739 = vmatpush.msra.mxu0 %v376
    %1740 = vmatpush.msra.mxu0 %v372
    %1741 = vmatpush.msra.mxu0 %v368
    %1742 = vmatpush.msra.mxu0 %v364
    %1743 = vmatmul.f32.gmra.mxu0 %v1552
    %v1744 = vpop.f32.mrf.mxu0
    %v1745 = vadd.f32 0.0, %v1744
    %1746 = vdwg.mxu0
    %1747 = vmatpush.msra.mxu0 %v425
    %1748 = vmatpush.msra.mxu0 %v421
    %1749 = vmatpush.msra.mxu0 %v417
    %1750 = vmatpush.msra.mxu0 %v413
    %1751 = vmatpush.msra.mxu0 %v409
    %1752 = vmatpush.msra.mxu0 %v405
    %1753 = vmatpush.msra.mxu0 %v401
    %1754 = vmatpush.msra.mxu0 %v397
    %1755 = vmatpush.msra.mxu0 %v393
    %1756 = vmatpush.msra.mxu0 %v389
    %1757 = vmatpush.msra.mxu0 %v385
    %1758 = vmatpush.msra.mxu0 %v381
    %1759 = vmatpush.msra.mxu0 %v377
    %1760 = vmatpush.msra.mxu0 %v373
    %1761 = vmatpush.msra.mxu0 %v369
    %1762 = vmatpush.msra.mxu0 %v365
    %1763 = vmatmul.f32.gmra.mxu0 %v1552
    %v1764 = vpop.f32.mrf.mxu0
    %v1765 = vadd.f32 0.0, %v1764
    %1766 = vdwg.mxu0
    %1767 = vmatpush.msra.mxu0 %v426
    %1768 = vmatpush.msra.mxu0 %v422
    %1769 = vmatpush.msra.mxu0 %v418
    %1770 = vmatpush.msra.mxu0 %v414
    %1771 = vmatpush.msra.mxu0 %v410
    %1772 = vmatpush.msra.mxu0 %v406
    %1773 = vmatpush.msra.mxu0 %v402
    %1774 = vmatpush.msra.mxu0 %v398
    %1775 = vmatpush.msra.mxu0 %v394
    %1776 = vmatpush.msra.mxu0 %v390
    %1777 = vmatpush.msra.mxu0 %v386
    %1778 = vmatpush.msra.mxu0 %v382
    %1779 = vmatpush.msra.mxu0 %v378
    %1780 = vmatpush.msra.mxu0 %v374
    %1781 = vmatpush.msra.mxu0 %v370
    %1782 = vmatpush.msra.mxu0 %v366
    %1783 = vmatmul.f32.gmra.mxu0 %v1552
    %v1784 = vpop.f32.mrf.mxu0
    %v1785 = vadd.f32 0.0, %v1784
    %1786 = vdwg.mxu0
    %v1787 = vadd.f32 %v1703, %v1725
    %v1788 = vadd.f32 %v1704, %v1745
    %v1789 = vadd.f32 %v1705, %v1765
    %v1790 = vadd.f32 %v1706, %v1785
    %1791 = vmatpush.msra.mxu0 %v571
    %1792 = vmatpush.msra.mxu0 %v567
    %1793 = vmatpush.msra.mxu0 %v563
    %1794 = vmatpush.msra.mxu0 %v559
    %1795 = vmatpush.msra.mxu0 %v555
    %1796 = vmatpush.msra.mxu0 %v551
    %1797 = vmatpush.msra.mxu0 %v547
    %1798 = vmatpush.msra.mxu0 %v543
    %1799 = vmatpush.msra.mxu0 %v539
    %1800 = vmatpush.msra.mxu0 %v535
    %1801 = vmatpush.msra.mxu0 %v531
    %1802 = vmatpush.msra.mxu0 %v527
    %1803 = vmatpush.msra.mxu0 %v523
    %1804 = vmatpush.msra.mxu0 %v519
    %1805 = vmatpush.msra.mxu0 %v515
    %1806 = vmatpush.msra.mxu0 %v511
    %1807 = vmatmul.f32.gmra.mxu0 %v1699
    %v1808 = vpop.f32.mrf.mxu0
    %v1809 = vadd.f32 %v576, %v1808
    %1810 = vdwg.mxu0
    %1811 = vmatpush.msra.mxu0 %v572
    %1812 = vmatpush.msra.mxu0 %v568
    %1813 = vmatpush.msra.mxu0 %v564
    %1814 = vmatpush.msra.mxu0 %v560
    %1815 = vmatpush.msra.mxu0 %v556
    %1816 = vmatpush.msra.mxu0 %v552
    %1817 = vmatpush.msra.mxu0 %v548
    %1818 = vmatpush.msra.mxu0 %v544
    %1819 = vmatpush.msra.mxu0 %v540
    %1820 = vmatpush.msra.mxu0 %v536
    %1821 = vmatpush.msra.mxu0 %v532
    %1822 = vmatpush.msra.mxu0 %v528
    %1823 = vmatpush.msra.mxu0 %v524
    %1824 = vmatpush.msra.mxu0 %v520
    %1825 = vmatpush.msra.mxu0 %v516
    %1826 = vmatpush.msra.mxu0 %v512
    %1827 = vmatmul.f32.gmra.mxu0 %v1699
    %v1828 = vpop.f32.mrf.mxu0
    %v1829 = vadd.f32 %v577, %v1828
    %1830 = vdwg.mxu0
    %1831 = vmatpush.msra.mxu0 %v573
    %1832 = vmatpush.msra.mxu0 %v569
    %1833 = vmatpush.msra.mxu0 %v565
    %1834 = vmatpush.msra.mxu0 %v561
    %1835 = vmatpush.msra.mxu0 %v557
    %1836 = vmatpush.msra.mxu0 %v553
    %1837 = vmatpush.msra.mxu0 %v549
    %1838 = vmatpush.msra.mxu0 %v545
    %1839 = vmatpush.msra.mxu0 %v541
    %1840 = vmatpush.msra.mxu0 %v537
    %1841 = vmatpush.msra.mxu0 %v533
    %1842 = vmatpush.msra.mxu0 %v529
    %1843 = vmatpush.msra.mxu0 %v525
    %1844 = vmatpush.msra.mxu0 %v521
    %1845 = vmatpush.msra.mxu0 %v517
    %1846 = vmatpush.msra.mxu0 %v513
    %1847 = vmatmul.f32.gmra.mxu0 %v1699
    %v1848 = vpop.f32.mrf.mxu0
    %v1849 = vadd.f32 %v578, %v1848
    %1850 = vdwg.mxu0
    %1851 = vmatpush.msra.mxu0 %v574
    %1852 = vmatpush.msra.mxu0 %v570
    %1853 = vmatpush.msra.mxu0 %v566
    %1854 = vmatpush.msra.mxu0 %v562
    %1855 = vmatpush.msra.mxu0 %v558
    %1856 = vmatpush.msra.mxu0 %v554
    %1857 = vmatpush.msra.mxu0 %v550
    %1858 = vmatpush.msra.mxu0 %v546
    %1859 = vmatpush.msra.mxu0 %v542
    %1860 = vmatpush.msra.mxu0 %v538
    %1861 = vmatpush.msra.mxu0 %v534
    %1862 = vmatpush.msra.mxu0 %v530
    %1863 = vmatpush.msra.mxu0 %v526
    %1864 = vmatpush.msra.mxu0 %v522
    %1865 = vmatpush.msra.mxu0 %v518
    %1866 = vmatpush.msra.mxu0 %v514
    %1867 = vmatmul.f32.gmra.mxu0 %v1699
    %v1868 = vpop.f32.mrf.mxu0
    %v1869 = vadd.f32 %v579, %v1868
    %1870 = vdwg.mxu0
    %v1871 = vxor.u32 %v1787, 2147483648
    %v1872 = vmul.f32 %v1871, 1.442695
    %v1873 = vpow.pop %v1872
    %v1874 = vadd.f32 %v1873, 1.0
    %v1875 = vrcp.pop %v1874
    %v1876 = vmul.f32 %v1874, %v1875
    %v1877 = vsub.f32 1.0, %v1876
    %v1878 = vmul.f32 %v1875, %v1877
    %v1879 = vadd.f32 %v1875, %v1878
    %vm1880 = vweird.f32 %v1874
    %vm1881 = vweird.f32 %v1875
    %vm1882 = vmor %vm1880, %vm1881
    %v1883 = vsel %vm1882, %v1875, %v1879
    %v1884 = vand.u32 2147483647, %v1874
    %vm1885 = vcmp.eq.f32.partialorder %v1884, 8.507059e+37
    %v1886 = vand.u32 %v1874, 2147483648
    %v1887 = vor.u32 1.1754944e-38, %v1886
    %v1888 = vsel %vm1885, %v1887, %v1883
    %v1889 = vmul.f32 1.0, %v1888
    %v1890 = vxor.u32 %v1788, 2147483648
    %v1891 = vmul.f32 %v1890, 1.442695
    %v1892 = vpow.pop %v1891
    %v1893 = vadd.f32 %v1892, 1.0
    %v1894 = vrcp.pop %v1893
    %v1895 = vmul.f32 %v1893, %v1894
    %v1896 = vsub.f32 1.0, %v1895
    %v1897 = vmul.f32 %v1894, %v1896
    %v1898 = vadd.f32 %v1894, %v1897
    %vm1899 = vweird.f32 %v1893
    %vm1900 = vweird.f32 %v1894
    %vm1901 = vmor %vm1899, %vm1900
    %v1902 = vsel %vm1901, %v1894, %v1898
    %v1903 = vand.u32 2147483647, %v1893
    %vm1904 = vcmp.eq.f32.partialorder %v1903, 8.507059e+37
    %v1905 = vand.u32 %v1893, 2147483648
    %v1906 = vor.u32 1.1754944e-38, %v1905
    %v1907 = vsel %vm1904, %v1906, %v1902
    %v1908 = vmul.f32 1.0, %v1907
    %v1909 = vtanh.pop %v1789
    %v1910 = vxor.u32 %v1790, 2147483648
    %v1911 = vmul.f32 %v1910, 1.442695
    %v1912 = vpow.pop %v1911
    %v1913 = vadd.f32 %v1912, 1.0
    %v1914 = vrcp.pop %v1913
    %v1915 = vmul.f32 %v1913, %v1914
    %v1916 = vsub.f32 1.0, %v1915
    %v1917 = vmul.f32 %v1914, %v1916
    %v1918 = vadd.f32 %v1914, %v1917
    %vm1919 = vweird.f32 %v1913
    %vm1920 = vweird.f32 %v1914
    %vm1921 = vmor %vm1919, %vm1920
    %v1922 = vsel %vm1921, %v1914, %v1918
    %v1923 = vand.u32 2147483647, %v1913
    %vm1924 = vcmp.eq.f32.partialorder %v1923, 8.507059e+37
    %v1925 = vand.u32 %v1913, 2147483648
    %v1926 = vor.u32 1.1754944e-38, %v1925
    %v1927 = vsel %vm1924, %v1926, %v1922
    %v1928 = vmul.f32 1.0, %v1927
    %v1929 = vmul.f32 %v1908, %v1550
    %v1930 = vmul.f32 %v1889, %v1909
    %v1931 = vadd.f32 %v1929, %v1930
    %v1932 = vtanh.pop %v1931
    %v1933 = vmul.f32 %v1928, %v1932
    %1934 = vmatpush.msra.mxu0 %v787
    %1935 = vmatpush.msra.mxu0 %v783
    %1936 = vmatpush.msra.mxu0 %v779
    %1937 = vmatpush.msra.mxu0 %v775
    %1938 = vmatpush.msra.mxu0 %v771
    %1939 = vmatpush.msra.mxu0 %v767
    %1940 = vmatpush.msra.mxu0 %v763
    %1941 = vmatpush.msra.mxu0 %v759
    %1942 = vmatpush.msra.mxu0 %v755
    %1943 = vmatpush.msra.mxu0 %v751
    %1944 = vmatpush.msra.mxu0 %v747
    %1945 = vmatpush.msra.mxu0 %v743
    %1946 = vmatpush.msra.mxu0 %v739
    %1947 = vmatpush.msra.mxu0 %v735
    %1948 = vmatpush.msra.mxu0 %v731
    %1949 = vmatpush.msra.mxu0 %v727
    %1950 = vmatmul.f32.gmra.mxu0 %v1933
    %v1951 = vpop.f32.mrf.mxu0
    %v1952 = vadd.f32 0.0, %v1951
    %1953 = vdwg.mxu0
    %1954 = vmatpush.msra.mxu0 %v788
    %1955 = vmatpush.msra.mxu0 %v784
    %1956 = vmatpush.msra.mxu0 %v780
    %1957 = vmatpush.msra.mxu0 %v776
    %1958 = vmatpush.msra.mxu0 %v772
    %1959 = vmatpush.msra.mxu0 %v768
    %1960 = vmatpush.msra.mxu0 %v764
    %1961 = vmatpush.msra.mxu0 %v760
    %1962 = vmatpush.msra.mxu0 %v756
    %1963 = vmatpush.msra.mxu0 %v752
    %1964 = vmatpush.msra.mxu0 %v748
    %1965 = vmatpush.msra.mxu0 %v744
    %1966 = vmatpush.msra.mxu0 %v740
    %1967 = vmatpush.msra.mxu0 %v736
    %1968 = vmatpush.msra.mxu0 %v732
    %1969 = vmatpush.msra.mxu0 %v728
    %1970 = vmatmul.f32.gmra.mxu0 %v1933
    %v1971 = vpop.f32.mrf.mxu0
    %v1972 = vadd.f32 0.0, %v1971
    %1973 = vdwg.mxu0
    %1974 = vmatpush.msra.mxu0 %v789
    %1975 = vmatpush.msra.mxu0 %v785
    %1976 = vmatpush.msra.mxu0 %v781
    %1977 = vmatpush.msra.mxu0 %v777
    %1978 = vmatpush.msra.mxu0 %v773
    %1979 = vmatpush.msra.mxu0 %v769
    %1980 = vmatpush.msra.mxu0 %v765
    %1981 = vmatpush.msra.mxu0 %v761
    %1982 = vmatpush.msra.mxu0 %v757
    %1983 = vmatpush.msra.mxu0 %v753
    %1984 = vmatpush.msra.mxu0 %v749
    %1985 = vmatpush.msra.mxu0 %v745
    %1986 = vmatpush.msra.mxu0 %v741
    %1987 = vmatpush.msra.mxu0 %v737
    %1988 = vmatpush.msra.mxu0 %v733
    %1989 = vmatpush.msra.mxu0 %v729
    %1990 = vmatmul.f32.gmra.mxu0 %v1933
    %v1991 = vpop.f32.mrf.mxu0
    %v1992 = vadd.f32 0.0, %v1991
    %1993 = vdwg.mxu0
    %1994 = vmatpush.msra.mxu0 %v790
    %1995 = vmatpush.msra.mxu0 %v786
    %1996 = vmatpush.msra.mxu0 %v782
    %1997 = vmatpush.msra.mxu0 %v778
    %1998 = vmatpush.msra.mxu0 %v774
    %1999 = vmatpush.msra.mxu0 %v770
    %2000 = vmatpush.msra.mxu0 %v766
    %2001 = vmatpush.msra.mxu0 %v762
    %2002 = vmatpush.msra.mxu0 %v758
    %2003 = vmatpush.msra.mxu0 %v754
    %2004 = vmatpush.msra.mxu0 %v750
    %2005 = vmatpush.msra.mxu0 %v746
    %2006 = vmatpush.msra.mxu0 %v742
    %2007 = vmatpush.msra.mxu0 %v738
    %2008 = vmatpush.msra.mxu0 %v734
    %2009 = vmatpush.msra.mxu0 %v730
    %2010 = vmatmul.f32.gmra.mxu0 %v1933
    %v2011 = vpop.f32.mrf.mxu0
    %v2012 = vadd.f32 0.0, %v2011
    %2013 = vdwg.mxu0
    %v2014 = vadd.f32 %v1809, %v1952
    %v2015 = vadd.f32 %v1829, %v1972
    %v2016 = vadd.f32 %v1849, %v1992
    %v2017 = vadd.f32 %v1869, %v2012
    %v2018 = vxor.u32 %v2014, 2147483648
    %v2019 = vmul.f32 %v2018, 1.442695
    %v2020 = vpow.pop %v2019
    %v2021 = vadd.f32 %v2020, 1.0
    %v2022 = vrcp.pop %v2021
    %v2023 = vmul.f32 %v2021, %v2022
    %v2024 = vsub.f32 1.0, %v2023
    %v2025 = vmul.f32 %v2022, %v2024
    %v2026 = vadd.f32 %v2022, %v2025
    %vm2027 = vweird.f32 %v2021
    %vm2028 = vweird.f32 %v2022
    %vm2029 = vmor %vm2027, %vm2028
    %v2030 = vsel %vm2029, %v2022, %v2026
    %v2031 = vand.u32 2147483647, %v2021
    %vm2032 = vcmp.eq.f32.partialorder %v2031, 8.507059e+37
    %v2033 = vand.u32 %v2021, 2147483648
    %v2034 = vor.u32 1.1754944e-38, %v2033
    %v2035 = vsel %vm2032, %v2034, %v2030
    %v2036 = vmul.f32 1.0, %v2035
    %v2037 = vxor.u32 %v2015, 2147483648
    %v2038 = vmul.f32 %v2037, 1.442695
    %v2039 = vpow.pop %v2038
    %v2040 = vadd.f32 %v2039, 1.0
    %v2041 = vrcp.pop %v2040
    %v2042 = vmul.f32 %v2040, %v2041
    %v2043 = vsub.f32 1.0, %v2042
    %v2044 = vmul.f32 %v2041, %v2043
    %v2045 = vadd.f32 %v2041, %v2044
    %vm2046 = vweird.f32 %v2040
    %vm2047 = vweird.f32 %v2041
    %vm2048 = vmor %vm2046, %vm2047
    %v2049 = vsel %vm2048, %v2041, %v2045
    %v2050 = vand.u32 2147483647, %v2040
    %vm2051 = vcmp.eq.f32.partialorder %v2050, 8.507059e+37
    %v2052 = vand.u32 %v2040, 2147483648
    %v2053 = vor.u32 1.1754944e-38, %v2052
    %v2054 = vsel %vm2051, %v2053, %v2049
    %v2055 = vmul.f32 1.0, %v2054
    %v2056 = vtanh.pop %v2016
    %v2057 = vxor.u32 %v2017, 2147483648
    %v2058 = vmul.f32 %v2057, 1.442695
    %v2059 = vpow.pop %v2058
    %v2060 = vadd.f32 %v2059, 1.0
    %v2061 = vrcp.pop %v2060
    %v2062 = vmul.f32 %v2060, %v2061
    %v2063 = vsub.f32 1.0, %v2062
    %v2064 = vmul.f32 %v2061, %v2063
    %v2065 = vadd.f32 %v2061, %v2064
    %vm2066 = vweird.f32 %v2060
    %vm2067 = vweird.f32 %v2061
    %vm2068 = vmor %vm2066, %vm2067
    %v2069 = vsel %vm2068, %v2061, %v2065
    %v2070 = vand.u32 2147483647, %v2060
    %vm2071 = vcmp.eq.f32.partialorder %v2070, 8.507059e+37
    %v2072 = vand.u32 %v2060, 2147483648
    %v2073 = vor.u32 1.1754944e-38, %v2072
    %v2074 = vsel %vm2071, %v2073, %v2069
    %v2075 = vmul.f32 1.0, %v2074
    %v2076 = vmul.f32 %v2055, %v1697
    %v2077 = vmul.f32 %v2036, %v2056
    %v2078 = vadd.f32 %v2076, %v2077
    %v2079 = vtanh.pop %v2078
    %v2080 = vmul.f32 %v2075, %v2079
    %s2081 = smul.u32 4, 4
    %s2082 = smul.addr %s2081, 8
    %s2083 = scalar_lea.vmem [#allocation6], %s2082
    %v2084 = vld [vmem:[%s2083] sm:$0xff]
    %v2085 = vld [vmem:[%s2083 + $0x8] sm:$0xff]
    %v2086 = vld [vmem:[%s2083 + $0x10] sm:$0xff]
    %v2087 = vld [vmem:[%s2083 + $0x18] sm:$0xff]
    %2088 = vmatpush.msra.mxu0 %v423
    %2089 = vmatpush.msra.mxu0 %v419
    %2090 = vmatpush.msra.mxu0 %v415
    %2091 = vmatpush.msra.mxu0 %v411
    %2092 = vmatpush.msra.mxu0 %v407
    %2093 = vmatpush.msra.mxu0 %v403
    %2094 = vmatpush.msra.mxu0 %v399
    %2095 = vmatpush.msra.mxu0 %v395
    %2096 = vmatpush.msra.mxu0 %v391
    %2097 = vmatpush.msra.mxu0 %v387
    %2098 = vmatpush.msra.mxu0 %v383
    %2099 = vmatpush.msra.mxu0 %v379
    %2100 = vmatpush.msra.mxu0 %v375
    %2101 = vmatpush.msra.mxu0 %v371
    %2102 = vmatpush.msra.mxu0 %v367
    %2103 = vmatpush.msra.mxu0 %v363
    %2104 = vmatmul.f32.gmra.mxu0 %v1933
    %v2105 = vpop.f32.mrf.mxu0
    %v2106 = vadd.f32 0.0, %v2105
    %2107 = vdwg.mxu0
    %2108 = vmatpush.msra.mxu0 %v424
    %2109 = vmatpush.msra.mxu0 %v420
    %2110 = vmatpush.msra.mxu0 %v416
    %2111 = vmatpush.msra.mxu0 %v412
    %2112 = vmatpush.msra.mxu0 %v408
    %2113 = vmatpush.msra.mxu0 %v404
    %2114 = vmatpush.msra.mxu0 %v400
    %2115 = vmatpush.msra.mxu0 %v396
    %2116 = vmatpush.msra.mxu0 %v392
    %2117 = vmatpush.msra.mxu0 %v388
    %2118 = vmatpush.msra.mxu0 %v384
    %2119 = vmatpush.msra.mxu0 %v380
    %2120 = vmatpush.msra.mxu0 %v376
    %2121 = vmatpush.msra.mxu0 %v372
    %2122 = vmatpush.msra.mxu0 %v368
    %2123 = vmatpush.msra.mxu0 %v364
    %2124 = vmatmul.f32.gmra.mxu0 %v1933
    %v2125 = vpop.f32.mrf.mxu0
    %v2126 = vadd.f32 0.0, %v2125
    %2127 = vdwg.mxu0
    %2128 = vmatpush.msra.mxu0 %v425
    %2129 = vmatpush.msra.mxu0 %v421
    %2130 = vmatpush.msra.mxu0 %v417
    %2131 = vmatpush.msra.mxu0 %v413
    %2132 = vmatpush.msra.mxu0 %v409
    %2133 = vmatpush.msra.mxu0 %v405
    %2134 = vmatpush.msra.mxu0 %v401
    %2135 = vmatpush.msra.mxu0 %v397
    %2136 = vmatpush.msra.mxu0 %v393
    %2137 = vmatpush.msra.mxu0 %v389
    %2138 = vmatpush.msra.mxu0 %v385
    %2139 = vmatpush.msra.mxu0 %v381
    %2140 = vmatpush.msra.mxu0 %v377
    %2141 = vmatpush.msra.mxu0 %v373
    %2142 = vmatpush.msra.mxu0 %v369
    %2143 = vmatpush.msra.mxu0 %v365
    %2144 = vmatmul.f32.gmra.mxu0 %v1933
    %v2145 = vpop.f32.mrf.mxu0
    %v2146 = vadd.f32 0.0, %v2145
    %2147 = vdwg.mxu0
    %2148 = vmatpush.msra.mxu0 %v426
    %2149 = vmatpush.msra.mxu0 %v422
    %2150 = vmatpush.msra.mxu0 %v418
    %2151 = vmatpush.msra.mxu0 %v414
    %2152 = vmatpush.msra.mxu0 %v410
    %2153 = vmatpush.msra.mxu0 %v406
    %2154 = vmatpush.msra.mxu0 %v402
    %2155 = vmatpush.msra.mxu0 %v398
    %2156 = vmatpush.msra.mxu0 %v394
    %2157 = vmatpush.msra.mxu0 %v390
    %2158 = vmatpush.msra.mxu0 %v386
    %2159 = vmatpush.msra.mxu0 %v382
    %2160 = vmatpush.msra.mxu0 %v378
    %2161 = vmatpush.msra.mxu0 %v374
    %2162 = vmatpush.msra.mxu0 %v370
    %2163 = vmatpush.msra.mxu0 %v366
    %2164 = vmatmul.f32.gmra.mxu0 %v1933
    %v2165 = vpop.f32.mrf.mxu0
    %v2166 = vadd.f32 0.0, %v2165
    %2167 = vdwg.mxu0
    %v2168 = vadd.f32 %v2084, %v2106
    %v2169 = vadd.f32 %v2085, %v2126
    %v2170 = vadd.f32 %v2086, %v2146
    %v2171 = vadd.f32 %v2087, %v2166
    %2172 = vmatpush.msra.mxu0 %v571
    %2173 = vmatpush.msra.mxu0 %v567
    %2174 = vmatpush.msra.mxu0 %v563
    %2175 = vmatpush.msra.mxu0 %v559
    %2176 = vmatpush.msra.mxu0 %v555
    %2177 = vmatpush.msra.mxu0 %v551
    %2178 = vmatpush.msra.mxu0 %v547
    %2179 = vmatpush.msra.mxu0 %v543
    %2180 = vmatpush.msra.mxu0 %v539
    %2181 = vmatpush.msra.mxu0 %v535
    %2182 = vmatpush.msra.mxu0 %v531
    %2183 = vmatpush.msra.mxu0 %v527
    %2184 = vmatpush.msra.mxu0 %v523
    %2185 = vmatpush.msra.mxu0 %v519
    %2186 = vmatpush.msra.mxu0 %v515
    %2187 = vmatpush.msra.mxu0 %v511
    %2188 = vmatmul.f32.gmra.mxu0 %v2080
    %v2189 = vpop.f32.mrf.mxu0
    %v2190 = vadd.f32 %v576, %v2189
    %2191 = vdwg.mxu0
    %2192 = vmatpush.msra.mxu0 %v572
    %2193 = vmatpush.msra.mxu0 %v568
    %2194 = vmatpush.msra.mxu0 %v564
    %2195 = vmatpush.msra.mxu0 %v560
    %2196 = vmatpush.msra.mxu0 %v556
    %2197 = vmatpush.msra.mxu0 %v552
    %2198 = vmatpush.msra.mxu0 %v548
    %2199 = vmatpush.msra.mxu0 %v544
    %2200 = vmatpush.msra.mxu0 %v540
    %2201 = vmatpush.msra.mxu0 %v536
    %2202 = vmatpush.msra.mxu0 %v532
    %2203 = vmatpush.msra.mxu0 %v528
    %2204 = vmatpush.msra.mxu0 %v524
    %2205 = vmatpush.msra.mxu0 %v520
    %2206 = vmatpush.msra.mxu0 %v516
    %2207 = vmatpush.msra.mxu0 %v512
    %2208 = vmatmul.f32.gmra.mxu0 %v2080
    %v2209 = vpop.f32.mrf.mxu0
    %v2210 = vadd.f32 %v577, %v2209
    %2211 = vdwg.mxu0
    %2212 = vmatpush.msra.mxu0 %v573
    %2213 = vmatpush.msra.mxu0 %v569
    %2214 = vmatpush.msra.mxu0 %v565
    %2215 = vmatpush.msra.mxu0 %v561
    %2216 = vmatpush.msra.mxu0 %v557
    %2217 = vmatpush.msra.mxu0 %v553
    %2218 = vmatpush.msra.mxu0 %v549
    %2219 = vmatpush.msra.mxu0 %v545
    %2220 = vmatpush.msra.mxu0 %v541
    %2221 = vmatpush.msra.mxu0 %v537
    %2222 = vmatpush.msra.mxu0 %v533
    %2223 = vmatpush.msra.mxu0 %v529
    %2224 = vmatpush.msra.mxu0 %v525
    %2225 = vmatpush.msra.mxu0 %v521
    %2226 = vmatpush.msra.mxu0 %v517
    %2227 = vmatpush.msra.mxu0 %v513
    %2228 = vmatmul.f32.gmra.mxu0 %v2080
    %v2229 = vpop.f32.mrf.mxu0
    %v2230 = vadd.f32 %v578, %v2229
    %2231 = vdwg.mxu0
    %2232 = vmatpush.msra.mxu0 %v574
    %2233 = vmatpush.msra.mxu0 %v570
    %2234 = vmatpush.msra.mxu0 %v566
    %2235 = vmatpush.msra.mxu0 %v562
    %2236 = vmatpush.msra.mxu0 %v558
    %2237 = vmatpush.msra.mxu0 %v554
    %2238 = vmatpush.msra.mxu0 %v550
    %2239 = vmatpush.msra.mxu0 %v546
    %2240 = vmatpush.msra.mxu0 %v542
    %2241 = vmatpush.msra.mxu0 %v538
    %2242 = vmatpush.msra.mxu0 %v534
    %2243 = vmatpush.msra.mxu0 %v530
    %2244 = vmatpush.msra.mxu0 %v526
    %2245 = vmatpush.msra.mxu0 %v522
    %2246 = vmatpush.msra.mxu0 %v518
    %2247 = vmatpush.msra.mxu0 %v514
    %2248 = vmatmul.f32.gmra.mxu0 %v2080
    %v2249 = vpop.f32.mrf.mxu0
    %v2250 = vadd.f32 %v579, %v2249
    %2251 = vdwg.mxu0
    %v2252 = vxor.u32 %v2168, 2147483648
    %v2253 = vmul.f32 %v2252, 1.442695
    %v2254 = vpow.pop %v2253
    %v2255 = vadd.f32 %v2254, 1.0
    %v2256 = vrcp.pop %v2255
    %v2257 = vmul.f32 %v2255, %v2256
    %v2258 = vsub.f32 1.0, %v2257
    %v2259 = vmul.f32 %v2256, %v2258
    %v2260 = vadd.f32 %v2256, %v2259
    %vm2261 = vweird.f32 %v2255
    %vm2262 = vweird.f32 %v2256
    %vm2263 = vmor %vm2261, %vm2262
    %v2264 = vsel %vm2263, %v2256, %v2260
    %v2265 = vand.u32 2147483647, %v2255
    %vm2266 = vcmp.eq.f32.partialorder %v2265, 8.507059e+37
    %v2267 = vand.u32 %v2255, 2147483648
    %v2268 = vor.u32 1.1754944e-38, %v2267
    %v2269 = vsel %vm2266, %v2268, %v2264
    %v2270 = vmul.f32 1.0, %v2269
    %v2271 = vxor.u32 %v2169, 2147483648
    %v2272 = vmul.f32 %v2271, 1.442695
    %v2273 = vpow.pop %v2272
    %v2274 = vadd.f32 %v2273, 1.0
    %v2275 = vrcp.pop %v2274
    %v2276 = vmul.f32 %v2274, %v2275
    %v2277 = vsub.f32 1.0, %v2276
    %v2278 = vmul.f32 %v2275, %v2277
    %v2279 = vadd.f32 %v2275, %v2278
    %vm2280 = vweird.f32 %v2274
    %vm2281 = vweird.f32 %v2275
    %vm2282 = vmor %vm2280, %vm2281
    %v2283 = vsel %vm2282, %v2275, %v2279
    %v2284 = vand.u32 2147483647, %v2274
    %vm2285 = vcmp.eq.f32.partialorder %v2284, 8.507059e+37
    %v2286 = vand.u32 %v2274, 2147483648
    %v2287 = vor.u32 1.1754944e-38, %v2286
    %v2288 = vsel %vm2285, %v2287, %v2283
    %v2289 = vmul.f32 1.0, %v2288
    %v2290 = vtanh.pop %v2170
    %v2291 = vxor.u32 %v2171, 2147483648
    %v2292 = vmul.f32 %v2291, 1.442695
    %v2293 = vpow.pop %v2292
    %v2294 = vadd.f32 %v2293, 1.0
    %v2295 = vrcp.pop %v2294
    %v2296 = vmul.f32 %v2294, %v2295
    %v2297 = vsub.f32 1.0, %v2296
    %v2298 = vmul.f32 %v2295, %v2297
    %v2299 = vadd.f32 %v2295, %v2298
    %vm2300 = vweird.f32 %v2294
    %vm2301 = vweird.f32 %v2295
    %vm2302 = vmor %vm2300, %vm2301
    %v2303 = vsel %vm2302, %v2295, %v2299
    %v2304 = vand.u32 2147483647, %v2294
    %vm2305 = vcmp.eq.f32.partialorder %v2304, 8.507059e+37
    %v2306 = vand.u32 %v2294, 2147483648
    %v2307 = vor.u32 1.1754944e-38, %v2306
    %v2308 = vsel %vm2305, %v2307, %v2303
    %v2309 = vmul.f32 1.0, %v2308
    %v2310 = vmul.f32 %v2289, %v1931
    %v2311 = vmul.f32 %v2270, %v2290
    %v2312 = vadd.f32 %v2310, %v2311
    %v2313 = vtanh.pop %v2312
    %v2314 = vmul.f32 %v2309, %v2313
    %2315 = vmatpush.msra.mxu0 %v787
    %2316 = vmatpush.msra.mxu0 %v783
    %2317 = vmatpush.msra.mxu0 %v779
    %2318 = vmatpush.msra.mxu0 %v775
    %2319 = vmatpush.msra.mxu0 %v771
    %2320 = vmatpush.msra.mxu0 %v767
    %2321 = vmatpush.msra.mxu0 %v763
    %2322 = vmatpush.msra.mxu0 %v759
    %2323 = vmatpush.msra.mxu0 %v755
    %2324 = vmatpush.msra.mxu0 %v751
    %2325 = vmatpush.msra.mxu0 %v747
    %2326 = vmatpush.msra.mxu0 %v743
    %2327 = vmatpush.msra.mxu0 %v739
    %2328 = vmatpush.msra.mxu0 %v735
    %2329 = vmatpush.msra.mxu0 %v731
    %2330 = vmatpush.msra.mxu0 %v727
    %2331 = vmatmul.f32.gmra.mxu0 %v2314
    %v2332 = vpop.f32.mrf.mxu0
    %v2333 = vadd.f32 0.0, %v2332
    %2334 = vdwg.mxu0
    %2335 = vmatpush.msra.mxu0 %v788
    %2336 = vmatpush.msra.mxu0 %v784
    %2337 = vmatpush.msra.mxu0 %v780
    %2338 = vmatpush.msra.mxu0 %v776
    %2339 = vmatpush.msra.mxu0 %v772
    %2340 = vmatpush.msra.mxu0 %v768
    %2341 = vmatpush.msra.mxu0 %v764
    %2342 = vmatpush.msra.mxu0 %v760
    %2343 = vmatpush.msra.mxu0 %v756
    %2344 = vmatpush.msra.mxu0 %v752
    %2345 = vmatpush.msra.mxu0 %v748
    %2346 = vmatpush.msra.mxu0 %v744
    %2347 = vmatpush.msra.mxu0 %v740
    %2348 = vmatpush.msra.mxu0 %v736
    %2349 = vmatpush.msra.mxu0 %v732
    %2350 = vmatpush.msra.mxu0 %v728
    %2351 = vmatmul.f32.gmra.mxu0 %v2314
    %v2352 = vpop.f32.mrf.mxu0
    %v2353 = vadd.f32 0.0, %v2352
    %2354 = vdwg.mxu0
    %2355 = vmatpush.msra.mxu0 %v789
    %2356 = vmatpush.msra.mxu0 %v785
    %2357 = vmatpush.msra.mxu0 %v781
    %2358 = vmatpush.msra.mxu0 %v777
    %2359 = vmatpush.msra.mxu0 %v773
    %2360 = vmatpush.msra.mxu0 %v769
    %2361 = vmatpush.msra.mxu0 %v765
    %2362 = vmatpush.msra.mxu0 %v761
    %2363 = vmatpush.msra.mxu0 %v757
    %2364 = vmatpush.msra.mxu0 %v753
    %2365 = vmatpush.msra.mxu0 %v749
    %2366 = vmatpush.msra.mxu0 %v745
    %2367 = vmatpush.msra.mxu0 %v741
    %2368 = vmatpush.msra.mxu0 %v737
    %2369 = vmatpush.msra.mxu0 %v733
    %2370 = vmatpush.msra.mxu0 %v729
    %2371 = vmatmul.f32.gmra.mxu0 %v2314
    %v2372 = vpop.f32.mrf.mxu0
    %v2373 = vadd.f32 0.0, %v2372
    %2374 = vdwg.mxu0
    %2375 = vmatpush.msra.mxu0 %v790
    %2376 = vmatpush.msra.mxu0 %v786
    %2377 = vmatpush.msra.mxu0 %v782
    %2378 = vmatpush.msra.mxu0 %v778
    %2379 = vmatpush.msra.mxu0 %v774
    %2380 = vmatpush.msra.mxu0 %v770
    %2381 = vmatpush.msra.mxu0 %v766
    %2382 = vmatpush.msra.mxu0 %v762
    %2383 = vmatpush.msra.mxu0 %v758
    %2384 = vmatpush.msra.mxu0 %v754
    %2385 = vmatpush.msra.mxu0 %v750
    %2386 = vmatpush.msra.mxu0 %v746
    %2387 = vmatpush.msra.mxu0 %v742
    %2388 = vmatpush.msra.mxu0 %v738
    %2389 = vmatpush.msra.mxu0 %v734
    %2390 = vmatpush.msra.mxu0 %v730
    %2391 = vmatmul.f32.gmra.mxu0 %v2314
    %v2392 = vpop.f32.mrf.mxu0
    %v2393 = vadd.f32 0.0, %v2392
    %2394 = vdwg.mxu0
    %v2395 = vadd.f32 %v2190, %v2333
    %v2396 = vadd.f32 %v2210, %v2353
    %v2397 = vadd.f32 %v2230, %v2373
    %v2398 = vadd.f32 %v2250, %v2393
    %v2399 = vxor.u32 %v2395, 2147483648
    %v2400 = vmul.f32 %v2399, 1.442695
    %v2401 = vpow.pop %v2400
    %v2402 = vadd.f32 %v2401, 1.0
    %v2403 = vrcp.pop %v2402
    %v2404 = vmul.f32 %v2402, %v2403
    %v2405 = vsub.f32 1.0, %v2404
    %v2406 = vmul.f32 %v2403, %v2405
    %v2407 = vadd.f32 %v2403, %v2406
    %vm2408 = vweird.f32 %v2402
    %vm2409 = vweird.f32 %v2403
    %vm2410 = vmor %vm2408, %vm2409
    %v2411 = vsel %vm2410, %v2403, %v2407
    %v2412 = vand.u32 2147483647, %v2402
    %vm2413 = vcmp.eq.f32.partialorder %v2412, 8.507059e+37
    %v2414 = vand.u32 %v2402, 2147483648
    %v2415 = vor.u32 1.1754944e-38, %v2414
    %v2416 = vsel %vm2413, %v2415, %v2411
    %v2417 = vmul.f32 1.0, %v2416
    %v2418 = vxor.u32 %v2396, 2147483648
    %v2419 = vmul.f32 %v2418, 1.442695
    %v2420 = vpow.pop %v2419
    %v2421 = vadd.f32 %v2420, 1.0
    %v2422 = vrcp.pop %v2421
    %v2423 = vmul.f32 %v2421, %v2422
    %v2424 = vsub.f32 1.0, %v2423
    %v2425 = vmul.f32 %v2422, %v2424
    %v2426 = vadd.f32 %v2422, %v2425
    %vm2427 = vweird.f32 %v2421
    %vm2428 = vweird.f32 %v2422
    %vm2429 = vmor %vm2427, %vm2428
    %v2430 = vsel %vm2429, %v2422, %v2426
    %v2431 = vand.u32 2147483647, %v2421
    %vm2432 = vcmp.eq.f32.partialorder %v2431, 8.507059e+37
    %v2433 = vand.u32 %v2421, 2147483648
    %v2434 = vor.u32 1.1754944e-38, %v2433
    %v2435 = vsel %vm2432, %v2434, %v2430
    %v2436 = vmul.f32 1.0, %v2435
    %v2437 = vtanh.pop %v2397
    %v2438 = vxor.u32 %v2398, 2147483648
    %v2439 = vmul.f32 %v2438, 1.442695
    %v2440 = vpow.pop %v2439
    %v2441 = vadd.f32 %v2440, 1.0
    %v2442 = vrcp.pop %v2441
    %v2443 = vmul.f32 %v2441, %v2442
    %v2444 = vsub.f32 1.0, %v2443
    %v2445 = vmul.f32 %v2442, %v2444
    %v2446 = vadd.f32 %v2442, %v2445
    %vm2447 = vweird.f32 %v2441
    %vm2448 = vweird.f32 %v2442
    %vm2449 = vmor %vm2447, %vm2448
    %v2450 = vsel %vm2449, %v2442, %v2446
    %v2451 = vand.u32 2147483647, %v2441
    %vm2452 = vcmp.eq.f32.partialorder %v2451, 8.507059e+37
    %v2453 = vand.u32 %v2441, 2147483648
    %v2454 = vor.u32 1.1754944e-38, %v2453
    %v2455 = vsel %vm2452, %v2454, %v2450
    %v2456 = vmul.f32 1.0, %v2455
    %v2457 = vmul.f32 %v2436, %v2078
    %v2458 = vmul.f32 %v2417, %v2437
    %v2459 = vadd.f32 %v2457, %v2458
    %v2460 = vtanh.pop %v2459
    %v2461 = vmul.f32 %v2456, %v2460
    %s2462 = smul.u32 5, 4
    %s2463 = smul.addr %s2462, 8
    %s2464 = scalar_lea.vmem [#allocation6], %s2463
    %v2465 = vld [vmem:[%s2464] sm:$0xff]
    %v2466 = vld [vmem:[%s2464 + $0x8] sm:$0xff]
    %v2467 = vld [vmem:[%s2464 + $0x10] sm:$0xff]
    %v2468 = vld [vmem:[%s2464 + $0x18] sm:$0xff]
    %2469 = vmatpush.msra.mxu0 %v423
    %2470 = vmatpush.msra.mxu0 %v419
    %2471 = vmatpush.msra.mxu0 %v415
    %2472 = vmatpush.msra.mxu0 %v411
    %2473 = vmatpush.msra.mxu0 %v407
    %2474 = vmatpush.msra.mxu0 %v403
    %2475 = vmatpush.msra.mxu0 %v399
    %2476 = vmatpush.msra.mxu0 %v395
    %2477 = vmatpush.msra.mxu0 %v391
    %2478 = vmatpush.msra.mxu0 %v387
    %2479 = vmatpush.msra.mxu0 %v383
    %2480 = vmatpush.msra.mxu0 %v379
    %2481 = vmatpush.msra.mxu0 %v375
    %2482 = vmatpush.msra.mxu0 %v371
    %2483 = vmatpush.msra.mxu0 %v367
    %2484 = vmatpush.msra.mxu0 %v363
    %2485 = vmatmul.f32.gmra.mxu0 %v2314
    %v2486 = vpop.f32.mrf.mxu0
    %v2487 = vadd.f32 0.0, %v2486
    %2488 = vdwg.mxu0
    %2489 = vmatpush.msra.mxu0 %v424
    %2490 = vmatpush.msra.mxu0 %v420
    %2491 = vmatpush.msra.mxu0 %v416
    %2492 = vmatpush.msra.mxu0 %v412
    %2493 = vmatpush.msra.mxu0 %v408
    %2494 = vmatpush.msra.mxu0 %v404
    %2495 = vmatpush.msra.mxu0 %v400
    %2496 = vmatpush.msra.mxu0 %v396
    %2497 = vmatpush.msra.mxu0 %v392
    %2498 = vmatpush.msra.mxu0 %v388
    %2499 = vmatpush.msra.mxu0 %v384
    %2500 = vmatpush.msra.mxu0 %v380
    %2501 = vmatpush.msra.mxu0 %v376
    %2502 = vmatpush.msra.mxu0 %v372
    %2503 = vmatpush.msra.mxu0 %v368
    %2504 = vmatpush.msra.mxu0 %v364
    %2505 = vmatmul.f32.gmra.mxu0 %v2314
    %v2506 = vpop.f32.mrf.mxu0
    %v2507 = vadd.f32 0.0, %v2506
    %2508 = vdwg.mxu0
    %2509 = vmatpush.msra.mxu0 %v425
    %2510 = vmatpush.msra.mxu0 %v421
    %2511 = vmatpush.msra.mxu0 %v417
    %2512 = vmatpush.msra.mxu0 %v413
    %2513 = vmatpush.msra.mxu0 %v409
    %2514 = vmatpush.msra.mxu0 %v405
    %2515 = vmatpush.msra.mxu0 %v401
    %2516 = vmatpush.msra.mxu0 %v397
    %2517 = vmatpush.msra.mxu0 %v393
    %2518 = vmatpush.msra.mxu0 %v389
    %2519 = vmatpush.msra.mxu0 %v385
    %2520 = vmatpush.msra.mxu0 %v381
    %2521 = vmatpush.msra.mxu0 %v377
    %2522 = vmatpush.msra.mxu0 %v373
    %2523 = vmatpush.msra.mxu0 %v369
    %2524 = vmatpush.msra.mxu0 %v365
    %2525 = vmatmul.f32.gmra.mxu0 %v2314
    %v2526 = vpop.f32.mrf.mxu0
    %v2527 = vadd.f32 0.0, %v2526
    %2528 = vdwg.mxu0
    %2529 = vmatpush.msra.mxu0 %v426
    %2530 = vmatpush.msra.mxu0 %v422
    %2531 = vmatpush.msra.mxu0 %v418
    %2532 = vmatpush.msra.mxu0 %v414
    %2533 = vmatpush.msra.mxu0 %v410
    %2534 = vmatpush.msra.mxu0 %v406
    %2535 = vmatpush.msra.mxu0 %v402
    %2536 = vmatpush.msra.mxu0 %v398
    %2537 = vmatpush.msra.mxu0 %v394
    %2538 = vmatpush.msra.mxu0 %v390
    %2539 = vmatpush.msra.mxu0 %v386
    %2540 = vmatpush.msra.mxu0 %v382
    %2541 = vmatpush.msra.mxu0 %v378
    %2542 = vmatpush.msra.mxu0 %v374
    %2543 = vmatpush.msra.mxu0 %v370
    %2544 = vmatpush.msra.mxu0 %v366
    %2545 = vmatmul.f32.gmra.mxu0 %v2314
    %v2546 = vpop.f32.mrf.mxu0
    %v2547 = vadd.f32 0.0, %v2546
    %2548 = vdwg.mxu0
    %v2549 = vadd.f32 %v2465, %v2487
    %v2550 = vadd.f32 %v2466, %v2507
    %v2551 = vadd.f32 %v2467, %v2527
    %v2552 = vadd.f32 %v2468, %v2547
    %2553 = vmatpush.msra.mxu0 %v571
    %2554 = vmatpush.msra.mxu0 %v567
    %2555 = vmatpush.msra.mxu0 %v563
    %2556 = vmatpush.msra.mxu0 %v559
    %2557 = vmatpush.msra.mxu0 %v555
    %2558 = vmatpush.msra.mxu0 %v551
    %2559 = vmatpush.msra.mxu0 %v547
    %2560 = vmatpush.msra.mxu0 %v543
    %2561 = vmatpush.msra.mxu0 %v539
    %2562 = vmatpush.msra.mxu0 %v535
    %2563 = vmatpush.msra.mxu0 %v531
    %2564 = vmatpush.msra.mxu0 %v527
    %2565 = vmatpush.msra.mxu0 %v523
    %2566 = vmatpush.msra.mxu0 %v519
    %2567 = vmatpush.msra.mxu0 %v515
    %2568 = vmatpush.msra.mxu0 %v511
    %2569 = vmatmul.f32.gmra.mxu0 %v2461
    %v2570 = vpop.f32.mrf.mxu0
    %v2571 = vadd.f32 %v576, %v2570
    %2572 = vdwg.mxu0
    %2573 = vmatpush.msra.mxu0 %v572
    %2574 = vmatpush.msra.mxu0 %v568
    %2575 = vmatpush.msra.mxu0 %v564
    %2576 = vmatpush.msra.mxu0 %v560
    %2577 = vmatpush.msra.mxu0 %v556
    %2578 = vmatpush.msra.mxu0 %v552
    %2579 = vmatpush.msra.mxu0 %v548
    %2580 = vmatpush.msra.mxu0 %v544
    %2581 = vmatpush.msra.mxu0 %v540
    %2582 = vmatpush.msra.mxu0 %v536
    %2583 = vmatpush.msra.mxu0 %v532
    %2584 = vmatpush.msra.mxu0 %v528
    %2585 = vmatpush.msra.mxu0 %v524
    %2586 = vmatpush.msra.mxu0 %v520
    %2587 = vmatpush.msra.mxu0 %v516
    %2588 = vmatpush.msra.mxu0 %v512
    %2589 = vmatmul.f32.gmra.mxu0 %v2461
    %v2590 = vpop.f32.mrf.mxu0
    %v2591 = vadd.f32 %v577, %v2590
    %2592 = vdwg.mxu0
    %2593 = vmatpush.msra.mxu0 %v573
    %2594 = vmatpush.msra.mxu0 %v569
    %2595 = vmatpush.msra.mxu0 %v565
    %2596 = vmatpush.msra.mxu0 %v561
    %2597 = vmatpush.msra.mxu0 %v557
    %2598 = vmatpush.msra.mxu0 %v553
    %2599 = vmatpush.msra.mxu0 %v549
    %2600 = vmatpush.msra.mxu0 %v545
    %2601 = vmatpush.msra.mxu0 %v541
    %2602 = vmatpush.msra.mxu0 %v537
    %2603 = vmatpush.msra.mxu0 %v533
    %2604 = vmatpush.msra.mxu0 %v529
    %2605 = vmatpush.msra.mxu0 %v525
    %2606 = vmatpush.msra.mxu0 %v521
    %2607 = vmatpush.msra.mxu0 %v517
    %2608 = vmatpush.msra.mxu0 %v513
    %2609 = vmatmul.f32.gmra.mxu0 %v2461
    %v2610 = vpop.f32.mrf.mxu0
    %v2611 = vadd.f32 %v578, %v2610
    %2612 = vdwg.mxu0
    %2613 = vmatpush.msra.mxu0 %v574
    %2614 = vmatpush.msra.mxu0 %v570
    %2615 = vmatpush.msra.mxu0 %v566
    %2616 = vmatpush.msra.mxu0 %v562
    %2617 = vmatpush.msra.mxu0 %v558
    %2618 = vmatpush.msra.mxu0 %v554
    %2619 = vmatpush.msra.mxu0 %v550
    %2620 = vmatpush.msra.mxu0 %v546
    %2621 = vmatpush.msra.mxu0 %v542
    %2622 = vmatpush.msra.mxu0 %v538
    %2623 = vmatpush.msra.mxu0 %v534
    %2624 = vmatpush.msra.mxu0 %v530
    %2625 = vmatpush.msra.mxu0 %v526
    %2626 = vmatpush.msra.mxu0 %v522
    %2627 = vmatpush.msra.mxu0 %v518
    %2628 = vmatpush.msra.mxu0 %v514
    %2629 = vmatmul.f32.gmra.mxu0 %v2461
    %v2630 = vpop.f32.mrf.mxu0
    %v2631 = vadd.f32 %v579, %v2630
    %2632 = vdwg.mxu0
    %v2633 = vxor.u32 %v2549, 2147483648
    %v2634 = vmul.f32 %v2633, 1.442695
    %v2635 = vpow.pop %v2634
    %v2636 = vadd.f32 %v2635, 1.0
    %v2637 = vrcp.pop %v2636
    %v2638 = vmul.f32 %v2636, %v2637
    %v2639 = vsub.f32 1.0, %v2638
    %v2640 = vmul.f32 %v2637, %v2639
    %v2641 = vadd.f32 %v2637, %v2640
    %vm2642 = vweird.f32 %v2636
    %vm2643 = vweird.f32 %v2637
    %vm2644 = vmor %vm2642, %vm2643
    %v2645 = vsel %vm2644, %v2637, %v2641
    %v2646 = vand.u32 2147483647, %v2636
    %vm2647 = vcmp.eq.f32.partialorder %v2646, 8.507059e+37
    %v2648 = vand.u32 %v2636, 2147483648
    %v2649 = vor.u32 1.1754944e-38, %v2648
    %v2650 = vsel %vm2647, %v2649, %v2645
    %v2651 = vmul.f32 1.0, %v2650
    %v2652 = vxor.u32 %v2550, 2147483648
    %v2653 = vmul.f32 %v2652, 1.442695
    %v2654 = vpow.pop %v2653
    %v2655 = vadd.f32 %v2654, 1.0
    %v2656 = vrcp.pop %v2655
    %v2657 = vmul.f32 %v2655, %v2656
    %v2658 = vsub.f32 1.0, %v2657
    %v2659 = vmul.f32 %v2656, %v2658
    %v2660 = vadd.f32 %v2656, %v2659
    %vm2661 = vweird.f32 %v2655
    %vm2662 = vweird.f32 %v2656
    %vm2663 = vmor %vm2661, %vm2662
    %v2664 = vsel %vm2663, %v2656, %v2660
    %v2665 = vand.u32 2147483647, %v2655
    %vm2666 = vcmp.eq.f32.partialorder %v2665, 8.507059e+37
    %v2667 = vand.u32 %v2655, 2147483648
    %v2668 = vor.u32 1.1754944e-38, %v2667
    %v2669 = vsel %vm2666, %v2668, %v2664
    %v2670 = vmul.f32 1.0, %v2669
    %v2671 = vtanh.pop %v2551
    %v2672 = vxor.u32 %v2552, 2147483648
    %v2673 = vmul.f32 %v2672, 1.442695
    %v2674 = vpow.pop %v2673
    %v2675 = vadd.f32 %v2674, 1.0
    %v2676 = vrcp.pop %v2675
    %v2677 = vmul.f32 %v2675, %v2676
    %v2678 = vsub.f32 1.0, %v2677
    %v2679 = vmul.f32 %v2676, %v2678
    %v2680 = vadd.f32 %v2676, %v2679
    %vm2681 = vweird.f32 %v2675
    %vm2682 = vweird.f32 %v2676
    %vm2683 = vmor %vm2681, %vm2682
    %v2684 = vsel %vm2683, %v2676, %v2680
    %v2685 = vand.u32 2147483647, %v2675
    %vm2686 = vcmp.eq.f32.partialorder %v2685, 8.507059e+37
    %v2687 = vand.u32 %v2675, 2147483648
    %v2688 = vor.u32 1.1754944e-38, %v2687
    %v2689 = vsel %vm2686, %v2688, %v2684
    %v2690 = vmul.f32 1.0, %v2689
    %v2691 = vmul.f32 %v2670, %v2312
    %v2692 = vmul.f32 %v2651, %v2671
    %v2693 = vadd.f32 %v2691, %v2692
    %v2694 = vtanh.pop %v2693
    %v2695 = vmul.f32 %v2690, %v2694
    %2696 = vmatpush.msra.mxu0 %v787
    %2697 = vmatpush.msra.mxu0 %v783
    %2698 = vmatpush.msra.mxu0 %v779
    %2699 = vmatpush.msra.mxu0 %v775
    %2700 = vmatpush.msra.mxu0 %v771
    %2701 = vmatpush.msra.mxu0 %v767
    %2702 = vmatpush.msra.mxu0 %v763
    %2703 = vmatpush.msra.mxu0 %v759
    %2704 = vmatpush.msra.mxu0 %v755
    %2705 = vmatpush.msra.mxu0 %v751
    %2706 = vmatpush.msra.mxu0 %v747
    %2707 = vmatpush.msra.mxu0 %v743
    %2708 = vmatpush.msra.mxu0 %v739
    %2709 = vmatpush.msra.mxu0 %v735
    %2710 = vmatpush.msra.mxu0 %v731
    %2711 = vmatpush.msra.mxu0 %v727
    %2712 = vmatmul.f32.gmra.mxu0 %v2695
    %v2713 = vpop.f32.mrf.mxu0
    %v2714 = vadd.f32 0.0, %v2713
    %2715 = vdwg.mxu0
    %2716 = vmatpush.msra.mxu0 %v788
    %2717 = vmatpush.msra.mxu0 %v784
    %2718 = vmatpush.msra.mxu0 %v780
    %2719 = vmatpush.msra.mxu0 %v776
    %2720 = vmatpush.msra.mxu0 %v772
    %2721 = vmatpush.msra.mxu0 %v768
    %2722 = vmatpush.msra.mxu0 %v764
    %2723 = vmatpush.msra.mxu0 %v760
    %2724 = vmatpush.msra.mxu0 %v756
    %2725 = vmatpush.msra.mxu0 %v752
    %2726 = vmatpush.msra.mxu0 %v748
    %2727 = vmatpush.msra.mxu0 %v744
    %2728 = vmatpush.msra.mxu0 %v740
    %2729 = vmatpush.msra.mxu0 %v736
    %2730 = vmatpush.msra.mxu0 %v732
    %2731 = vmatpush.msra.mxu0 %v728
    %2732 = vmatmul.f32.gmra.mxu0 %v2695
    %v2733 = vpop.f32.mrf.mxu0
    %v2734 = vadd.f32 0.0, %v2733
    %2735 = vdwg.mxu0
    %2736 = vmatpush.msra.mxu0 %v789
    %2737 = vmatpush.msra.mxu0 %v785
    %2738 = vmatpush.msra.mxu0 %v781
    %2739 = vmatpush.msra.mxu0 %v777
    %2740 = vmatpush.msra.mxu0 %v773
    %2741 = vmatpush.msra.mxu0 %v769
    %2742 = vmatpush.msra.mxu0 %v765
    %2743 = vmatpush.msra.mxu0 %v761
    %2744 = vmatpush.msra.mxu0 %v757
    %2745 = vmatpush.msra.mxu0 %v753
    %2746 = vmatpush.msra.mxu0 %v749
    %2747 = vmatpush.msra.mxu0 %v745
    %2748 = vmatpush.msra.mxu0 %v741
    %2749 = vmatpush.msra.mxu0 %v737
    %2750 = vmatpush.msra.mxu0 %v733
    %2751 = vmatpush.msra.mxu0 %v729
    %2752 = vmatmul.f32.gmra.mxu0 %v2695
    %v2753 = vpop.f32.mrf.mxu0
    %v2754 = vadd.f32 0.0, %v2753
    %2755 = vdwg.mxu0
    %2756 = vmatpush.msra.mxu0 %v790
    %2757 = vmatpush.msra.mxu0 %v786
    %2758 = vmatpush.msra.mxu0 %v782
    %2759 = vmatpush.msra.mxu0 %v778
    %2760 = vmatpush.msra.mxu0 %v774
    %2761 = vmatpush.msra.mxu0 %v770
    %2762 = vmatpush.msra.mxu0 %v766
    %2763 = vmatpush.msra.mxu0 %v762
    %2764 = vmatpush.msra.mxu0 %v758
    %2765 = vmatpush.msra.mxu0 %v754
    %2766 = vmatpush.msra.mxu0 %v750
    %2767 = vmatpush.msra.mxu0 %v746
    %2768 = vmatpush.msra.mxu0 %v742
    %2769 = vmatpush.msra.mxu0 %v738
    %2770 = vmatpush.msra.mxu0 %v734
    %2771 = vmatpush.msra.mxu0 %v730
    %2772 = vmatmul.f32.gmra.mxu0 %v2695
    %v2773 = vpop.f32.mrf.mxu0
    %v2774 = vadd.f32 0.0, %v2773
    %2775 = vdwg.mxu0
    %v2776 = vadd.f32 %v2571, %v2714
    %v2777 = vadd.f32 %v2591, %v2734
    %v2778 = vadd.f32 %v2611, %v2754
    %v2779 = vadd.f32 %v2631, %v2774
    %v2780 = vxor.u32 %v2776, 2147483648
    %v2781 = vmul.f32 %v2780, 1.442695
    %v2782 = vpow.pop %v2781
    %v2783 = vadd.f32 %v2782, 1.0
    %v2784 = vrcp.pop %v2783
    %v2785 = vmul.f32 %v2783, %v2784
    %v2786 = vsub.f32 1.0, %v2785
    %v2787 = vmul.f32 %v2784, %v2786
    %v2788 = vadd.f32 %v2784, %v2787
    %vm2789 = vweird.f32 %v2783
    %vm2790 = vweird.f32 %v2784
    %vm2791 = vmor %vm2789, %vm2790
    %v2792 = vsel %vm2791, %v2784, %v2788
    %v2793 = vand.u32 2147483647, %v2783
    %vm2794 = vcmp.eq.f32.partialorder %v2793, 8.507059e+37
    %v2795 = vand.u32 %v2783, 2147483648
    %v2796 = vor.u32 1.1754944e-38, %v2795
    %v2797 = vsel %vm2794, %v2796, %v2792
    %v2798 = vmul.f32 1.0, %v2797
    %v2799 = vxor.u32 %v2777, 2147483648
    %v2800 = vmul.f32 %v2799, 1.442695
    %v2801 = vpow.pop %v2800
    %v2802 = vadd.f32 %v2801, 1.0
    %v2803 = vrcp.pop %v2802
    %v2804 = vmul.f32 %v2802, %v2803
    %v2805 = vsub.f32 1.0, %v2804
    %v2806 = vmul.f32 %v2803, %v2805
    %v2807 = vadd.f32 %v2803, %v2806
    %vm2808 = vweird.f32 %v2802
    %vm2809 = vweird.f32 %v2803
    %vm2810 = vmor %vm2808, %vm2809
    %v2811 = vsel %vm2810, %v2803, %v2807
    %v2812 = vand.u32 2147483647, %v2802
    %vm2813 = vcmp.eq.f32.partialorder %v2812, 8.507059e+37
    %v2814 = vand.u32 %v2802, 2147483648
    %v2815 = vor.u32 1.1754944e-38, %v2814
    %v2816 = vsel %vm2813, %v2815, %v2811
    %v2817 = vmul.f32 1.0, %v2816
    %v2818 = vtanh.pop %v2778
    %v2819 = vxor.u32 %v2779, 2147483648
    %v2820 = vmul.f32 %v2819, 1.442695
    %v2821 = vpow.pop %v2820
    %v2822 = vadd.f32 %v2821, 1.0
    %v2823 = vrcp.pop %v2822
    %v2824 = vmul.f32 %v2822, %v2823
    %v2825 = vsub.f32 1.0, %v2824
    %v2826 = vmul.f32 %v2823, %v2825
    %v2827 = vadd.f32 %v2823, %v2826
    %vm2828 = vweird.f32 %v2822
    %vm2829 = vweird.f32 %v2823
    %vm2830 = vmor %vm2828, %vm2829
    %v2831 = vsel %vm2830, %v2823, %v2827
    %v2832 = vand.u32 2147483647, %v2822
    %vm2833 = vcmp.eq.f32.partialorder %v2832, 8.507059e+37
    %v2834 = vand.u32 %v2822, 2147483648
    %v2835 = vor.u32 1.1754944e-38, %v2834
    %v2836 = vsel %vm2833, %v2835, %v2831
    %v2837 = vmul.f32 1.0, %v2836
    %v2838 = vmul.f32 %v2817, %v2459
    %v2839 = vmul.f32 %v2798, %v2818
    %v2840 = vadd.f32 %v2838, %v2839
    %v2841 = vtanh.pop %v2840
    %v2842 = vmul.f32 %v2837, %v2841
    %s2843 = smul.u32 6, 4
    %s2844 = smul.addr %s2843, 8
    %s2845 = scalar_lea.vmem [#allocation6], %s2844
    %v2846 = vld [vmem:[%s2845] sm:$0xff]
    %v2847 = vld [vmem:[%s2845 + $0x8] sm:$0xff]
    %v2848 = vld [vmem:[%s2845 + $0x10] sm:$0xff]
    %v2849 = vld [vmem:[%s2845 + $0x18] sm:$0xff]
    %2850 = vmatpush.msra.mxu0 %v423
    %2851 = vmatpush.msra.mxu0 %v419
    %2852 = vmatpush.msra.mxu0 %v415
    %2853 = vmatpush.msra.mxu0 %v411
    %2854 = vmatpush.msra.mxu0 %v407
    %2855 = vmatpush.msra.mxu0 %v403
    %2856 = vmatpush.msra.mxu0 %v399
    %2857 = vmatpush.msra.mxu0 %v395
    %2858 = vmatpush.msra.mxu0 %v391
    %2859 = vmatpush.msra.mxu0 %v387
    %2860 = vmatpush.msra.mxu0 %v383
    %2861 = vmatpush.msra.mxu0 %v379
    %2862 = vmatpush.msra.mxu0 %v375
    %2863 = vmatpush.msra.mxu0 %v371
    %2864 = vmatpush.msra.mxu0 %v367
    %2865 = vmatpush.msra.mxu0 %v363
    %2866 = vmatmul.f32.gmra.mxu0 %v2695
    %v2867 = vpop.f32.mrf.mxu0
    %v2868 = vadd.f32 0.0, %v2867
    %2869 = vdwg.mxu0
    %2870 = vmatpush.msra.mxu0 %v424
    %2871 = vmatpush.msra.mxu0 %v420
    %2872 = vmatpush.msra.mxu0 %v416
    %2873 = vmatpush.msra.mxu0 %v412
    %2874 = vmatpush.msra.mxu0 %v408
    %2875 = vmatpush.msra.mxu0 %v404
    %2876 = vmatpush.msra.mxu0 %v400
    %2877 = vmatpush.msra.mxu0 %v396
    %2878 = vmatpush.msra.mxu0 %v392
    %2879 = vmatpush.msra.mxu0 %v388
    %2880 = vmatpush.msra.mxu0 %v384
    %2881 = vmatpush.msra.mxu0 %v380
    %2882 = vmatpush.msra.mxu0 %v376
    %2883 = vmatpush.msra.mxu0 %v372
    %2884 = vmatpush.msra.mxu0 %v368
    %2885 = vmatpush.msra.mxu0 %v364
    %2886 = vmatmul.f32.gmra.mxu0 %v2695
    %v2887 = vpop.f32.mrf.mxu0
    %v2888 = vadd.f32 0.0, %v2887
    %2889 = vdwg.mxu0
    %2890 = vmatpush.msra.mxu0 %v425
    %2891 = vmatpush.msra.mxu0 %v421
    %2892 = vmatpush.msra.mxu0 %v417
    %2893 = vmatpush.msra.mxu0 %v413
    %2894 = vmatpush.msra.mxu0 %v409
    %2895 = vmatpush.msra.mxu0 %v405
    %2896 = vmatpush.msra.mxu0 %v401
    %2897 = vmatpush.msra.mxu0 %v397
    %2898 = vmatpush.msra.mxu0 %v393
    %2899 = vmatpush.msra.mxu0 %v389
    %2900 = vmatpush.msra.mxu0 %v385
    %2901 = vmatpush.msra.mxu0 %v381
    %2902 = vmatpush.msra.mxu0 %v377
    %2903 = vmatpush.msra.mxu0 %v373
    %2904 = vmatpush.msra.mxu0 %v369
    %2905 = vmatpush.msra.mxu0 %v365
    %2906 = vmatmul.f32.gmra.mxu0 %v2695
    %v2907 = vpop.f32.mrf.mxu0
    %v2908 = vadd.f32 0.0, %v2907
    %2909 = vdwg.mxu0
    %2910 = vmatpush.msra.mxu0 %v426
    %2911 = vmatpush.msra.mxu0 %v422
    %2912 = vmatpush.msra.mxu0 %v418
    %2913 = vmatpush.msra.mxu0 %v414
    %2914 = vmatpush.msra.mxu0 %v410
    %2915 = vmatpush.msra.mxu0 %v406
    %2916 = vmatpush.msra.mxu0 %v402
    %2917 = vmatpush.msra.mxu0 %v398
    %2918 = vmatpush.msra.mxu0 %v394
    %2919 = vmatpush.msra.mxu0 %v390
    %2920 = vmatpush.msra.mxu0 %v386
    %2921 = vmatpush.msra.mxu0 %v382
    %2922 = vmatpush.msra.mxu0 %v378
    %2923 = vmatpush.msra.mxu0 %v374
    %2924 = vmatpush.msra.mxu0 %v370
    %2925 = vmatpush.msra.mxu0 %v366
    %2926 = vmatmul.f32.gmra.mxu0 %v2695
    %v2927 = vpop.f32.mrf.mxu0
    %v2928 = vadd.f32 0.0, %v2927
    %2929 = vdwg.mxu0
    %v2930 = vadd.f32 %v2846, %v2868
    %v2931 = vadd.f32 %v2847, %v2888
    %v2932 = vadd.f32 %v2848, %v2908
    %v2933 = vadd.f32 %v2849, %v2928
    %2934 = vmatpush.msra.mxu0 %v571
    %2935 = vmatpush.msra.mxu0 %v567
    %2936 = vmatpush.msra.mxu0 %v563
    %2937 = vmatpush.msra.mxu0 %v559
    %2938 = vmatpush.msra.mxu0 %v555
    %2939 = vmatpush.msra.mxu0 %v551
    %2940 = vmatpush.msra.mxu0 %v547
    %2941 = vmatpush.msra.mxu0 %v543
    %2942 = vmatpush.msra.mxu0 %v539
    %2943 = vmatpush.msra.mxu0 %v535
    %2944 = vmatpush.msra.mxu0 %v531
    %2945 = vmatpush.msra.mxu0 %v527
    %2946 = vmatpush.msra.mxu0 %v523
    %2947 = vmatpush.msra.mxu0 %v519
    %2948 = vmatpush.msra.mxu0 %v515
    %2949 = vmatpush.msra.mxu0 %v511
    %2950 = vmatmul.f32.gmra.mxu0 %v2842
    %v2951 = vpop.f32.mrf.mxu0
    %v2952 = vadd.f32 %v576, %v2951
    %2953 = vdwg.mxu0
    %2954 = vmatpush.msra.mxu0 %v572
    %2955 = vmatpush.msra.mxu0 %v568
    %2956 = vmatpush.msra.mxu0 %v564
    %2957 = vmatpush.msra.mxu0 %v560
    %2958 = vmatpush.msra.mxu0 %v556
    %2959 = vmatpush.msra.mxu0 %v552
    %2960 = vmatpush.msra.mxu0 %v548
    %2961 = vmatpush.msra.mxu0 %v544
    %2962 = vmatpush.msra.mxu0 %v540
    %2963 = vmatpush.msra.mxu0 %v536
    %2964 = vmatpush.msra.mxu0 %v532
    %2965 = vmatpush.msra.mxu0 %v528
    %2966 = vmatpush.msra.mxu0 %v524
    %2967 = vmatpush.msra.mxu0 %v520
    %2968 = vmatpush.msra.mxu0 %v516
    %2969 = vmatpush.msra.mxu0 %v512
    %2970 = vmatmul.f32.gmra.mxu0 %v2842
    %v2971 = vpop.f32.mrf.mxu0
    %v2972 = vadd.f32 %v577, %v2971
    %2973 = vdwg.mxu0
    %2974 = vmatpush.msra.mxu0 %v573
    %2975 = vmatpush.msra.mxu0 %v569
    %2976 = vmatpush.msra.mxu0 %v565
    %2977 = vmatpush.msra.mxu0 %v561
    %2978 = vmatpush.msra.mxu0 %v557
    %2979 = vmatpush.msra.mxu0 %v553
    %2980 = vmatpush.msra.mxu0 %v549
    %2981 = vmatpush.msra.mxu0 %v545
    %2982 = vmatpush.msra.mxu0 %v541
    %2983 = vmatpush.msra.mxu0 %v537
    %2984 = vmatpush.msra.mxu0 %v533
    %2985 = vmatpush.msra.mxu0 %v529
    %2986 = vmatpush.msra.mxu0 %v525
    %2987 = vmatpush.msra.mxu0 %v521
    %2988 = vmatpush.msra.mxu0 %v517
    %2989 = vmatpush.msra.mxu0 %v513
    %2990 = vmatmul.f32.gmra.mxu0 %v2842
    %v2991 = vpop.f32.mrf.mxu0
    %v2992 = vadd.f32 %v578, %v2991
    %2993 = vdwg.mxu0
    %2994 = vmatpush.msra.mxu0 %v574
    %2995 = vmatpush.msra.mxu0 %v570
    %2996 = vmatpush.msra.mxu0 %v566
    %2997 = vmatpush.msra.mxu0 %v562
    %2998 = vmatpush.msra.mxu0 %v558
    %2999 = vmatpush.msra.mxu0 %v554
    %3000 = vmatpush.msra.mxu0 %v550
    %3001 = vmatpush.msra.mxu0 %v546
    %3002 = vmatpush.msra.mxu0 %v542
    %3003 = vmatpush.msra.mxu0 %v538
    %3004 = vmatpush.msra.mxu0 %v534
    %3005 = vmatpush.msra.mxu0 %v530
    %3006 = vmatpush.msra.mxu0 %v526
    %3007 = vmatpush.msra.mxu0 %v522
    %3008 = vmatpush.msra.mxu0 %v518
    %3009 = vmatpush.msra.mxu0 %v514
    %3010 = vmatmul.f32.gmra.mxu0 %v2842
    %v3011 = vpop.f32.mrf.mxu0
    %v3012 = vadd.f32 %v579, %v3011
    %3013 = vdwg.mxu0
    %v3014 = vxor.u32 %v2930, 2147483648
    %v3015 = vmul.f32 %v3014, 1.442695
    %v3016 = vpow.pop %v3015
    %v3017 = vadd.f32 %v3016, 1.0
    %v3018 = vrcp.pop %v3017
    %v3019 = vmul.f32 %v3017, %v3018
    %v3020 = vsub.f32 1.0, %v3019
    %v3021 = vmul.f32 %v3018, %v3020
    %v3022 = vadd.f32 %v3018, %v3021
    %vm3023 = vweird.f32 %v3017
    %vm3024 = vweird.f32 %v3018
    %vm3025 = vmor %vm3023, %vm3024
    %v3026 = vsel %vm3025, %v3018, %v3022
    %v3027 = vand.u32 2147483647, %v3017
    %vm3028 = vcmp.eq.f32.partialorder %v3027, 8.507059e+37
    %v3029 = vand.u32 %v3017, 2147483648
    %v3030 = vor.u32 1.1754944e-38, %v3029
    %v3031 = vsel %vm3028, %v3030, %v3026
    %v3032 = vmul.f32 1.0, %v3031
    %v3033 = vxor.u32 %v2931, 2147483648
    %v3034 = vmul.f32 %v3033, 1.442695
    %v3035 = vpow.pop %v3034
    %v3036 = vadd.f32 %v3035, 1.0
    %v3037 = vrcp.pop %v3036
    %v3038 = vmul.f32 %v3036, %v3037
    %v3039 = vsub.f32 1.0, %v3038
    %v3040 = vmul.f32 %v3037, %v3039
    %v3041 = vadd.f32 %v3037, %v3040
    %vm3042 = vweird.f32 %v3036
    %vm3043 = vweird.f32 %v3037
    %vm3044 = vmor %vm3042, %vm3043
    %v3045 = vsel %vm3044, %v3037, %v3041
    %v3046 = vand.u32 2147483647, %v3036
    %vm3047 = vcmp.eq.f32.partialorder %v3046, 8.507059e+37
    %v3048 = vand.u32 %v3036, 2147483648
    %v3049 = vor.u32 1.1754944e-38, %v3048
    %v3050 = vsel %vm3047, %v3049, %v3045
    %v3051 = vmul.f32 1.0, %v3050
    %v3052 = vtanh.pop %v2932
    %v3053 = vxor.u32 %v2933, 2147483648
    %v3054 = vmul.f32 %v3053, 1.442695
    %v3055 = vpow.pop %v3054
    %v3056 = vadd.f32 %v3055, 1.0
    %v3057 = vrcp.pop %v3056
    %v3058 = vmul.f32 %v3056, %v3057
    %v3059 = vsub.f32 1.0, %v3058
    %v3060 = vmul.f32 %v3057, %v3059
    %v3061 = vadd.f32 %v3057, %v3060
    %vm3062 = vweird.f32 %v3056
    %vm3063 = vweird.f32 %v3057
    %vm3064 = vmor %vm3062, %vm3063
    %v3065 = vsel %vm3064, %v3057, %v3061
    %v3066 = vand.u32 2147483647, %v3056
    %vm3067 = vcmp.eq.f32.partialorder %v3066, 8.507059e+37
    %v3068 = vand.u32 %v3056, 2147483648
    %v3069 = vor.u32 1.1754944e-38, %v3068
    %v3070 = vsel %vm3067, %v3069, %v3065
    %v3071 = vmul.f32 1.0, %v3070
    %v3072 = vmul.f32 %v3051, %v2693
    %v3073 = vmul.f32 %v3032, %v3052
    %v3074 = vadd.f32 %v3072, %v3073
    %v3075 = vtanh.pop %v3074
    %v3076 = vmul.f32 %v3071, %v3075
    %3077 = vmatpush.msra.mxu0 %v787
    %3078 = vmatpush.msra.mxu0 %v783
    %3079 = vmatpush.msra.mxu0 %v779
    %3080 = vmatpush.msra.mxu0 %v775
    %3081 = vmatpush.msra.mxu0 %v771
    %3082 = vmatpush.msra.mxu0 %v767
    %3083 = vmatpush.msra.mxu0 %v763
    %3084 = vmatpush.msra.mxu0 %v759
    %3085 = vmatpush.msra.mxu0 %v755
    %3086 = vmatpush.msra.mxu0 %v751
    %3087 = vmatpush.msra.mxu0 %v747
    %3088 = vmatpush.msra.mxu0 %v743
    %3089 = vmatpush.msra.mxu0 %v739
    %3090 = vmatpush.msra.mxu0 %v735
    %3091 = vmatpush.msra.mxu0 %v731
    %3092 = vmatpush.msra.mxu0 %v727
    %3093 = vmatmul.f32.gmra.mxu0 %v3076
    %v3094 = vpop.f32.mrf.mxu0
    %v3095 = vadd.f32 0.0, %v3094
    %3096 = vdwg.mxu0
    %3097 = vmatpush.msra.mxu0 %v788
    %3098 = vmatpush.msra.mxu0 %v784
    %3099 = vmatpush.msra.mxu0 %v780
    %3100 = vmatpush.msra.mxu0 %v776
    %3101 = vmatpush.msra.mxu0 %v772
    %3102 = vmatpush.msra.mxu0 %v768
    %3103 = vmatpush.msra.mxu0 %v764
    %3104 = vmatpush.msra.mxu0 %v760
    %3105 = vmatpush.msra.mxu0 %v756
    %3106 = vmatpush.msra.mxu0 %v752
    %3107 = vmatpush.msra.mxu0 %v748
    %3108 = vmatpush.msra.mxu0 %v744
    %3109 = vmatpush.msra.mxu0 %v740
    %3110 = vmatpush.msra.mxu0 %v736
    %3111 = vmatpush.msra.mxu0 %v732
    %3112 = vmatpush.msra.mxu0 %v728
    %3113 = vmatmul.f32.gmra.mxu0 %v3076
    %v3114 = vpop.f32.mrf.mxu0
    %v3115 = vadd.f32 0.0, %v3114
    %3116 = vdwg.mxu0
    %3117 = vmatpush.msra.mxu0 %v789
    %3118 = vmatpush.msra.mxu0 %v785
    %3119 = vmatpush.msra.mxu0 %v781
    %3120 = vmatpush.msra.mxu0 %v777
    %3121 = vmatpush.msra.mxu0 %v773
    %3122 = vmatpush.msra.mxu0 %v769
    %3123 = vmatpush.msra.mxu0 %v765
    %3124 = vmatpush.msra.mxu0 %v761
    %3125 = vmatpush.msra.mxu0 %v757
    %3126 = vmatpush.msra.mxu0 %v753
    %3127 = vmatpush.msra.mxu0 %v749
    %3128 = vmatpush.msra.mxu0 %v745
    %3129 = vmatpush.msra.mxu0 %v741
    %3130 = vmatpush.msra.mxu0 %v737
    %3131 = vmatpush.msra.mxu0 %v733
    %3132 = vmatpush.msra.mxu0 %v729
    %3133 = vmatmul.f32.gmra.mxu0 %v3076
    %v3134 = vpop.f32.mrf.mxu0
    %v3135 = vadd.f32 0.0, %v3134
    %3136 = vdwg.mxu0
    %3137 = vmatpush.msra.mxu0 %v790
    %3138 = vmatpush.msra.mxu0 %v786
    %3139 = vmatpush.msra.mxu0 %v782
    %3140 = vmatpush.msra.mxu0 %v778
    %3141 = vmatpush.msra.mxu0 %v774
    %3142 = vmatpush.msra.mxu0 %v770
    %3143 = vmatpush.msra.mxu0 %v766
    %3144 = vmatpush.msra.mxu0 %v762
    %3145 = vmatpush.msra.mxu0 %v758
    %3146 = vmatpush.msra.mxu0 %v754
    %3147 = vmatpush.msra.mxu0 %v750
    %3148 = vmatpush.msra.mxu0 %v746
    %3149 = vmatpush.msra.mxu0 %v742
    %3150 = vmatpush.msra.mxu0 %v738
    %3151 = vmatpush.msra.mxu0 %v734
    %3152 = vmatpush.msra.mxu0 %v730
    %3153 = vmatmul.f32.gmra.mxu0 %v3076
    %v3154 = vpop.f32.mrf.mxu0
    %v3155 = vadd.f32 0.0, %v3154
    %3156 = vdwg.mxu0
    %v3157 = vadd.f32 %v2952, %v3095
    %v3158 = vadd.f32 %v2972, %v3115
    %v3159 = vadd.f32 %v2992, %v3135
    %v3160 = vadd.f32 %v3012, %v3155
    %v3161 = vxor.u32 %v3157, 2147483648
    %v3162 = vmul.f32 %v3161, 1.442695
    %v3163 = vpow.pop %v3162
    %v3164 = vadd.f32 %v3163, 1.0
    %v3165 = vrcp.pop %v3164
    %v3166 = vmul.f32 %v3164, %v3165
    %v3167 = vsub.f32 1.0, %v3166
    %v3168 = vmul.f32 %v3165, %v3167
    %v3169 = vadd.f32 %v3165, %v3168
    %vm3170 = vweird.f32 %v3164
    %vm3171 = vweird.f32 %v3165
    %vm3172 = vmor %vm3170, %vm3171
    %v3173 = vsel %vm3172, %v3165, %v3169
    %v3174 = vand.u32 2147483647, %v3164
    %vm3175 = vcmp.eq.f32.partialorder %v3174, 8.507059e+37
    %v3176 = vand.u32 %v3164, 2147483648
    %v3177 = vor.u32 1.1754944e-38, %v3176
    %v3178 = vsel %vm3175, %v3177, %v3173
    %v3179 = vmul.f32 1.0, %v3178
    %v3180 = vxor.u32 %v3158, 2147483648
    %v3181 = vmul.f32 %v3180, 1.442695
    %v3182 = vpow.pop %v3181
    %v3183 = vadd.f32 %v3182, 1.0
    %v3184 = vrcp.pop %v3183
    %v3185 = vmul.f32 %v3183, %v3184
    %v3186 = vsub.f32 1.0, %v3185
    %v3187 = vmul.f32 %v3184, %v3186
    %v3188 = vadd.f32 %v3184, %v3187
    %vm3189 = vweird.f32 %v3183
    %vm3190 = vweird.f32 %v3184
    %vm3191 = vmor %vm3189, %vm3190
    %v3192 = vsel %vm3191, %v3184, %v3188
    %v3193 = vand.u32 2147483647, %v3183
    %vm3194 = vcmp.eq.f32.partialorder %v3193, 8.507059e+37
    %v3195 = vand.u32 %v3183, 2147483648
    %v3196 = vor.u32 1.1754944e-38, %v3195
    %v3197 = vsel %vm3194, %v3196, %v3192
    %v3198 = vmul.f32 1.0, %v3197
    %v3199 = vtanh.pop %v3159
    %v3200 = vxor.u32 %v3160, 2147483648
    %v3201 = vmul.f32 %v3200, 1.442695
    %v3202 = vpow.pop %v3201
    %v3203 = vadd.f32 %v3202, 1.0
    %v3204 = vrcp.pop %v3203
    %v3205 = vmul.f32 %v3203, %v3204
    %v3206 = vsub.f32 1.0, %v3205
    %v3207 = vmul.f32 %v3204, %v3206
    %v3208 = vadd.f32 %v3204, %v3207
    %vm3209 = vweird.f32 %v3203
    %vm3210 = vweird.f32 %v3204
    %vm3211 = vmor %vm3209, %vm3210
    %v3212 = vsel %vm3211, %v3204, %v3208
    %v3213 = vand.u32 2147483647, %v3203
    %vm3214 = vcmp.eq.f32.partialorder %v3213, 8.507059e+37
    %v3215 = vand.u32 %v3203, 2147483648
    %v3216 = vor.u32 1.1754944e-38, %v3215
    %v3217 = vsel %vm3214, %v3216, %v3212
    %v3218 = vmul.f32 1.0, %v3217
    %v3219 = vmul.f32 %v3198, %v2840
    %v3220 = vmul.f32 %v3179, %v3199
    %v3221 = vadd.f32 %v3219, %v3220
    %v3222 = vtanh.pop %v3221
    %v3223 = vmul.f32 %v3218, %v3222
    %s3224 = smul.u32 7, 4
    %s3225 = smul.addr %s3224, 8
    %s3226 = scalar_lea.vmem [#allocation6], %s3225
    %v3227 = vld [vmem:[%s3226] sm:$0xff]
    %v3228 = vld [vmem:[%s3226 + $0x8] sm:$0xff]
    %v3229 = vld [vmem:[%s3226 + $0x10] sm:$0xff]
    %v3230 = vld [vmem:[%s3226 + $0x18] sm:$0xff]
    %3231 = vmatpush.msra.mxu0 %v423
    %3232 = vmatpush.msra.mxu0 %v419
    %3233 = vmatpush.msra.mxu0 %v415
    %3234 = vmatpush.msra.mxu0 %v411
    %3235 = vmatpush.msra.mxu0 %v407
    %3236 = vmatpush.msra.mxu0 %v403
    %3237 = vmatpush.msra.mxu0 %v399
    %3238 = vmatpush.msra.mxu0 %v395
    %3239 = vmatpush.msra.mxu0 %v391
    %3240 = vmatpush.msra.mxu0 %v387
    %3241 = vmatpush.msra.mxu0 %v383
    %3242 = vmatpush.msra.mxu0 %v379
    %3243 = vmatpush.msra.mxu0 %v375
    %3244 = vmatpush.msra.mxu0 %v371
    %3245 = vmatpush.msra.mxu0 %v367
    %3246 = vmatpush.msra.mxu0 %v363
    %3247 = vmatmul.f32.gmra.mxu0 %v3076
    %v3248 = vpop.f32.mrf.mxu0
    %v3249 = vadd.f32 0.0, %v3248
    %3250 = vdwg.mxu0
    %3251 = vmatpush.msra.mxu0 %v424
    %3252 = vmatpush.msra.mxu0 %v420
    %3253 = vmatpush.msra.mxu0 %v416
    %3254 = vmatpush.msra.mxu0 %v412
    %3255 = vmatpush.msra.mxu0 %v408
    %3256 = vmatpush.msra.mxu0 %v404
    %3257 = vmatpush.msra.mxu0 %v400
    %3258 = vmatpush.msra.mxu0 %v396
    %3259 = vmatpush.msra.mxu0 %v392
    %3260 = vmatpush.msra.mxu0 %v388
    %3261 = vmatpush.msra.mxu0 %v384
    %3262 = vmatpush.msra.mxu0 %v380
    %3263 = vmatpush.msra.mxu0 %v376
    %3264 = vmatpush.msra.mxu0 %v372
    %3265 = vmatpush.msra.mxu0 %v368
    %3266 = vmatpush.msra.mxu0 %v364
    %3267 = vmatmul.f32.gmra.mxu0 %v3076
    %v3268 = vpop.f32.mrf.mxu0
    %v3269 = vadd.f32 0.0, %v3268
    %3270 = vdwg.mxu0
    %3271 = vmatpush.msra.mxu0 %v425
    %3272 = vmatpush.msra.mxu0 %v421
    %3273 = vmatpush.msra.mxu0 %v417
    %3274 = vmatpush.msra.mxu0 %v413
    %3275 = vmatpush.msra.mxu0 %v409
    %3276 = vmatpush.msra.mxu0 %v405
    %3277 = vmatpush.msra.mxu0 %v401
    %3278 = vmatpush.msra.mxu0 %v397
    %3279 = vmatpush.msra.mxu0 %v393
    %3280 = vmatpush.msra.mxu0 %v389
    %3281 = vmatpush.msra.mxu0 %v385
    %3282 = vmatpush.msra.mxu0 %v381
    %3283 = vmatpush.msra.mxu0 %v377
    %3284 = vmatpush.msra.mxu0 %v373
    %3285 = vmatpush.msra.mxu0 %v369
    %3286 = vmatpush.msra.mxu0 %v365
    %3287 = vmatmul.f32.gmra.mxu0 %v3076
    %v3288 = vpop.f32.mrf.mxu0
    %v3289 = vadd.f32 0.0, %v3288
    %3290 = vdwg.mxu0
    %3291 = vmatpush.msra.mxu0 %v426
    %3292 = vmatpush.msra.mxu0 %v422
    %3293 = vmatpush.msra.mxu0 %v418
    %3294 = vmatpush.msra.mxu0 %v414
    %3295 = vmatpush.msra.mxu0 %v410
    %3296 = vmatpush.msra.mxu0 %v406
    %3297 = vmatpush.msra.mxu0 %v402
    %3298 = vmatpush.msra.mxu0 %v398
    %3299 = vmatpush.msra.mxu0 %v394
    %3300 = vmatpush.msra.mxu0 %v390
    %3301 = vmatpush.msra.mxu0 %v386
    %3302 = vmatpush.msra.mxu0 %v382
    %3303 = vmatpush.msra.mxu0 %v378
    %3304 = vmatpush.msra.mxu0 %v374
    %3305 = vmatpush.msra.mxu0 %v370
    %3306 = vmatpush.msra.mxu0 %v366
    %3307 = vmatmul.f32.gmra.mxu0 %v3076
    %v3308 = vpop.f32.mrf.mxu0
    %v3309 = vadd.f32 0.0, %v3308
    %3310 = vdwg.mxu0
    %v3311 = vadd.f32 %v3227, %v3249
    %v3312 = vadd.f32 %v3228, %v3269
    %v3313 = vadd.f32 %v3229, %v3289
    %v3314 = vadd.f32 %v3230, %v3309
    %3315 = vmatpush.msra.mxu0 %v571
    %3316 = vmatpush.msra.mxu0 %v567
    %3317 = vmatpush.msra.mxu0 %v563
    %3318 = vmatpush.msra.mxu0 %v559
    %3319 = vmatpush.msra.mxu0 %v555
    %3320 = vmatpush.msra.mxu0 %v551
    %3321 = vmatpush.msra.mxu0 %v547
    %3322 = vmatpush.msra.mxu0 %v543
    %3323 = vmatpush.msra.mxu0 %v539
    %3324 = vmatpush.msra.mxu0 %v535
    %3325 = vmatpush.msra.mxu0 %v531
    %3326 = vmatpush.msra.mxu0 %v527
    %3327 = vmatpush.msra.mxu0 %v523
    %3328 = vmatpush.msra.mxu0 %v519
    %3329 = vmatpush.msra.mxu0 %v515
    %3330 = vmatpush.msra.mxu0 %v511
    %3331 = vmatmul.f32.gmra.mxu0 %v3223
    %v3332 = vpop.f32.mrf.mxu0
    %v3333 = vadd.f32 %v576, %v3332
    %3334 = vdwg.mxu0
    %3335 = vmatpush.msra.mxu0 %v572
    %3336 = vmatpush.msra.mxu0 %v568
    %3337 = vmatpush.msra.mxu0 %v564
    %3338 = vmatpush.msra.mxu0 %v560
    %3339 = vmatpush.msra.mxu0 %v556
    %3340 = vmatpush.msra.mxu0 %v552
    %3341 = vmatpush.msra.mxu0 %v548
    %3342 = vmatpush.msra.mxu0 %v544
    %3343 = vmatpush.msra.mxu0 %v540
    %3344 = vmatpush.msra.mxu0 %v536
    %3345 = vmatpush.msra.mxu0 %v532
    %3346 = vmatpush.msra.mxu0 %v528
    %3347 = vmatpush.msra.mxu0 %v524
    %3348 = vmatpush.msra.mxu0 %v520
    %3349 = vmatpush.msra.mxu0 %v516
    %3350 = vmatpush.msra.mxu0 %v512
    %3351 = vmatmul.f32.gmra.mxu0 %v3223
    %v3352 = vpop.f32.mrf.mxu0
    %v3353 = vadd.f32 %v577, %v3352
    %3354 = vdwg.mxu0
    %3355 = vmatpush.msra.mxu0 %v573
    %3356 = vmatpush.msra.mxu0 %v569
    %3357 = vmatpush.msra.mxu0 %v565
    %3358 = vmatpush.msra.mxu0 %v561
    %3359 = vmatpush.msra.mxu0 %v557
    %3360 = vmatpush.msra.mxu0 %v553
    %3361 = vmatpush.msra.mxu0 %v549
    %3362 = vmatpush.msra.mxu0 %v545
    %3363 = vmatpush.msra.mxu0 %v541
    %3364 = vmatpush.msra.mxu0 %v537
    %3365 = vmatpush.msra.mxu0 %v533
    %3366 = vmatpush.msra.mxu0 %v529
    %3367 = vmatpush.msra.mxu0 %v525
    %3368 = vmatpush.msra.mxu0 %v521
    %3369 = vmatpush.msra.mxu0 %v517
    %3370 = vmatpush.msra.mxu0 %v513
    %3371 = vmatmul.f32.gmra.mxu0 %v3223
    %v3372 = vpop.f32.mrf.mxu0
    %v3373 = vadd.f32 %v578, %v3372
    %3374 = vdwg.mxu0
    %3375 = vmatpush.msra.mxu0 %v574
    %3376 = vmatpush.msra.mxu0 %v570
    %3377 = vmatpush.msra.mxu0 %v566
    %3378 = vmatpush.msra.mxu0 %v562
    %3379 = vmatpush.msra.mxu0 %v558
    %3380 = vmatpush.msra.mxu0 %v554
    %3381 = vmatpush.msra.mxu0 %v550
    %3382 = vmatpush.msra.mxu0 %v546
    %3383 = vmatpush.msra.mxu0 %v542
    %3384 = vmatpush.msra.mxu0 %v538
    %3385 = vmatpush.msra.mxu0 %v534
    %3386 = vmatpush.msra.mxu0 %v530
    %3387 = vmatpush.msra.mxu0 %v526
    %3388 = vmatpush.msra.mxu0 %v522
    %3389 = vmatpush.msra.mxu0 %v518
    %3390 = vmatpush.msra.mxu0 %v514
    %3391 = vmatmul.f32.gmra.mxu0 %v3223
    %v3392 = vpop.f32.mrf.mxu0
    %v3393 = vadd.f32 %v579, %v3392
    %3394 = vdwg.mxu0
    %v3395 = vxor.u32 %v3311, 2147483648
    %v3396 = vmul.f32 %v3395, 1.442695
    %v3397 = vpow.pop %v3396
    %v3398 = vadd.f32 %v3397, 1.0
    %v3399 = vrcp.pop %v3398
    %v3400 = vmul.f32 %v3398, %v3399
    %v3401 = vsub.f32 1.0, %v3400
    %v3402 = vmul.f32 %v3399, %v3401
    %v3403 = vadd.f32 %v3399, %v3402
    %vm3404 = vweird.f32 %v3398
    %vm3405 = vweird.f32 %v3399
    %vm3406 = vmor %vm3404, %vm3405
    %v3407 = vsel %vm3406, %v3399, %v3403
    %v3408 = vand.u32 2147483647, %v3398
    %vm3409 = vcmp.eq.f32.partialorder %v3408, 8.507059e+37
    %v3410 = vand.u32 %v3398, 2147483648
    %v3411 = vor.u32 1.1754944e-38, %v3410
    %v3412 = vsel %vm3409, %v3411, %v3407
    %v3413 = vmul.f32 1.0, %v3412
    %v3414 = vxor.u32 %v3312, 2147483648
    %v3415 = vmul.f32 %v3414, 1.442695
    %v3416 = vpow.pop %v3415
    %v3417 = vadd.f32 %v3416, 1.0
    %v3418 = vrcp.pop %v3417
    %v3419 = vmul.f32 %v3417, %v3418
    %v3420 = vsub.f32 1.0, %v3419
    %v3421 = vmul.f32 %v3418, %v3420
    %v3422 = vadd.f32 %v3418, %v3421
    %vm3423 = vweird.f32 %v3417
    %vm3424 = vweird.f32 %v3418
    %vm3425 = vmor %vm3423, %vm3424
    %v3426 = vsel %vm3425, %v3418, %v3422
    %v3427 = vand.u32 2147483647, %v3417
    %vm3428 = vcmp.eq.f32.partialorder %v3427, 8.507059e+37
    %v3429 = vand.u32 %v3417, 2147483648
    %v3430 = vor.u32 1.1754944e-38, %v3429
    %v3431 = vsel %vm3428, %v3430, %v3426
    %v3432 = vmul.f32 1.0, %v3431
    %v3433 = vtanh.pop %v3313
    %v3434 = vxor.u32 %v3314, 2147483648
    %v3435 = vmul.f32 %v3434, 1.442695
    %v3436 = vpow.pop %v3435
    %v3437 = vadd.f32 %v3436, 1.0
    %v3438 = vrcp.pop %v3437
    %v3439 = vmul.f32 %v3437, %v3438
    %v3440 = vsub.f32 1.0, %v3439
    %v3441 = vmul.f32 %v3438, %v3440
    %v3442 = vadd.f32 %v3438, %v3441
    %vm3443 = vweird.f32 %v3437
    %vm3444 = vweird.f32 %v3438
    %vm3445 = vmor %vm3443, %vm3444
    %v3446 = vsel %vm3445, %v3438, %v3442
    %v3447 = vand.u32 2147483647, %v3437
    %vm3448 = vcmp.eq.f32.partialorder %v3447, 8.507059e+37
    %v3449 = vand.u32 %v3437, 2147483648
    %v3450 = vor.u32 1.1754944e-38, %v3449
    %v3451 = vsel %vm3448, %v3450, %v3446
    %v3452 = vmul.f32 1.0, %v3451
    %v3453 = vmul.f32 %v3432, %v3074
    %v3454 = vmul.f32 %v3413, %v3433
    %v3455 = vadd.f32 %v3453, %v3454
    %v3456 = vtanh.pop %v3455
    %v3457 = vmul.f32 %v3452, %v3456
    %3458 = vmatpush.msra.mxu0 %v787
    %3459 = vmatpush.msra.mxu0 %v783
    %3460 = vmatpush.msra.mxu0 %v779
    %3461 = vmatpush.msra.mxu0 %v775
    %3462 = vmatpush.msra.mxu0 %v771
    %3463 = vmatpush.msra.mxu0 %v767
    %3464 = vmatpush.msra.mxu0 %v763
    %3465 = vmatpush.msra.mxu0 %v759
    %3466 = vmatpush.msra.mxu0 %v755
    %3467 = vmatpush.msra.mxu0 %v751
    %3468 = vmatpush.msra.mxu0 %v747
    %3469 = vmatpush.msra.mxu0 %v743
    %3470 = vmatpush.msra.mxu0 %v739
    %3471 = vmatpush.msra.mxu0 %v735
    %3472 = vmatpush.msra.mxu0 %v731
    %3473 = vmatpush.msra.mxu0 %v727
    %3474 = vmatmul.f32.gmra.mxu0 %v3457
    %v3475 = vpop.f32.mrf.mxu0
    %v3476 = vadd.f32 0.0, %v3475
    %3477 = vdwg.mxu0
    %3478 = vmatpush.msra.mxu0 %v788
    %3479 = vmatpush.msra.mxu0 %v784
    %3480 = vmatpush.msra.mxu0 %v780
    %3481 = vmatpush.msra.mxu0 %v776
    %3482 = vmatpush.msra.mxu0 %v772
    %3483 = vmatpush.msra.mxu0 %v768
    %3484 = vmatpush.msra.mxu0 %v764
    %3485 = vmatpush.msra.mxu0 %v760
    %3486 = vmatpush.msra.mxu0 %v756
    %3487 = vmatpush.msra.mxu0 %v752
    %3488 = vmatpush.msra.mxu0 %v748
    %3489 = vmatpush.msra.mxu0 %v744
    %3490 = vmatpush.msra.mxu0 %v740
    %3491 = vmatpush.msra.mxu0 %v736
    %3492 = vmatpush.msra.mxu0 %v732
    %3493 = vmatpush.msra.mxu0 %v728
    %3494 = vmatmul.f32.gmra.mxu0 %v3457
    %v3495 = vpop.f32.mrf.mxu0
    %v3496 = vadd.f32 0.0, %v3495
    %3497 = vdwg.mxu0
    %3498 = vmatpush.msra.mxu0 %v789
    %3499 = vmatpush.msra.mxu0 %v785
    %3500 = vmatpush.msra.mxu0 %v781
    %3501 = vmatpush.msra.mxu0 %v777
    %3502 = vmatpush.msra.mxu0 %v773
    %3503 = vmatpush.msra.mxu0 %v769
    %3504 = vmatpush.msra.mxu0 %v765
    %3505 = vmatpush.msra.mxu0 %v761
    %3506 = vmatpush.msra.mxu0 %v757
    %3507 = vmatpush.msra.mxu0 %v753
    %3508 = vmatpush.msra.mxu0 %v749
    %3509 = vmatpush.msra.mxu0 %v745
    %3510 = vmatpush.msra.mxu0 %v741
    %3511 = vmatpush.msra.mxu0 %v737
    %3512 = vmatpush.msra.mxu0 %v733
    %3513 = vmatpush.msra.mxu0 %v729
    %3514 = vmatmul.f32.gmra.mxu0 %v3457
    %v3515 = vpop.f32.mrf.mxu0
    %v3516 = vadd.f32 0.0, %v3515
    %3517 = vdwg.mxu0
    %3518 = vmatpush.msra.mxu0 %v790
    %3519 = vmatpush.msra.mxu0 %v786
    %3520 = vmatpush.msra.mxu0 %v782
    %3521 = vmatpush.msra.mxu0 %v778
    %3522 = vmatpush.msra.mxu0 %v774
    %3523 = vmatpush.msra.mxu0 %v770
    %3524 = vmatpush.msra.mxu0 %v766
    %3525 = vmatpush.msra.mxu0 %v762
    %3526 = vmatpush.msra.mxu0 %v758
    %3527 = vmatpush.msra.mxu0 %v754
    %3528 = vmatpush.msra.mxu0 %v750
    %3529 = vmatpush.msra.mxu0 %v746
    %3530 = vmatpush.msra.mxu0 %v742
    %3531 = vmatpush.msra.mxu0 %v738
    %3532 = vmatpush.msra.mxu0 %v734
    %3533 = vmatpush.msra.mxu0 %v730
    %3534 = vmatmul.f32.gmra.mxu0 %v3457
    %v3535 = vpop.f32.mrf.mxu0
    %v3536 = vadd.f32 0.0, %v3535
    %3537 = vdwg.mxu0
    %v3538 = vadd.f32 %v3333, %v3476
    %v3539 = vadd.f32 %v3353, %v3496
    %v3540 = vadd.f32 %v3373, %v3516
    %v3541 = vadd.f32 %v3393, %v3536
    %v3542 = vxor.u32 %v3538, 2147483648
    %v3543 = vmul.f32 %v3542, 1.442695
    %v3544 = vpow.pop %v3543
    %v3545 = vadd.f32 %v3544, 1.0
    %v3546 = vrcp.pop %v3545
    %v3547 = vmul.f32 %v3545, %v3546
    %v3548 = vsub.f32 1.0, %v3547
    %v3549 = vmul.f32 %v3546, %v3548
    %v3550 = vadd.f32 %v3546, %v3549
    %vm3551 = vweird.f32 %v3545
    %vm3552 = vweird.f32 %v3546
    %vm3553 = vmor %vm3551, %vm3552
    %v3554 = vsel %vm3553, %v3546, %v3550
    %v3555 = vand.u32 2147483647, %v3545
    %vm3556 = vcmp.eq.f32.partialorder %v3555, 8.507059e+37
    %v3557 = vand.u32 %v3545, 2147483648
    %v3558 = vor.u32 1.1754944e-38, %v3557
    %v3559 = vsel %vm3556, %v3558, %v3554
    %v3560 = vmul.f32 1.0, %v3559
    %v3561 = vxor.u32 %v3539, 2147483648
    %v3562 = vmul.f32 %v3561, 1.442695
    %v3563 = vpow.pop %v3562
    %v3564 = vadd.f32 %v3563, 1.0
    %v3565 = vrcp.pop %v3564
    %v3566 = vmul.f32 %v3564, %v3565
    %v3567 = vsub.f32 1.0, %v3566
    %v3568 = vmul.f32 %v3565, %v3567
    %v3569 = vadd.f32 %v3565, %v3568
    %vm3570 = vweird.f32 %v3564
    %vm3571 = vweird.f32 %v3565
    %vm3572 = vmor %vm3570, %vm3571
    %v3573 = vsel %vm3572, %v3565, %v3569
    %v3574 = vand.u32 2147483647, %v3564
    %vm3575 = vcmp.eq.f32.partialorder %v3574, 8.507059e+37
    %v3576 = vand.u32 %v3564, 2147483648
    %v3577 = vor.u32 1.1754944e-38, %v3576
    %v3578 = vsel %vm3575, %v3577, %v3573
    %v3579 = vmul.f32 1.0, %v3578
    %v3580 = vtanh.pop %v3540
    %v3581 = vxor.u32 %v3541, 2147483648
    %v3582 = vmul.f32 %v3581, 1.442695
    %v3583 = vpow.pop %v3582
    %v3584 = vadd.f32 %v3583, 1.0
    %v3585 = vrcp.pop %v3584
    %v3586 = vmul.f32 %v3584, %v3585
    %v3587 = vsub.f32 1.0, %v3586
    %v3588 = vmul.f32 %v3585, %v3587
    %v3589 = vadd.f32 %v3585, %v3588
    %vm3590 = vweird.f32 %v3584
    %vm3591 = vweird.f32 %v3585
    %vm3592 = vmor %vm3590, %vm3591
    %v3593 = vsel %vm3592, %v3585, %v3589
    %v3594 = vand.u32 2147483647, %v3584
    %vm3595 = vcmp.eq.f32.partialorder %v3594, 8.507059e+37
    %v3596 = vand.u32 %v3584, 2147483648
    %v3597 = vor.u32 1.1754944e-38, %v3596
    %v3598 = vsel %vm3595, %v3597, %v3593
    %v3599 = vmul.f32 1.0, %v3598
    %v3600 = vmul.f32 %v3579, %v3221
    %v3601 = vmul.f32 %v3560, %v3580
    %v3602 = vadd.f32 %v3600, %v3601
    %v3603 = vtanh.pop %v3602
    %v3604 = vmul.f32 %v3599, %v3603
    %3605 = vst [vmem:[#allocation2] sm:$0xff] %v3457
    %3606 = vst [vmem:[#allocation3] sm:$0xff] %v3455
    %3607 = vst [vmem:[#allocation4] sm:$0xff] %v3604
    %3608 = vst [vmem:[#allocation5] sm:$0xff] %v3602
    // Predicated region
    $region58: #{tpu_custom_call.1} parent=1 // pred_check
      %p3609 = pneg %p96
    $region59: #{tpu_custom_call.1} parent=1 // pred_check_branch
      %3611 = sbr.rel (%p3609) target = $region61
    $region60: #{tpu_custom_call.1} parent=1 // pred_region
      %v3612 = vld [vmem:[#allocation13] sm:$0xff]
      %v3613 = vld [vmem:[#allocation13 + $0x8] sm:$0xff]
      %v3614 = vld [vmem:[#allocation13 + $0x10] sm:$0xff]
      %v3615 = vld [vmem:[#allocation13 + $0x18] sm:$0xff]
      %v3616 = vld [vmem:[#allocation13 + $0x20] sm:$0xff]
      %v3617 = vld [vmem:[#allocation13 + $0x28] sm:$0xff]
      %v3618 = vld [vmem:[#allocation13 + $0x30] sm:$0xff]
      %v3619 = vld [vmem:[#allocation13 + $0x38] sm:$0xff]
      %v3620 = vld [vmem:[#allocation13 + $0x40] sm:$0xff]
      %v3621 = vld [vmem:[#allocation13 + $0x48] sm:$0xff]
      %v3622 = vld [vmem:[#allocation13 + $0x50] sm:$0xff]
      %v3623 = vld [vmem:[#allocation13 + $0x58] sm:$0xff]
      %v3624 = vld [vmem:[#allocation13 + $0x60] sm:$0xff]
      %v3625 = vld [vmem:[#allocation13 + $0x68] sm:$0xff]
      %v3626 = vld [vmem:[#allocation13 + $0x70] sm:$0xff]
      %v3627 = vld [vmem:[#allocation13 + $0x78] sm:$0xff]
      %v3628 = vld [vmem:[%s8] sm:$0x1]
      %v3630 = vperm.slane %v3628, 0
      %3632 = vmatpush.msra.mxu0 %v3627
      %3633 = vmatpush.msra.mxu0 %v3626
      %3634 = vmatpush.msra.mxu0 %v3625
      %3635 = vmatpush.msra.mxu0 %v3624
      %3636 = vmatpush.msra.mxu0 %v3623
      %3637 = vmatpush.msra.mxu0 %v3622
      %3638 = vmatpush.msra.mxu0 %v3621
      %3639 = vmatpush.msra.mxu0 %v3620
      %3640 = vmatpush.msra.mxu0 %v3619
      %3641 = vmatpush.msra.mxu0 %v3618
      %3642 = vmatpush.msra.mxu0 %v3617
      %3643 = vmatpush.msra.mxu0 %v3616
      %3644 = vmatpush.msra.mxu0 %v3615
      %3645 = vmatpush.msra.mxu0 %v3614
      %3646 = vmatpush.msra.mxu0 %v3613
      %3647 = vmatpush.msra.mxu0 %v3612
      %3648 = vmatmul.f32.gmra.mxu0 %v3604
      %v3649 = vpop.f32.mrf.mxu0
      %v3650 = vadd.f32 %v3630, %v3649
      %3651 = vdwg.mxu0
      %3652 = vst [vmem:[#allocation15] sm:$0xff] %v3650
    $region61: #{tpu_custom_call.1} parent=1 // pred_fallthru
      _
    // Predicated region
    $region62: #{tpu_custom_call.1} parent=1 // pred_check
      _
    $region63: #{tpu_custom_call.1} parent=1 // pred_check_branch
      %3654 = sbr.rel (0) target = $region65
    $region64: #{tpu_custom_call.1} parent=1 // pred_region
      %3656 = vsyncadd [#allocation9], 0
      %s3658 = sshll.u32 [#allocation15], 4
      %s3659 = int_to_ptr.vmem [resolvable:$true] %s3658
      %s3660 = sshll.u32 %s9, 4
      %s3661 = int_to_ptr.hbm [resolvable:$true] %s3660
      %3663 = dma.vmem_to_hbm [thread:$0]  %s3659, 128, %s3661, [#allocation9]
    $region65: #{tpu_custom_call.1} parent=1 // pred_fallthru
      _
    // Predicated region
    $region66: #{tpu_custom_call.1} parent=1 // pred_check
      _
    $region67: #{tpu_custom_call.1} parent=1 // pred_check_branch
      %3665 = sbr.rel (0) target = $region69
    $region68: #{tpu_custom_call.1} parent=1 // pred_region
      %3667 = dma.done [#allocation9], 128
    $region69: #{tpu_custom_call.1} parent=1 // pred_fallthru
      _
    %3668 = vsyncpa [#allocation8], 1
    %3669 = vsyncpa [#allocation11], 1
    %3670 = vsyncpa [#allocation14], 1
    %3671 = vsyncpa [#allocation9], 1

</llo_original>
